<compile_context>
chip_gen: v7x
topology: tpu7x:2x2x1
jax: 0.10.0
libtpu: 0.0.40
codegen_flags: <defaults>
</compile_context>

<pallas_src>
import math

import jax
import jax.numpy as jnp
from jax.experimental import pallas as pl
from jax.experimental.pallas import tpu as pltpu

# ---- small but structurally faithful hyperparameters ----
N_LAYERS = 6          # torch default 30
KERNEL_SIZE = 3
N_ATT_LAYERS = 2      # torch default 10 (needs >= N_LAYERS // CONV_IN_STACKS)
N_HEADS = 4           # torch default 8
HIDDEN = 64           # torch default 512
CONV_IN_STACKS = 3

# bf16 fed to the MXU, f32 accumulate, f32 elementwise everywhere (v5e VPU has no bf16).
MXU_DTYPE = jnp.bfloat16


# ----------------------------------------------------------------------------
# Single fused kernel (one grid step = one batch element): convs + cross-attn + fc.
# ----------------------------------------------------------------------------
def _fused_kernel(T, TP, H):
    dk = H // N_HEADS
    scale = 1.0 / math.sqrt(dk)

    def kernel(x_ref, p_ref, cw_ref, cb_ref,
               wq_ref, wk_ref, wv_ref, wo_ref,
               bq_ref, bk_ref, bv_ref, bo_ref,
               fcw_ref, fcb_ref, o_ref):
        f32 = jnp.float32

        # Row masks zeroing the wrapped halo rows produced by pltpu.roll
        # (equivalent to the 'same' zero padding of the k=3 conv).
        row = jax.lax.broadcasted_iota(jnp.int32, (T, 1), 0)
        m_prev = jnp.where(row == 0, 0.0, 1.0).astype(f32)       # kills wrapped row 0
        m_next = jnp.where(row == T - 1, 0.0, 1.0).astype(f32)   # kills wrapped row T-1

        act = x_ref[...].astype(f32)               # (T, H), stays on-chip
        prompt_bf = p_ref[...].astype(MXU_DTYPE)   # (TP, H)

        n = 0
        for i in range(N_LAYERS):                  # static unroll over layers
            # ---- Conv1d(k=3, 'same') + ReLU as THREE accumulated MXU dots ----
            # prev[t] = act[t-1]; next[t] = act[t+1]; wrapped rows masked to zero.
            # (shift=T-1 == -1 mod T; only non-negative shifts are used.)
            prev = (pltpu.roll(act, shift=1, axis=0) * m_prev).astype(MXU_DTYPE)
            nxt = (pltpu.roll(act, shift=T - 1, axis=0) * m_next).astype(MXU_DTYPE)
            y = (jnp.dot(prev, cw_ref[i, 0], preferred_element_type=f32)
                 + jnp.dot(act.astype(MXU_DTYPE), cw_ref[i, 1],
                           preferred_element_type=f32)
                 + jnp.dot(nxt, cw_ref[i, 2], preferred_element_type=f32)
                 + cb_ref[i])
            act = jnp.maximum(y, 0.0)               # ReLU (dropout = identity)

            if (i + 1) % CONV_IN_STACKS == 0:
                # ---- residual multi-head cross-attention onto the prompt ----
                act_bf = act.astype(MXU_DTYPE)
                q = jnp.dot(act_bf, wq_ref[n], preferred_element_type=f32) + bq_ref[n]
                k = jnp.dot(prompt_bf, wk_ref[n], preferred_element_type=f32) + bk_ref[n]
                v = jnp.dot(prompt_bf, wv_ref[n], preferred_element_type=f32) + bv_ref[n]

                # Head split -> leading batch dim; no per-head / per-batch Python loops
                # in the matmuls below (single batched dot_general each).
                qh = jnp.stack([q[:, h * dk:(h + 1) * dk] for h in range(N_HEADS)],
                               axis=0).astype(MXU_DTYPE)          # (NH, T, dk)
                kh = jnp.stack([k[:, h * dk:(h + 1) * dk] for h in range(N_HEADS)],
                               axis=0).astype(MXU_DTYPE)          # (NH, TP, dk)
                vh = jnp.stack([v[:, h * dk:(h + 1) * dk] for h in range(N_HEADS)],
                               axis=0).astype(MXU_DTYPE)          # (NH, TP, dk)

                s = jnp.einsum("ntd,nsd->nts", qh, kh,
                               preferred_element_type=f32) * scale   # (NH, T, TP)
                s = s - jnp.max(s, axis=-1, keepdims=True)
                e = jnp.exp(s)
                a = e / jnp.sum(e, axis=-1, keepdims=True)            # exact softmax

                ctx = jnp.einsum("nts,nsd->ntd", a.astype(MXU_DTYPE), vh,
                                 preferred_element_type=f32)          # (NH, T, dk)

                # Output projection with head as a batch dim; head-merge = sum over
                # the leading axis (wo pre-reshaped to (NH, dk, H) in the wrapper),
                # so there is no in-kernel head transpose / lane concat.
                oh = jnp.einsum("ntd,ndh->nth", ctx.astype(MXU_DTYPE), wo_ref[n],
                                preferred_element_type=f32)           # (NH, T, H)
                act = act + jnp.sum(oh, axis=0) + bo_ref[n]           # residual
                n += 1

        # ---- final Linear(H,1) + ReLU, emitted lane-dense as (1, T) ----
        # (1,H) x (T,H) contracted on H -> (1, T): token axis lands on lanes directly.
        y = jax.lax.dot_general(fcw_ref[...], act.astype(MXU_DTYPE),
                                (((1,), (1,)), ((), ())),
                                preferred_element_type=f32) + fcb_ref[...]
        o_ref[...] = jnp.maximum(y, 0.0).astype(o_ref.dtype)

    return kernel


# ----------------------------------------------------------------------------
# Wrapper: single pallas_call, batch as a "parallel" grid axis, weights bf16.
# ----------------------------------------------------------------------------
def duration_predictor_forward(x, prompt_encoder_output, params):
    B, T, H = x.shape
    TP = prompt_encoder_output.shape[1]
    dk = H // N_HEADS

    # weight matrices -> MXU dtype once (halves weight DMA); biases stay f32
    cw = params["conv_w"].astype(MXU_DTYPE)                               # (L, K, H, H)
    wq = params["attn_wq"].astype(MXU_DTYPE)
    wk = params["attn_wk"].astype(MXU_DTYPE)
    wv = params["attn_wv"].astype(MXU_DTYPE)
    wo = params["attn_wo"].reshape(N_ATT_LAYERS, N_HEADS, dk, H).astype(MXU_DTYPE)
    fcw = params["fc_w"].T.astype(MXU_DTYPE)                              # (1, H)

    def const_spec(shape):
        nd = len(shape)
        return pl.BlockSpec(shape, lambda b, nd=nd: (0,) * nd)

    out = pl.pallas_call(
        _fused_kernel(T, TP, H),
        out_shape=jax.ShapeDtypeStruct((B, 1, T), jnp.float32),
        grid=(B,),
        in_specs=[
            pl.BlockSpec((None, T, H), lambda b: (b, 0, 0)),      # x (per batch)
            pl.BlockSpec((None, TP, H), lambda b: (b, 0, 0)),     # prompt (per batch)
            const_spec((N_LAYERS, KERNEL_SIZE, H, H)),            # conv_w
            const_spec((N_LAYERS, 1, H)),                         # conv_b
            const_spec((N_ATT_LAYERS, H, H)),                     # wq
            const_spec((N_ATT_LAYERS, H, H)),                     # wk
            const_spec((N_ATT_LAYERS, H, H)),                     # wv
            const_spec((N_ATT_LAYERS, N_HEADS, dk, H)),           # wo (head-split)
            const_spec((N_ATT_LAYERS, 1, H)),                     # bq
            const_spec((N_ATT_LAYERS, 1, H)),                     # bk
            const_spec((N_ATT_LAYERS, 1, H)),                     # bv
            const_spec((N_ATT_LAYERS, 1, H)),                     # bo
            const_spec((1, H)),                                   # fc_w (row)
            const_spec((1, 1)),                                   # fc_b
        ],
        out_specs=pl.BlockSpec((None, 1, T), lambda b: (b, 0, 0)),
        compiler_params=pltpu.CompilerParams(
            dimension_semantics=("parallel",),        # uses both TCs on v7x
            vmem_limit_bytes=16 * 1024 * 1024,        # generous for this scale
        ),
    )(x, prompt_encoder_output, cw, params["conv_b"], wq, wk, wv, wo,
      params["attn_bq"], params["attn_bk"], params["attn_bv"], params["attn_bo"],
      fcw, params["fc_b"])
    return out.reshape(B, T)


# ----------------------------------------------------------------------------
# Deterministic parameter init (weights as (in, out) matrices, stacked per layer).
# ----------------------------------------------------------------------------
def init_params(key):
    ks = jax.random.split(key, 12)
    s_conv = 1.0 / math.sqrt(HIDDEN * KERNEL_SIZE)
    s_att = 1.0 / math.sqrt(HIDDEN)

    def nrm(k, shape, s):
        return jax.random.normal(k, shape, jnp.float32) * s

    return {
        "conv_w": nrm(ks[0], (N_LAYERS, KERNEL_SIZE, HIDDEN, HIDDEN), s_conv),
        "conv_b": nrm(ks[1], (N_LAYERS, 1, HIDDEN), 0.01),
        "attn_wq": nrm(ks[2], (N_ATT_LAYERS, HIDDEN, HIDDEN), s_att),
        "attn_wk": nrm(ks[3], (N_ATT_LAYERS, HIDDEN, HIDDEN), s_att),
        "attn_wv": nrm(ks[4], (N_ATT_LAYERS, HIDDEN, HIDDEN), s_att),
        "attn_wo": nrm(ks[5], (N_ATT_LAYERS, HIDDEN, HIDDEN), s_att),
        "attn_bq": nrm(ks[6], (N_ATT_LAYERS, 1, HIDDEN), 0.01),
        "attn_bk": nrm(ks[7], (N_ATT_LAYERS, 1, HIDDEN), 0.01),
        "attn_bv": nrm(ks[8], (N_ATT_LAYERS, 1, HIDDEN), 0.01),
        "attn_bo": nrm(ks[9], (N_ATT_LAYERS, 1, HIDDEN), 0.01),
        "fc_w": nrm(ks[10], (HIDDEN, 1), s_att),
        "fc_b": nrm(ks[11], (1, 1), 0.01),
    }


# ----------------------------------------------------------------------------
# Pure-JAX reference with the SAME bf16-at-MXU / f32-accumulate precision recipe
# (including bf16 q/k, probs, ctx), so the check isolates kernel-vs-XLA differences.
# ----------------------------------------------------------------------------
def _ref_forward(x, prompt, params):
    B, T, H = x.shape
    TP = prompt.shape[1]
    dk = H // N_HEADS
    f32 = jnp.float32

    def mdot(eq, a, b):
        return jnp.einsum(eq, a.astype(MXU_DTYPE), b.astype(MXU_DTYPE),
                          preferred_element_type=f32)

    n = 0
    for i in range(N_LAYERS):
        w = params["conv_w"][i]                                   # (K, H, H)
        xp = jnp.pad(x, ((0, 0), (KERNEL_SIZE // 2, KERNEL_SIZE // 2), (0, 0)))
        y = sum(mdot("bti,io->bto", xp[:, k:k + T], w[k])
                for k in range(KERNEL_SIZE)) + params["conv_b"][i]
        x = jax.nn.relu(y)
        if (i + 1) % CONV_IN_STACKS == 0:
            q = (mdot("bth,ho->bto", x, params["attn_wq"][n]) + params["attn_bq"][n]
                 ).reshape(B, T, N_HEADS, dk).transpose(0, 2, 1, 3)
            k = (mdot("bsh,ho->bso", prompt, params["attn_wk"][n]) + params["attn_bk"][n]
                 ).reshape(B, TP, N_HEADS, dk).transpose(0, 2, 1, 3)
            v = (mdot("bsh,ho->bso", prompt, params["attn_wv"][n]) + params["attn_bv"][n]
                 ).reshape(B, TP, N_HEADS, dk).transpose(0, 2, 1, 3)
            s = jnp.einsum("bhtd,bhsd->bhts", q.astype(MXU_DTYPE), k.astype(MXU_DTYPE),
                           preferred_element_type=f32) / math.sqrt(dk)
            a = jax.nn.softmax(s, axis=-1)
            ctx = jnp.einsum("bhts,bhsd->bhtd", a.astype(MXU_DTYPE), v.astype(MXU_DTYPE),
                             preferred_element_type=f32)
            ctx = ctx.transpose(0, 2, 1, 3).reshape(B, T, H)
            x = x + mdot("bth,ho->bto", ctx, params["attn_wo"][n]) + params["attn_bo"][n]
            n += 1
    y = mdot("bth,ho->bto", x, params["fc_w"])[..., 0] + params["fc_b"][0, 0]
    return jax.nn.relu(y)


if __name__ == "__main__":
    key = jax.random.PRNGKey(0)
    kx, kp, kparam = jax.random.split(key, 3)
    B, T, TP = 2, 8, 12
    x = jax.random.normal(kx, (B, T, HIDDEN), jnp.float32)        # query sequence
    prompt = jax.random.normal(kp, (B, TP, HIDDEN), jnp.float32)  # prompt_encoder_output
    params = init_params(kparam)

    fwd = jax.jit(duration_predictor_forward)
    out = jax.block_until_ready(fwd(x, prompt, params))
    assert out.shape == (B, T), out.shape

    ref = _ref_forward(x, prompt, params)
    if not jnp.allclose(out, ref, rtol=2e-2, atol=2e-2):
        raise AssertionError(
            f"Pallas/ref mismatch, max abs err = {float(jnp.max(jnp.abs(out - ref)))}")

    print("KERNEL_OK")
</pallas_src>

<mosaic_0001>
module attributes {stable_mosaic.version = 11 : i64} {
  func.func @kernel(%arg0: i32, %arg1: memref<1x8x64xf32, #tpu.memory_space<vmem>>, %arg2: memref<1x12x64xf32, #tpu.memory_space<vmem>>, %arg3: memref<6x3x64x64xbf16, #tpu.memory_space<vmem>>, %arg4: memref<6x1x64xf32, #tpu.memory_space<vmem>>, %arg5: memref<2x64x64xbf16, #tpu.memory_space<vmem>>, %arg6: memref<2x64x64xbf16, #tpu.memory_space<vmem>>, %arg7: memref<2x64x64xbf16, #tpu.memory_space<vmem>>, %arg8: memref<2x4x16x64xbf16, #tpu.memory_space<vmem>>, %arg9: memref<2x1x64xf32, #tpu.memory_space<vmem>>, %arg10: memref<2x1x64xf32, #tpu.memory_space<vmem>>, %arg11: memref<2x1x64xf32, #tpu.memory_space<vmem>>, %arg12: memref<2x1x64xf32, #tpu.memory_space<vmem>>, %arg13: memref<1x64xbf16, #tpu.memory_space<vmem>>, %arg14: memref<1x1xf32, #tpu.memory_space<vmem>>, %arg15: memref<1x1x8xf32, #tpu.memory_space<vmem>>) attributes {dimension_semantics = [#tpu.dimension_semantics<parallel>], iteration_bounds = array<i64: 2>, scalar_prefetch = 0 : i64, scratch_operands = 0 : i64, tpu.core_type = #tpu.core_type<tc>, window_params = [{transform_indices = @transform_0, window_bounds = array<i64: 1, 8, 64>}, {transform_indices = @transform_1, window_bounds = array<i64: 1, 12, 64>}, {pipeline_mode = #tpu.pipeline_mode<synchronous>, transform_indices = @transform_2, window_bounds = array<i64: 6, 3, 64, 64>}, {pipeline_mode = #tpu.pipeline_mode<synchronous>, transform_indices = @transform_3, window_bounds = array<i64: 6, 1, 64>}, {pipeline_mode = #tpu.pipeline_mode<synchronous>, transform_indices = @transform_4, window_bounds = array<i64: 2, 64, 64>}, {pipeline_mode = #tpu.pipeline_mode<synchronous>, transform_indices = @transform_5, window_bounds = array<i64: 2, 64, 64>}, {pipeline_mode = #tpu.pipeline_mode<synchronous>, transform_indices = @transform_6, window_bounds = array<i64: 2, 64, 64>}, {pipeline_mode = #tpu.pipeline_mode<synchronous>, transform_indices = @transform_7, window_bounds = array<i64: 2, 4, 16, 64>}, {pipeline_mode = #tpu.pipeline_mode<synchronous>, transform_indices = @transform_8, window_bounds = array<i64: 2, 1, 64>}, {pipeline_mode = #tpu.pipeline_mode<synchronous>, transform_indices = @transform_9, window_bounds = array<i64: 2, 1, 64>}, {pipeline_mode = #tpu.pipeline_mode<synchronous>, transform_indices = @transform_10, window_bounds = array<i64: 2, 1, 64>}, {pipeline_mode = #tpu.pipeline_mode<synchronous>, transform_indices = @transform_11, window_bounds = array<i64: 2, 1, 64>}, {pipeline_mode = #tpu.pipeline_mode<synchronous>, transform_indices = @transform_12, window_bounds = array<i64: 1, 64>}, {pipeline_mode = #tpu.pipeline_mode<synchronous>, transform_indices = @transform_13, window_bounds = array<i64: 1, 1>}, {transform_indices = @transform_14, window_bounds = array<i64: 1, 1, 8>}]} {
    %0 = tpu.iota {dimensions = array<i32: 0>} : vector<8x1xi32>
    %c0_i32 = arith.constant 0 : i32
    %1 = vector.broadcast %c0_i32 : i32 to vector<8x1xi32>
    %2 = arith.cmpi eq, %0, %1 : vector<8x1xi32>
    %cst = arith.constant 0.000000e+00 : f32
    %cst_0 = arith.constant 1.000000e+00 : f32
    %3 = vector.broadcast %cst : f32 to vector<8x1xf32>
    %4 = vector.broadcast %cst_0 : f32 to vector<8x1xf32>
    %5 = arith.select %2, %3, %4 : vector<8x1xi1>, vector<8x1xf32>
    %c7_i32 = arith.constant 7 : i32
    %6 = vector.broadcast %c7_i32 : i32 to vector<8x1xi32>
    %7 = arith.cmpi eq, %0, %6 : vector<8x1xi32>
    %cst_1 = arith.constant 0.000000e+00 : f32
    %cst_2 = arith.constant 1.000000e+00 : f32
    %8 = vector.broadcast %cst_1 : f32 to vector<8x1xf32>
    %9 = vector.broadcast %cst_2 : f32 to vector<8x1xf32>
    %10 = arith.select %7, %8, %9 : vector<8x1xi1>, vector<8x1xf32>
    %c0 = arith.constant 0 : index
    %c0_3 = arith.constant 0 : index
    %c0_4 = arith.constant 0 : index
    %11 = vector.load %arg1[%c0, %c0_3, %c0_4] : memref<1x8x64xf32, #tpu.memory_space<vmem>>, vector<1x8x64xf32>
    %12 = vector.shape_cast %11 : vector<1x8x64xf32> to vector<8x64xf32>
    %c0_5 = arith.constant 0 : index
    %c0_6 = arith.constant 0 : index
    %c0_7 = arith.constant 0 : index
    %13 = vector.load %arg2[%c0_5, %c0_6, %c0_7] : memref<1x12x64xf32, #tpu.memory_space<vmem>>, vector<1x12x64xf32>
    %14 = vector.shape_cast %13 : vector<1x12x64xf32> to vector<12x64xf32>
    %15 = arith.truncf %14 : vector<12x64xf32> to vector<12x64xbf16>
    %c1_i32 = arith.constant 1 : i32
    %16 = tpu.dynamic_rotate %12 by %c1_i32 dim 0 : vector<8x64xf32>, i32 -> vector<8x64xf32>
    %17 = vector.broadcast %5 : vector<8x1xf32> to vector<8x64xf32>
    %18 = arith.mulf %16, %17 : vector<8x64xf32>
    %19 = arith.truncf %18 : vector<8x64xf32> to vector<8x64xbf16>
    %c7_i32_8 = arith.constant 7 : i32
    %20 = tpu.dynamic_rotate %12 by %c7_i32_8 dim 0 : vector<8x64xf32>, i32 -> vector<8x64xf32>
    %21 = vector.broadcast %10 : vector<8x1xf32> to vector<8x64xf32>
    %22 = arith.mulf %20, %21 : vector<8x64xf32>
    %23 = arith.truncf %22 : vector<8x64xf32> to vector<8x64xbf16>
    %c0_9 = arith.constant 0 : index
    %c0_10 = arith.constant 0 : index
    %c0_11 = arith.constant 0 : index
    %c0_12 = arith.constant 0 : index
    %24 = vector.load %arg3[%c0_9, %c0_10, %c0_11, %c0_12] : memref<6x3x64x64xbf16, #tpu.memory_space<vmem>>, vector<1x1x64x64xbf16>
    %25 = vector.shape_cast %24 : vector<1x1x64x64xbf16> to vector<64x64xbf16>
    %cst_13 = arith.constant dense<0.000000e+00> : vector<8x64xf32>
    %26 = tpu.matmul %19, %25, %cst_13 {dimension_numbers = #tpu.dot_dimension_numbers<[1], [0], [0], [1], [0, 0, 1, 1], [], []>} : vector<8x64xbf16>, vector<64x64xbf16>, vector<8x64xf32> -> vector<8x64xf32>
    %27 = arith.truncf %12 : vector<8x64xf32> to vector<8x64xbf16>
    %c0_14 = arith.constant 0 : index
    %c1 = arith.constant 1 : index
    %c0_15 = arith.constant 0 : index
    %c0_16 = arith.constant 0 : index
    %28 = vector.load %arg3[%c0_14, %c1, %c0_15, %c0_16] : memref<6x3x64x64xbf16, #tpu.memory_space<vmem>>, vector<1x1x64x64xbf16>
    %29 = vector.shape_cast %28 : vector<1x1x64x64xbf16> to vector<64x64xbf16>
    %cst_17 = arith.constant dense<0.000000e+00> : vector<8x64xf32>
    %30 = tpu.matmul %27, %29, %cst_17 {dimension_numbers = #tpu.dot_dimension_numbers<[1], [0], [0], [1], [0, 0, 1, 1], [], []>} : vector<8x64xbf16>, vector<64x64xbf16>, vector<8x64xf32> -> vector<8x64xf32>
    %31 = arith.addf %26, %30 : vector<8x64xf32>
    %c0_18 = arith.constant 0 : index
    %c2 = arith.constant 2 : index
    %c0_19 = arith.constant 0 : index
    %c0_20 = arith.constant 0 : index
    %32 = vector.load %arg3[%c0_18, %c2, %c0_19, %c0_20] : memref<6x3x64x64xbf16, #tpu.memory_space<vmem>>, vector<1x1x64x64xbf16>
    %33 = vector.shape_cast %32 : vector<1x1x64x64xbf16> to vector<64x64xbf16>
    %cst_21 = arith.constant dense<0.000000e+00> : vector<8x64xf32>
    %34 = tpu.matmul %23, %33, %cst_21 {dimension_numbers = #tpu.dot_dimension_numbers<[1], [0], [0], [1], [0, 0, 1, 1], [], []>} : vector<8x64xbf16>, vector<64x64xbf16>, vector<8x64xf32> -> vector<8x64xf32>
    %35 = arith.addf %31, %34 : vector<8x64xf32>
    %c0_22 = arith.constant 0 : index
    %c0_23 = arith.constant 0 : index
    %c0_24 = arith.constant 0 : index
    %36 = vector.load %arg4[%c0_22, %c0_23, %c0_24] : memref<6x1x64xf32, #tpu.memory_space<vmem>>, vector<1x1x64xf32>
    %37 = vector.shape_cast %36 : vector<1x1x64xf32> to vector<1x64xf32>
    %38 = vector.broadcast %37 : vector<1x64xf32> to vector<8x64xf32>
    %39 = arith.addf %35, %38 : vector<8x64xf32>
    %cst_25 = arith.constant 0.000000e+00 : f32
    %40 = vector.broadcast %cst_25 : f32 to vector<8x64xf32>
    %41 = arith.maximumf %39, %40 : vector<8x64xf32>
    %c1_i32_26 = arith.constant 1 : i32
    %42 = tpu.dynamic_rotate %41 by %c1_i32_26 dim 0 : vector<8x64xf32>, i32 -> vector<8x64xf32>
    %43 = vector.broadcast %5 : vector<8x1xf32> to vector<8x64xf32>
    %44 = arith.mulf %42, %43 : vector<8x64xf32>
    %45 = arith.truncf %44 : vector<8x64xf32> to vector<8x64xbf16>
    %c7_i32_27 = arith.constant 7 : i32
    %46 = tpu.dynamic_rotate %41 by %c7_i32_27 dim 0 : vector<8x64xf32>, i32 -> vector<8x64xf32>
    %47 = vector.broadcast %10 : vector<8x1xf32> to vector<8x64xf32>
    %48 = arith.mulf %46, %47 : vector<8x64xf32>
    %49 = arith.truncf %48 : vector<8x64xf32> to vector<8x64xbf16>
    %c1_28 = arith.constant 1 : index
    %c0_29 = arith.constant 0 : index
    %c0_30 = arith.constant 0 : index
    %c0_31 = arith.constant 0 : index
    %50 = vector.load %arg3[%c1_28, %c0_29, %c0_30, %c0_31] : memref<6x3x64x64xbf16, #tpu.memory_space<vmem>>, vector<1x1x64x64xbf16>
    %51 = vector.shape_cast %50 : vector<1x1x64x64xbf16> to vector<64x64xbf16>
    %cst_32 = arith.constant dense<0.000000e+00> : vector<8x64xf32>
    %52 = tpu.matmul %45, %51, %cst_32 {dimension_numbers = #tpu.dot_dimension_numbers<[1], [0], [0], [1], [0, 0, 1, 1], [], []>} : vector<8x64xbf16>, vector<64x64xbf16>, vector<8x64xf32> -> vector<8x64xf32>
    %53 = arith.truncf %41 : vector<8x64xf32> to vector<8x64xbf16>
    %c1_33 = arith.constant 1 : index
    %c1_34 = arith.constant 1 : index
    %c0_35 = arith.constant 0 : index
    %c0_36 = arith.constant 0 : index
    %54 = vector.load %arg3[%c1_33, %c1_34, %c0_35, %c0_36] : memref<6x3x64x64xbf16, #tpu.memory_space<vmem>>, vector<1x1x64x64xbf16>
    %55 = vector.shape_cast %54 : vector<1x1x64x64xbf16> to vector<64x64xbf16>
    %cst_37 = arith.constant dense<0.000000e+00> : vector<8x64xf32>
    %56 = tpu.matmul %53, %55, %cst_37 {dimension_numbers = #tpu.dot_dimension_numbers<[1], [0], [0], [1], [0, 0, 1, 1], [], []>} : vector<8x64xbf16>, vector<64x64xbf16>, vector<8x64xf32> -> vector<8x64xf32>
    %57 = arith.addf %52, %56 : vector<8x64xf32>
    %c1_38 = arith.constant 1 : index
    %c2_39 = arith.constant 2 : index
    %c0_40 = arith.constant 0 : index
    %c0_41 = arith.constant 0 : index
    %58 = vector.load %arg3[%c1_38, %c2_39, %c0_40, %c0_41] : memref<6x3x64x64xbf16, #tpu.memory_space<vmem>>, vector<1x1x64x64xbf16>
    %59 = vector.shape_cast %58 : vector<1x1x64x64xbf16> to vector<64x64xbf16>
    %cst_42 = arith.constant dense<0.000000e+00> : vector<8x64xf32>
    %60 = tpu.matmul %49, %59, %cst_42 {dimension_numbers = #tpu.dot_dimension_numbers<[1], [0], [0], [1], [0, 0, 1, 1], [], []>} : vector<8x64xbf16>, vector<64x64xbf16>, vector<8x64xf32> -> vector<8x64xf32>
    %61 = arith.addf %57, %60 : vector<8x64xf32>
    %c1_43 = arith.constant 1 : index
    %c0_44 = arith.constant 0 : index
    %c0_45 = arith.constant 0 : index
    %62 = vector.load %arg4[%c1_43, %c0_44, %c0_45] : memref<6x1x64xf32, #tpu.memory_space<vmem>>, vector<1x1x64xf32>
    %63 = vector.shape_cast %62 : vector<1x1x64xf32> to vector<1x64xf32>
    %64 = vector.broadcast %63 : vector<1x64xf32> to vector<8x64xf32>
    %65 = arith.addf %61, %64 : vector<8x64xf32>
    %cst_46 = arith.constant 0.000000e+00 : f32
    %66 = vector.broadcast %cst_46 : f32 to vector<8x64xf32>
    %67 = arith.maximumf %65, %66 : vector<8x64xf32>
    %c1_i32_47 = arith.constant 1 : i32
    %68 = tpu.dynamic_rotate %67 by %c1_i32_47 dim 0 : vector<8x64xf32>, i32 -> vector<8x64xf32>
    %69 = vector.broadcast %5 : vector<8x1xf32> to vector<8x64xf32>
    %70 = arith.mulf %68, %69 : vector<8x64xf32>
    %71 = arith.truncf %70 : vector<8x64xf32> to vector<8x64xbf16>
    %c7_i32_48 = arith.constant 7 : i32
    %72 = tpu.dynamic_rotate %67 by %c7_i32_48 dim 0 : vector<8x64xf32>, i32 -> vector<8x64xf32>
    %73 = vector.broadcast %10 : vector<8x1xf32> to vector<8x64xf32>
    %74 = arith.mulf %72, %73 : vector<8x64xf32>
    %75 = arith.truncf %74 : vector<8x64xf32> to vector<8x64xbf16>
    %c2_49 = arith.constant 2 : index
    %c0_50 = arith.constant 0 : index
    %c0_51 = arith.constant 0 : index
    %c0_52 = arith.constant 0 : index
    %76 = vector.load %arg3[%c2_49, %c0_50, %c0_51, %c0_52] : memref<6x3x64x64xbf16, #tpu.memory_space<vmem>>, vector<1x1x64x64xbf16>
    %77 = vector.shape_cast %76 : vector<1x1x64x64xbf16> to vector<64x64xbf16>
    %cst_53 = arith.constant dense<0.000000e+00> : vector<8x64xf32>
    %78 = tpu.matmul %71, %77, %cst_53 {dimension_numbers = #tpu.dot_dimension_numbers<[1], [0], [0], [1], [0, 0, 1, 1], [], []>} : vector<8x64xbf16>, vector<64x64xbf16>, vector<8x64xf32> -> vector<8x64xf32>
    %79 = arith.truncf %67 : vector<8x64xf32> to vector<8x64xbf16>
    %c2_54 = arith.constant 2 : index
    %c1_55 = arith.constant 1 : index
    %c0_56 = arith.constant 0 : index
    %c0_57 = arith.constant 0 : index
    %80 = vector.load %arg3[%c2_54, %c1_55, %c0_56, %c0_57] : memref<6x3x64x64xbf16, #tpu.memory_space<vmem>>, vector<1x1x64x64xbf16>
    %81 = vector.shape_cast %80 : vector<1x1x64x64xbf16> to vector<64x64xbf16>
    %cst_58 = arith.constant dense<0.000000e+00> : vector<8x64xf32>
    %82 = tpu.matmul %79, %81, %cst_58 {dimension_numbers = #tpu.dot_dimension_numbers<[1], [0], [0], [1], [0, 0, 1, 1], [], []>} : vector<8x64xbf16>, vector<64x64xbf16>, vector<8x64xf32> -> vector<8x64xf32>
    %83 = arith.addf %78, %82 : vector<8x64xf32>
    %c2_59 = arith.constant 2 : index
    %c2_60 = arith.constant 2 : index
    %c0_61 = arith.constant 0 : index
    %c0_62 = arith.constant 0 : index
    %84 = vector.load %arg3[%c2_59, %c2_60, %c0_61, %c0_62] : memref<6x3x64x64xbf16, #tpu.memory_space<vmem>>, vector<1x1x64x64xbf16>
    %85 = vector.shape_cast %84 : vector<1x1x64x64xbf16> to vector<64x64xbf16>
    %cst_63 = arith.constant dense<0.000000e+00> : vector<8x64xf32>
    %86 = tpu.matmul %75, %85, %cst_63 {dimension_numbers = #tpu.dot_dimension_numbers<[1], [0], [0], [1], [0, 0, 1, 1], [], []>} : vector<8x64xbf16>, vector<64x64xbf16>, vector<8x64xf32> -> vector<8x64xf32>
    %87 = arith.addf %83, %86 : vector<8x64xf32>
    %c2_64 = arith.constant 2 : index
    %c0_65 = arith.constant 0 : index
    %c0_66 = arith.constant 0 : index
    %88 = vector.load %arg4[%c2_64, %c0_65, %c0_66] : memref<6x1x64xf32, #tpu.memory_space<vmem>>, vector<1x1x64xf32>
    %89 = vector.shape_cast %88 : vector<1x1x64xf32> to vector<1x64xf32>
    %90 = vector.broadcast %89 : vector<1x64xf32> to vector<8x64xf32>
    %91 = arith.addf %87, %90 : vector<8x64xf32>
    %cst_67 = arith.constant 0.000000e+00 : f32
    %92 = vector.broadcast %cst_67 : f32 to vector<8x64xf32>
    %93 = arith.maximumf %91, %92 : vector<8x64xf32>
    %94 = arith.truncf %93 : vector<8x64xf32> to vector<8x64xbf16>
    %c0_68 = arith.constant 0 : index
    %c0_69 = arith.constant 0 : index
    %c0_70 = arith.constant 0 : index
    %95 = vector.load %arg5[%c0_68, %c0_69, %c0_70] : memref<2x64x64xbf16, #tpu.memory_space<vmem>>, vector<1x64x64xbf16>
    %96 = vector.shape_cast %95 : vector<1x64x64xbf16> to vector<64x64xbf16>
    %cst_71 = arith.constant dense<0.000000e+00> : vector<8x64xf32>
    %97 = tpu.matmul %94, %96, %cst_71 {dimension_numbers = #tpu.dot_dimension_numbers<[1], [0], [0], [1], [0, 0, 1, 1], [], []>} : vector<8x64xbf16>, vector<64x64xbf16>, vector<8x64xf32> -> vector<8x64xf32>
    %c0_72 = arith.constant 0 : index
    %c0_73 = arith.constant 0 : index
    %c0_74 = arith.constant 0 : index
    %98 = vector.load %arg9[%c0_72, %c0_73, %c0_74] : memref<2x1x64xf32, #tpu.memory_space<vmem>>, vector<1x1x64xf32>
    %99 = vector.shape_cast %98 : vector<1x1x64xf32> to vector<1x64xf32>
    %100 = vector.broadcast %99 : vector<1x64xf32> to vector<8x64xf32>
    %101 = arith.addf %97, %100 : vector<8x64xf32>
    %c0_75 = arith.constant 0 : index
    %c0_76 = arith.constant 0 : index
    %c0_77 = arith.constant 0 : index
    %102 = vector.load %arg6[%c0_75, %c0_76, %c0_77] : memref<2x64x64xbf16, #tpu.memory_space<vmem>>, vector<1x64x64xbf16>
    %103 = vector.shape_cast %102 : vector<1x64x64xbf16> to vector<64x64xbf16>
    %cst_78 = arith.constant dense<0.000000e+00> : vector<12x64xf32>
    %104 = tpu.matmul %15, %103, %cst_78 {dimension_numbers = #tpu.dot_dimension_numbers<[1], [0], [0], [1], [0, 0, 1, 1], [], []>} : vector<12x64xbf16>, vector<64x64xbf16>, vector<12x64xf32> -> vector<12x64xf32>
    %c0_79 = arith.constant 0 : index
    %c0_80 = arith.constant 0 : index
    %c0_81 = arith.constant 0 : index
    %105 = vector.load %arg10[%c0_79, %c0_80, %c0_81] : memref<2x1x64xf32, #tpu.memory_space<vmem>>, vector<1x1x64xf32>
    %106 = vector.shape_cast %105 : vector<1x1x64xf32> to vector<1x64xf32>
    %107 = vector.broadcast %106 : vector<1x64xf32> to vector<12x64xf32>
    %108 = arith.addf %104, %107 : vector<12x64xf32>
    %c0_82 = arith.constant 0 : index
    %c0_83 = arith.constant 0 : index
    %c0_84 = arith.constant 0 : index
    %109 = vector.load %arg7[%c0_82, %c0_83, %c0_84] : memref<2x64x64xbf16, #tpu.memory_space<vmem>>, vector<1x64x64xbf16>
    %110 = vector.shape_cast %109 : vector<1x64x64xbf16> to vector<64x64xbf16>
    %cst_85 = arith.constant dense<0.000000e+00> : vector<12x64xf32>
    %111 = tpu.matmul %15, %110, %cst_85 {dimension_numbers = #tpu.dot_dimension_numbers<[1], [0], [0], [1], [0, 0, 1, 1], [], []>} : vector<12x64xbf16>, vector<64x64xbf16>, vector<12x64xf32> -> vector<12x64xf32>
    %c0_86 = arith.constant 0 : index
    %c0_87 = arith.constant 0 : index
    %c0_88 = arith.constant 0 : index
    %112 = vector.load %arg11[%c0_86, %c0_87, %c0_88] : memref<2x1x64xf32, #tpu.memory_space<vmem>>, vector<1x1x64xf32>
    %113 = vector.shape_cast %112 : vector<1x1x64xf32> to vector<1x64xf32>
    %114 = vector.broadcast %113 : vector<1x64xf32> to vector<12x64xf32>
    %115 = arith.addf %111, %114 : vector<12x64xf32>
    %116 = vector.extract_strided_slice %101 {offsets = [0, 0], sizes = [8, 16], strides = [1, 1]} : vector<8x64xf32> to vector<8x16xf32>
    %117 = vector.extract_strided_slice %101 {offsets = [0, 16], sizes = [8, 16], strides = [1, 1]} : vector<8x64xf32> to vector<8x16xf32>
    %118 = vector.extract_strided_slice %101 {offsets = [0, 32], sizes = [8, 16], strides = [1, 1]} : vector<8x64xf32> to vector<8x16xf32>
    %119 = vector.extract_strided_slice %101 {offsets = [0, 48], sizes = [8, 16], strides = [1, 1]} : vector<8x64xf32> to vector<8x16xf32>
    %120 = vector.shape_cast %116 : vector<8x16xf32> to vector<1x8x16xf32>
    %121 = vector.shape_cast %117 : vector<8x16xf32> to vector<1x8x16xf32>
    %122 = vector.shape_cast %118 : vector<8x16xf32> to vector<1x8x16xf32>
    %123 = vector.shape_cast %119 : vector<8x16xf32> to vector<1x8x16xf32>
    %124 = tpu.concatenate %120, %121, %122, %123 in 0 : vector<1x8x16xf32>, vector<1x8x16xf32>, vector<1x8x16xf32>, vector<1x8x16xf32> -> vector<4x8x16xf32>
    %125 = arith.truncf %124 : vector<4x8x16xf32> to vector<4x8x16xbf16>
    %126 = vector.extract_strided_slice %108 {offsets = [0, 0], sizes = [12, 16], strides = [1, 1]} : vector<12x64xf32> to vector<12x16xf32>
    %127 = vector.extract_strided_slice %108 {offsets = [0, 16], sizes = [12, 16], strides = [1, 1]} : vector<12x64xf32> to vector<12x16xf32>
    %128 = vector.extract_strided_slice %108 {offsets = [0, 32], sizes = [12, 16], strides = [1, 1]} : vector<12x64xf32> to vector<12x16xf32>
    %129 = vector.extract_strided_slice %108 {offsets = [0, 48], sizes = [12, 16], strides = [1, 1]} : vector<12x64xf32> to vector<12x16xf32>
    %130 = vector.shape_cast %126 : vector<12x16xf32> to vector<1x12x16xf32>
    %131 = vector.shape_cast %127 : vector<12x16xf32> to vector<1x12x16xf32>
    %132 = vector.shape_cast %128 : vector<12x16xf32> to vector<1x12x16xf32>
    %133 = vector.shape_cast %129 : vector<12x16xf32> to vector<1x12x16xf32>
    %134 = tpu.concatenate %130, %131, %132, %133 in 0 : vector<1x12x16xf32>, vector<1x12x16xf32>, vector<1x12x16xf32>, vector<1x12x16xf32> -> vector<4x12x16xf32>
    %135 = arith.truncf %134 : vector<4x12x16xf32> to vector<4x12x16xbf16>
    %136 = vector.extract_strided_slice %115 {offsets = [0, 0], sizes = [12, 16], strides = [1, 1]} : vector<12x64xf32> to vector<12x16xf32>
    %137 = vector.extract_strided_slice %115 {offsets = [0, 16], sizes = [12, 16], strides = [1, 1]} : vector<12x64xf32> to vector<12x16xf32>
    %138 = vector.extract_strided_slice %115 {offsets = [0, 32], sizes = [12, 16], strides = [1, 1]} : vector<12x64xf32> to vector<12x16xf32>
    %139 = vector.extract_strided_slice %115 {offsets = [0, 48], sizes = [12, 16], strides = [1, 1]} : vector<12x64xf32> to vector<12x16xf32>
    %140 = vector.shape_cast %136 : vector<12x16xf32> to vector<1x12x16xf32>
    %141 = vector.shape_cast %137 : vector<12x16xf32> to vector<1x12x16xf32>
    %142 = vector.shape_cast %138 : vector<12x16xf32> to vector<1x12x16xf32>
    %143 = vector.shape_cast %139 : vector<12x16xf32> to vector<1x12x16xf32>
    %144 = tpu.concatenate %140, %141, %142, %143 in 0 : vector<1x12x16xf32>, vector<1x12x16xf32>, vector<1x12x16xf32>, vector<1x12x16xf32> -> vector<4x12x16xf32>
    %145 = arith.truncf %144 : vector<4x12x16xf32> to vector<4x12x16xbf16>
    "tpu.trace_start"() <{level = 10 : i32, message = "ntd,nsd->nts"}> : () -> ()
    %cst_89 = arith.constant dense<0.000000e+00> : vector<4x8x12xf32>
    %146 = tpu.matmul %125, %135, %cst_89 {dimension_numbers = #tpu.dot_dimension_numbers<[2], [2], [1], [1], [0, 0, 0, 1, 1, 1], [0], [0]>} : vector<4x8x16xbf16>, vector<4x12x16xbf16>, vector<4x8x12xf32> -> vector<4x8x12xf32>
    "tpu.trace_stop"() : () -> ()
    %cst_90 = arith.constant 2.500000e-01 : f32
    %147 = vector.broadcast %cst_90 : f32 to vector<4x8x12xf32>
    %148 = arith.mulf %146, %147 : vector<4x8x12xf32>
    %cst_91 = arith.constant dense<0xFF800000> : vector<4x8xf32>
    %149 = vector.multi_reduction <maximumf>, %148, %cst_91 [2] : vector<4x8x12xf32> to vector<4x8xf32>
    %150 = vector.shape_cast %149 : vector<4x8xf32> to vector<4x8x1xf32>
    %151 = vector.broadcast %150 : vector<4x8x1xf32> to vector<4x8x12xf32>
    %152 = arith.subf %148, %151 : vector<4x8x12xf32>
    %153 = math.exp %152 : vector<4x8x12xf32>
    %cst_92 = arith.constant dense<0.000000e+00> : vector<4x8xf32>
    %154 = vector.multi_reduction <add>, %153, %cst_92 [2] : vector<4x8x12xf32> to vector<4x8xf32>
    %155 = vector.shape_cast %154 : vector<4x8xf32> to vector<4x8x1xf32>
    %156 = vector.broadcast %155 : vector<4x8x1xf32> to vector<4x8x12xf32>
    %157 = arith.divf %153, %156 : vector<4x8x12xf32>
    %158 = arith.truncf %157 : vector<4x8x12xf32> to vector<4x8x12xbf16>
    "tpu.trace_start"() <{level = 10 : i32, message = "nts,nsd->ntd"}> : () -> ()
    %cst_93 = arith.constant dense<0.000000e+00> : vector<4x8x16xf32>
    %159 = tpu.matmul %158, %145, %cst_93 {dimension_numbers = #tpu.dot_dimension_numbers<[2], [1], [1], [2], [0, 0, 0, 1, 1, 2], [0], [0]>} : vector<4x8x12xbf16>, vector<4x12x16xbf16>, vector<4x8x16xf32> -> vector<4x8x16xf32>
    "tpu.trace_stop"() : () -> ()
    %160 = arith.truncf %159 : vector<4x8x16xf32> to vector<4x8x16xbf16>
    %c0_94 = arith.constant 0 : index
    %c0_95 = arith.constant 0 : index
    %c0_96 = arith.constant 0 : index
    %c0_97 = arith.constant 0 : index
    %161 = vector.load %arg8[%c0_94, %c0_95, %c0_96, %c0_97] : memref<2x4x16x64xbf16, #tpu.memory_space<vmem>>, vector<1x4x16x64xbf16>
    %162 = vector.shape_cast %161 : vector<1x4x16x64xbf16> to vector<4x16x64xbf16>
    "tpu.trace_start"() <{level = 10 : i32, message = "ntd,ndh->nth"}> : () -> ()
    %cst_98 = arith.constant dense<0.000000e+00> : vector<4x8x64xf32>
    %163 = tpu.matmul %160, %162, %cst_98 {dimension_numbers = #tpu.dot_dimension_numbers<[2], [1], [1], [2], [0, 0, 0, 1, 1, 2], [0], [0]>} : vector<4x8x16xbf16>, vector<4x16x64xbf16>, vector<4x8x64xf32> -> vector<4x8x64xf32>
    "tpu.trace_stop"() : () -> ()
    %cst_99 = arith.constant dense<0.000000e+00> : vector<8x64xf32>
    %164 = vector.multi_reduction <add>, %163, %cst_99 [0] : vector<4x8x64xf32> to vector<8x64xf32>
    %165 = arith.addf %93, %164 : vector<8x64xf32>
    %c0_100 = arith.constant 0 : index
    %c0_101 = arith.constant 0 : index
    %c0_102 = arith.constant 0 : index
    %166 = vector.load %arg12[%c0_100, %c0_101, %c0_102] : memref<2x1x64xf32, #tpu.memory_space<vmem>>, vector<1x1x64xf32>
    %167 = vector.shape_cast %166 : vector<1x1x64xf32> to vector<1x64xf32>
    %168 = vector.broadcast %167 : vector<1x64xf32> to vector<8x64xf32>
    %169 = arith.addf %165, %168 : vector<8x64xf32>
    %c1_i32_103 = arith.constant 1 : i32
    %170 = tpu.dynamic_rotate %169 by %c1_i32_103 dim 0 : vector<8x64xf32>, i32 -> vector<8x64xf32>
    %171 = vector.broadcast %5 : vector<8x1xf32> to vector<8x64xf32>
    %172 = arith.mulf %170, %171 : vector<8x64xf32>
    %173 = arith.truncf %172 : vector<8x64xf32> to vector<8x64xbf16>
    %c7_i32_104 = arith.constant 7 : i32
    %174 = tpu.dynamic_rotate %169 by %c7_i32_104 dim 0 : vector<8x64xf32>, i32 -> vector<8x64xf32>
    %175 = vector.broadcast %10 : vector<8x1xf32> to vector<8x64xf32>
    %176 = arith.mulf %174, %175 : vector<8x64xf32>
    %177 = arith.truncf %176 : vector<8x64xf32> to vector<8x64xbf16>
    %c3 = arith.constant 3 : index
    %c0_105 = arith.constant 0 : index
    %c0_106 = arith.constant 0 : index
    %c0_107 = arith.constant 0 : index
    %178 = vector.load %arg3[%c3, %c0_105, %c0_106, %c0_107] : memref<6x3x64x64xbf16, #tpu.memory_space<vmem>>, vector<1x1x64x64xbf16>
    %179 = vector.shape_cast %178 : vector<1x1x64x64xbf16> to vector<64x64xbf16>
    %cst_108 = arith.constant dense<0.000000e+00> : vector<8x64xf32>
    %180 = tpu.matmul %173, %179, %cst_108 {dimension_numbers = #tpu.dot_dimension_numbers<[1], [0], [0], [1], [0, 0, 1, 1], [], []>} : vector<8x64xbf16>, vector<64x64xbf16>, vector<8x64xf32> -> vector<8x64xf32>
    %181 = arith.truncf %169 : vector<8x64xf32> to vector<8x64xbf16>
    %c3_109 = arith.constant 3 : index
    %c1_110 = arith.constant 1 : index
    %c0_111 = arith.constant 0 : index
    %c0_112 = arith.constant 0 : index
    %182 = vector.load %arg3[%c3_109, %c1_110, %c0_111, %c0_112] : memref<6x3x64x64xbf16, #tpu.memory_space<vmem>>, vector<1x1x64x64xbf16>
    %183 = vector.shape_cast %182 : vector<1x1x64x64xbf16> to vector<64x64xbf16>
    %cst_113 = arith.constant dense<0.000000e+00> : vector<8x64xf32>
    %184 = tpu.matmul %181, %183, %cst_113 {dimension_numbers = #tpu.dot_dimension_numbers<[1], [0], [0], [1], [0, 0, 1, 1], [], []>} : vector<8x64xbf16>, vector<64x64xbf16>, vector<8x64xf32> -> vector<8x64xf32>
    %185 = arith.addf %180, %184 : vector<8x64xf32>
    %c3_114 = arith.constant 3 : index
    %c2_115 = arith.constant 2 : index
    %c0_116 = arith.constant 0 : index
    %c0_117 = arith.constant 0 : index
    %186 = vector.load %arg3[%c3_114, %c2_115, %c0_116, %c0_117] : memref<6x3x64x64xbf16, #tpu.memory_space<vmem>>, vector<1x1x64x64xbf16>
    %187 = vector.shape_cast %186 : vector<1x1x64x64xbf16> to vector<64x64xbf16>
    %cst_118 = arith.constant dense<0.000000e+00> : vector<8x64xf32>
    %188 = tpu.matmul %177, %187, %cst_118 {dimension_numbers = #tpu.dot_dimension_numbers<[1], [0], [0], [1], [0, 0, 1, 1], [], []>} : vector<8x64xbf16>, vector<64x64xbf16>, vector<8x64xf32> -> vector<8x64xf32>
    %189 = arith.addf %185, %188 : vector<8x64xf32>
    %c3_119 = arith.constant 3 : index
    %c0_120 = arith.constant 0 : index
    %c0_121 = arith.constant 0 : index
    %190 = vector.load %arg4[%c3_119, %c0_120, %c0_121] : memref<6x1x64xf32, #tpu.memory_space<vmem>>, vector<1x1x64xf32>
    %191 = vector.shape_cast %190 : vector<1x1x64xf32> to vector<1x64xf32>
    %192 = vector.broadcast %191 : vector<1x64xf32> to vector<8x64xf32>
    %193 = arith.addf %189, %192 : vector<8x64xf32>
    %cst_122 = arith.constant 0.000000e+00 : f32
    %194 = vector.broadcast %cst_122 : f32 to vector<8x64xf32>
    %195 = arith.maximumf %193, %194 : vector<8x64xf32>
    %c1_i32_123 = arith.constant 1 : i32
    %196 = tpu.dynamic_rotate %195 by %c1_i32_123 dim 0 : vector<8x64xf32>, i32 -> vector<8x64xf32>
    %197 = vector.broadcast %5 : vector<8x1xf32> to vector<8x64xf32>
    %198 = arith.mulf %196, %197 : vector<8x64xf32>
    %199 = arith.truncf %198 : vector<8x64xf32> to vector<8x64xbf16>
    %c7_i32_124 = arith.constant 7 : i32
    %200 = tpu.dynamic_rotate %195 by %c7_i32_124 dim 0 : vector<8x64xf32>, i32 -> vector<8x64xf32>
    %201 = vector.broadcast %10 : vector<8x1xf32> to vector<8x64xf32>
    %202 = arith.mulf %200, %201 : vector<8x64xf32>
    %203 = arith.truncf %202 : vector<8x64xf32> to vector<8x64xbf16>
    %c4 = arith.constant 4 : index
    %c0_125 = arith.constant 0 : index
    %c0_126 = arith.constant 0 : index
    %c0_127 = arith.constant 0 : index
    %204 = vector.load %arg3[%c4, %c0_125, %c0_126, %c0_127] : memref<6x3x64x64xbf16, #tpu.memory_space<vmem>>, vector<1x1x64x64xbf16>
    %205 = vector.shape_cast %204 : vector<1x1x64x64xbf16> to vector<64x64xbf16>
    %cst_128 = arith.constant dense<0.000000e+00> : vector<8x64xf32>
    %206 = tpu.matmul %199, %205, %cst_128 {dimension_numbers = #tpu.dot_dimension_numbers<[1], [0], [0], [1], [0, 0, 1, 1], [], []>} : vector<8x64xbf16>, vector<64x64xbf16>, vector<8x64xf32> -> vector<8x64xf32>
    %207 = arith.truncf %195 : vector<8x64xf32> to vector<8x64xbf16>
    %c4_129 = arith.constant 4 : index
    %c1_130 = arith.constant 1 : index
    %c0_131 = arith.constant 0 : index
    %c0_132 = arith.constant 0 : index
    %208 = vector.load %arg3[%c4_129, %c1_130, %c0_131, %c0_132] : memref<6x3x64x64xbf16, #tpu.memory_space<vmem>>, vector<1x1x64x64xbf16>
    %209 = vector.shape_cast %208 : vector<1x1x64x64xbf16> to vector<64x64xbf16>
    %cst_133 = arith.constant dense<0.000000e+00> : vector<8x64xf32>
    %210 = tpu.matmul %207, %209, %cst_133 {dimension_numbers = #tpu.dot_dimension_numbers<[1], [0], [0], [1], [0, 0, 1, 1], [], []>} : vector<8x64xbf16>, vector<64x64xbf16>, vector<8x64xf32> -> vector<8x64xf32>
    %211 = arith.addf %206, %210 : vector<8x64xf32>
    %c4_134 = arith.constant 4 : index
    %c2_135 = arith.constant 2 : index
    %c0_136 = arith.constant 0 : index
    %c0_137 = arith.constant 0 : index
    %212 = vector.load %arg3[%c4_134, %c2_135, %c0_136, %c0_137] : memref<6x3x64x64xbf16, #tpu.memory_space<vmem>>, vector<1x1x64x64xbf16>
    %213 = vector.shape_cast %212 : vector<1x1x64x64xbf16> to vector<64x64xbf16>
    %cst_138 = arith.constant dense<0.000000e+00> : vector<8x64xf32>
    %214 = tpu.matmul %203, %213, %cst_138 {dimension_numbers = #tpu.dot_dimension_numbers<[1], [0], [0], [1], [0, 0, 1, 1], [], []>} : vector<8x64xbf16>, vector<64x64xbf16>, vector<8x64xf32> -> vector<8x64xf32>
    %215 = arith.addf %211, %214 : vector<8x64xf32>
    %c4_139 = arith.constant 4 : index
    %c0_140 = arith.constant 0 : index
    %c0_141 = arith.constant 0 : index
    %216 = vector.load %arg4[%c4_139, %c0_140, %c0_141] : memref<6x1x64xf32, #tpu.memory_space<vmem>>, vector<1x1x64xf32>
    %217 = vector.shape_cast %216 : vector<1x1x64xf32> to vector<1x64xf32>
    %218 = vector.broadcast %217 : vector<1x64xf32> to vector<8x64xf32>
    %219 = arith.addf %215, %218 : vector<8x64xf32>
    %cst_142 = arith.constant 0.000000e+00 : f32
    %220 = vector.broadcast %cst_142 : f32 to vector<8x64xf32>
    %221 = arith.maximumf %219, %220 : vector<8x64xf32>
    %c1_i32_143 = arith.constant 1 : i32
    %222 = tpu.dynamic_rotate %221 by %c1_i32_143 dim 0 : vector<8x64xf32>, i32 -> vector<8x64xf32>
    %223 = vector.broadcast %5 : vector<8x1xf32> to vector<8x64xf32>
    %224 = arith.mulf %222, %223 : vector<8x64xf32>
    %225 = arith.truncf %224 : vector<8x64xf32> to vector<8x64xbf16>
    %c7_i32_144 = arith.constant 7 : i32
    %226 = tpu.dynamic_rotate %221 by %c7_i32_144 dim 0 : vector<8x64xf32>, i32 -> vector<8x64xf32>
    %227 = vector.broadcast %10 : vector<8x1xf32> to vector<8x64xf32>
    %228 = arith.mulf %226, %227 : vector<8x64xf32>
    %229 = arith.truncf %228 : vector<8x64xf32> to vector<8x64xbf16>
    %c5 = arith.constant 5 : index
    %c0_145 = arith.constant 0 : index
    %c0_146 = arith.constant 0 : index
    %c0_147 = arith.constant 0 : index
    %230 = vector.load %arg3[%c5, %c0_145, %c0_146, %c0_147] : memref<6x3x64x64xbf16, #tpu.memory_space<vmem>>, vector<1x1x64x64xbf16>
    %231 = vector.shape_cast %230 : vector<1x1x64x64xbf16> to vector<64x64xbf16>
    %cst_148 = arith.constant dense<0.000000e+00> : vector<8x64xf32>
    %232 = tpu.matmul %225, %231, %cst_148 {dimension_numbers = #tpu.dot_dimension_numbers<[1], [0], [0], [1], [0, 0, 1, 1], [], []>} : vector<8x64xbf16>, vector<64x64xbf16>, vector<8x64xf32> -> vector<8x64xf32>
    %233 = arith.truncf %221 : vector<8x64xf32> to vector<8x64xbf16>
    %c5_149 = arith.constant 5 : index
    %c1_150 = arith.constant 1 : index
    %c0_151 = arith.constant 0 : index
    %c0_152 = arith.constant 0 : index
    %234 = vector.load %arg3[%c5_149, %c1_150, %c0_151, %c0_152] : memref<6x3x64x64xbf16, #tpu.memory_space<vmem>>, vector<1x1x64x64xbf16>
    %235 = vector.shape_cast %234 : vector<1x1x64x64xbf16> to vector<64x64xbf16>
    %cst_153 = arith.constant dense<0.000000e+00> : vector<8x64xf32>
    %236 = tpu.matmul %233, %235, %cst_153 {dimension_numbers = #tpu.dot_dimension_numbers<[1], [0], [0], [1], [0, 0, 1, 1], [], []>} : vector<8x64xbf16>, vector<64x64xbf16>, vector<8x64xf32> -> vector<8x64xf32>
    %237 = arith.addf %232, %236 : vector<8x64xf32>
    %c5_154 = arith.constant 5 : index
    %c2_155 = arith.constant 2 : index
    %c0_156 = arith.constant 0 : index
    %c0_157 = arith.constant 0 : index
    %238 = vector.load %arg3[%c5_154, %c2_155, %c0_156, %c0_157] : memref<6x3x64x64xbf16, #tpu.memory_space<vmem>>, vector<1x1x64x64xbf16>
    %239 = vector.shape_cast %238 : vector<1x1x64x64xbf16> to vector<64x64xbf16>
    %cst_158 = arith.constant dense<0.000000e+00> : vector<8x64xf32>
    %240 = tpu.matmul %229, %239, %cst_158 {dimension_numbers = #tpu.dot_dimension_numbers<[1], [0], [0], [1], [0, 0, 1, 1], [], []>} : vector<8x64xbf16>, vector<64x64xbf16>, vector<8x64xf32> -> vector<8x64xf32>
    %241 = arith.addf %237, %240 : vector<8x64xf32>
    %c5_159 = arith.constant 5 : index
    %c0_160 = arith.constant 0 : index
    %c0_161 = arith.constant 0 : index
    %242 = vector.load %arg4[%c5_159, %c0_160, %c0_161] : memref<6x1x64xf32, #tpu.memory_space<vmem>>, vector<1x1x64xf32>
    %243 = vector.shape_cast %242 : vector<1x1x64xf32> to vector<1x64xf32>
    %244 = vector.broadcast %243 : vector<1x64xf32> to vector<8x64xf32>
    %245 = arith.addf %241, %244 : vector<8x64xf32>
    %cst_162 = arith.constant 0.000000e+00 : f32
    %246 = vector.broadcast %cst_162 : f32 to vector<8x64xf32>
    %247 = arith.maximumf %245, %246 : vector<8x64xf32>
    %248 = arith.truncf %247 : vector<8x64xf32> to vector<8x64xbf16>
    %c1_163 = arith.constant 1 : index
    %c0_164 = arith.constant 0 : index
    %c0_165 = arith.constant 0 : index
    %249 = vector.load %arg5[%c1_163, %c0_164, %c0_165] : memref<2x64x64xbf16, #tpu.memory_space<vmem>>, vector<1x64x64xbf16>
    %250 = vector.shape_cast %249 : vector<1x64x64xbf16> to vector<64x64xbf16>
    %cst_166 = arith.constant dense<0.000000e+00> : vector<8x64xf32>
    %251 = tpu.matmul %248, %250, %cst_166 {dimension_numbers = #tpu.dot_dimension_numbers<[1], [0], [0], [1], [0, 0, 1, 1], [], []>} : vector<8x64xbf16>, vector<64x64xbf16>, vector<8x64xf32> -> vector<8x64xf32>
    %c1_167 = arith.constant 1 : index
    %c0_168 = arith.constant 0 : index
    %c0_169 = arith.constant 0 : index
    %252 = vector.load %arg9[%c1_167, %c0_168, %c0_169] : memref<2x1x64xf32, #tpu.memory_space<vmem>>, vector<1x1x64xf32>
    %253 = vector.shape_cast %252 : vector<1x1x64xf32> to vector<1x64xf32>
    %254 = vector.broadcast %253 : vector<1x64xf32> to vector<8x64xf32>
    %255 = arith.addf %251, %254 : vector<8x64xf32>
    %c1_170 = arith.constant 1 : index
    %c0_171 = arith.constant 0 : index
    %c0_172 = arith.constant 0 : index
    %256 = vector.load %arg6[%c1_170, %c0_171, %c0_172] : memref<2x64x64xbf16, #tpu.memory_space<vmem>>, vector<1x64x64xbf16>
    %257 = vector.shape_cast %256 : vector<1x64x64xbf16> to vector<64x64xbf16>
    %cst_173 = arith.constant dense<0.000000e+00> : vector<12x64xf32>
    %258 = tpu.matmul %15, %257, %cst_173 {dimension_numbers = #tpu.dot_dimension_numbers<[1], [0], [0], [1], [0, 0, 1, 1], [], []>} : vector<12x64xbf16>, vector<64x64xbf16>, vector<12x64xf32> -> vector<12x64xf32>
    %c1_174 = arith.constant 1 : index
    %c0_175 = arith.constant 0 : index
    %c0_176 = arith.constant 0 : index
    %259 = vector.load %arg10[%c1_174, %c0_175, %c0_176] : memref<2x1x64xf32, #tpu.memory_space<vmem>>, vector<1x1x64xf32>
    %260 = vector.shape_cast %259 : vector<1x1x64xf32> to vector<1x64xf32>
    %261 = vector.broadcast %260 : vector<1x64xf32> to vector<12x64xf32>
    %262 = arith.addf %258, %261 : vector<12x64xf32>
    %c1_177 = arith.constant 1 : index
    %c0_178 = arith.constant 0 : index
    %c0_179 = arith.constant 0 : index
    %263 = vector.load %arg7[%c1_177, %c0_178, %c0_179] : memref<2x64x64xbf16, #tpu.memory_space<vmem>>, vector<1x64x64xbf16>
    %264 = vector.shape_cast %263 : vector<1x64x64xbf16> to vector<64x64xbf16>
    %cst_180 = arith.constant dense<0.000000e+00> : vector<12x64xf32>
    %265 = tpu.matmul %15, %264, %cst_180 {dimension_numbers = #tpu.dot_dimension_numbers<[1], [0], [0], [1], [0, 0, 1, 1], [], []>} : vector<12x64xbf16>, vector<64x64xbf16>, vector<12x64xf32> -> vector<12x64xf32>
    %c1_181 = arith.constant 1 : index
    %c0_182 = arith.constant 0 : index
    %c0_183 = arith.constant 0 : index
    %266 = vector.load %arg11[%c1_181, %c0_182, %c0_183] : memref<2x1x64xf32, #tpu.memory_space<vmem>>, vector<1x1x64xf32>
    %267 = vector.shape_cast %266 : vector<1x1x64xf32> to vector<1x64xf32>
    %268 = vector.broadcast %267 : vector<1x64xf32> to vector<12x64xf32>
    %269 = arith.addf %265, %268 : vector<12x64xf32>
    %270 = vector.extract_strided_slice %255 {offsets = [0, 0], sizes = [8, 16], strides = [1, 1]} : vector<8x64xf32> to vector<8x16xf32>
    %271 = vector.extract_strided_slice %255 {offsets = [0, 16], sizes = [8, 16], strides = [1, 1]} : vector<8x64xf32> to vector<8x16xf32>
    %272 = vector.extract_strided_slice %255 {offsets = [0, 32], sizes = [8, 16], strides = [1, 1]} : vector<8x64xf32> to vector<8x16xf32>
    %273 = vector.extract_strided_slice %255 {offsets = [0, 48], sizes = [8, 16], strides = [1, 1]} : vector<8x64xf32> to vector<8x16xf32>
    %274 = vector.shape_cast %270 : vector<8x16xf32> to vector<1x8x16xf32>
    %275 = vector.shape_cast %271 : vector<8x16xf32> to vector<1x8x16xf32>
    %276 = vector.shape_cast %272 : vector<8x16xf32> to vector<1x8x16xf32>
    %277 = vector.shape_cast %273 : vector<8x16xf32> to vector<1x8x16xf32>
    %278 = tpu.concatenate %274, %275, %276, %277 in 0 : vector<1x8x16xf32>, vector<1x8x16xf32>, vector<1x8x16xf32>, vector<1x8x16xf32> -> vector<4x8x16xf32>
    %279 = arith.truncf %278 : vector<4x8x16xf32> to vector<4x8x16xbf16>
    %280 = vector.extract_strided_slice %262 {offsets = [0, 0], sizes = [12, 16], strides = [1, 1]} : vector<12x64xf32> to vector<12x16xf32>
    %281 = vector.extract_strided_slice %262 {offsets = [0, 16], sizes = [12, 16], strides = [1, 1]} : vector<12x64xf32> to vector<12x16xf32>
    %282 = vector.extract_strided_slice %262 {offsets = [0, 32], sizes = [12, 16], strides = [1, 1]} : vector<12x64xf32> to vector<12x16xf32>
    %283 = vector.extract_strided_slice %262 {offsets = [0, 48], sizes = [12, 16], strides = [1, 1]} : vector<12x64xf32> to vector<12x16xf32>
    %284 = vector.shape_cast %280 : vector<12x16xf32> to vector<1x12x16xf32>
    %285 = vector.shape_cast %281 : vector<12x16xf32> to vector<1x12x16xf32>
    %286 = vector.shape_cast %282 : vector<12x16xf32> to vector<1x12x16xf32>
    %287 = vector.shape_cast %283 : vector<12x16xf32> to vector<1x12x16xf32>
    %288 = tpu.concatenate %284, %285, %286, %287 in 0 : vector<1x12x16xf32>, vector<1x12x16xf32>, vector<1x12x16xf32>, vector<1x12x16xf32> -> vector<4x12x16xf32>
    %289 = arith.truncf %288 : vector<4x12x16xf32> to vector<4x12x16xbf16>
    %290 = vector.extract_strided_slice %269 {offsets = [0, 0], sizes = [12, 16], strides = [1, 1]} : vector<12x64xf32> to vector<12x16xf32>
    %291 = vector.extract_strided_slice %269 {offsets = [0, 16], sizes = [12, 16], strides = [1, 1]} : vector<12x64xf32> to vector<12x16xf32>
    %292 = vector.extract_strided_slice %269 {offsets = [0, 32], sizes = [12, 16], strides = [1, 1]} : vector<12x64xf32> to vector<12x16xf32>
    %293 = vector.extract_strided_slice %269 {offsets = [0, 48], sizes = [12, 16], strides = [1, 1]} : vector<12x64xf32> to vector<12x16xf32>
    %294 = vector.shape_cast %290 : vector<12x16xf32> to vector<1x12x16xf32>
    %295 = vector.shape_cast %291 : vector<12x16xf32> to vector<1x12x16xf32>
    %296 = vector.shape_cast %292 : vector<12x16xf32> to vector<1x12x16xf32>
    %297 = vector.shape_cast %293 : vector<12x16xf32> to vector<1x12x16xf32>
    %298 = tpu.concatenate %294, %295, %296, %297 in 0 : vector<1x12x16xf32>, vector<1x12x16xf32>, vector<1x12x16xf32>, vector<1x12x16xf32> -> vector<4x12x16xf32>
    %299 = arith.truncf %298 : vector<4x12x16xf32> to vector<4x12x16xbf16>
    "tpu.trace_start"() <{level = 10 : i32, message = "ntd,nsd->nts"}> : () -> ()
    %cst_184 = arith.constant dense<0.000000e+00> : vector<4x8x12xf32>
    %300 = tpu.matmul %279, %289, %cst_184 {dimension_numbers = #tpu.dot_dimension_numbers<[2], [2], [1], [1], [0, 0, 0, 1, 1, 1], [0], [0]>} : vector<4x8x16xbf16>, vector<4x12x16xbf16>, vector<4x8x12xf32> -> vector<4x8x12xf32>
    "tpu.trace_stop"() : () -> ()
    %cst_185 = arith.constant 2.500000e-01 : f32
    %301 = vector.broadcast %cst_185 : f32 to vector<4x8x12xf32>
    %302 = arith.mulf %300, %301 : vector<4x8x12xf32>
    %cst_186 = arith.constant dense<0xFF800000> : vector<4x8xf32>
    %303 = vector.multi_reduction <maximumf>, %302, %cst_186 [2] : vector<4x8x12xf32> to vector<4x8xf32>
    %304 = vector.shape_cast %303 : vector<4x8xf32> to vector<4x8x1xf32>
    %305 = vector.broadcast %304 : vector<4x8x1xf32> to vector<4x8x12xf32>
    %306 = arith.subf %302, %305 : vector<4x8x12xf32>
    %307 = math.exp %306 : vector<4x8x12xf32>
    %cst_187 = arith.constant dense<0.000000e+00> : vector<4x8xf32>
    %308 = vector.multi_reduction <add>, %307, %cst_187 [2] : vector<4x8x12xf32> to vector<4x8xf32>
    %309 = vector.shape_cast %308 : vector<4x8xf32> to vector<4x8x1xf32>
    %310 = vector.broadcast %309 : vector<4x8x1xf32> to vector<4x8x12xf32>
    %311 = arith.divf %307, %310 : vector<4x8x12xf32>
    %312 = arith.truncf %311 : vector<4x8x12xf32> to vector<4x8x12xbf16>
    "tpu.trace_start"() <{level = 10 : i32, message = "nts,nsd->ntd"}> : () -> ()
    %cst_188 = arith.constant dense<0.000000e+00> : vector<4x8x16xf32>
    %313 = tpu.matmul %312, %299, %cst_188 {dimension_numbers = #tpu.dot_dimension_numbers<[2], [1], [1], [2], [0, 0, 0, 1, 1, 2], [0], [0]>} : vector<4x8x12xbf16>, vector<4x12x16xbf16>, vector<4x8x16xf32> -> vector<4x8x16xf32>
    "tpu.trace_stop"() : () -> ()
    %314 = arith.truncf %313 : vector<4x8x16xf32> to vector<4x8x16xbf16>
    %c1_189 = arith.constant 1 : index
    %c0_190 = arith.constant 0 : index
    %c0_191 = arith.constant 0 : index
    %c0_192 = arith.constant 0 : index
    %315 = vector.load %arg8[%c1_189, %c0_190, %c0_191, %c0_192] : memref<2x4x16x64xbf16, #tpu.memory_space<vmem>>, vector<1x4x16x64xbf16>
    %316 = vector.shape_cast %315 : vector<1x4x16x64xbf16> to vector<4x16x64xbf16>
    "tpu.trace_start"() <{level = 10 : i32, message = "ntd,ndh->nth"}> : () -> ()
    %cst_193 = arith.constant dense<0.000000e+00> : vector<4x8x64xf32>
    %317 = tpu.matmul %314, %316, %cst_193 {dimension_numbers = #tpu.dot_dimension_numbers<[2], [1], [1], [2], [0, 0, 0, 1, 1, 2], [0], [0]>} : vector<4x8x16xbf16>, vector<4x16x64xbf16>, vector<4x8x64xf32> -> vector<4x8x64xf32>
    "tpu.trace_stop"() : () -> ()
    %cst_194 = arith.constant dense<0.000000e+00> : vector<8x64xf32>
    %318 = vector.multi_reduction <add>, %317, %cst_194 [0] : vector<4x8x64xf32> to vector<8x64xf32>
    %319 = arith.addf %247, %318 : vector<8x64xf32>
    %c1_195 = arith.constant 1 : index
    %c0_196 = arith.constant 0 : index
    %c0_197 = arith.constant 0 : index
    %320 = vector.load %arg12[%c1_195, %c0_196, %c0_197] : memref<2x1x64xf32, #tpu.memory_space<vmem>>, vector<1x1x64xf32>
    %321 = vector.shape_cast %320 : vector<1x1x64xf32> to vector<1x64xf32>
    %322 = vector.broadcast %321 : vector<1x64xf32> to vector<8x64xf32>
    %323 = arith.addf %319, %322 : vector<8x64xf32>
    %c0_198 = arith.constant 0 : index
    %c0_199 = arith.constant 0 : index
    %324 = vector.load %arg13[%c0_198, %c0_199] : memref<1x64xbf16, #tpu.memory_space<vmem>>, vector<1x64xbf16>
    %325 = arith.truncf %323 : vector<8x64xf32> to vector<8x64xbf16>
    %cst_200 = arith.constant dense<0.000000e+00> : vector<1x8xf32>
    %326 = tpu.matmul %324, %325, %cst_200 {dimension_numbers = #tpu.dot_dimension_numbers<[1], [1], [0], [0], [0, 0, 1, 0], [], []>} : vector<1x64xbf16>, vector<8x64xbf16>, vector<1x8xf32> -> vector<1x8xf32>
    %c0_201 = arith.constant 0 : index
    %c0_202 = arith.constant 0 : index
    %327 = vector.load %arg14[%c0_201, %c0_202] : memref<1x1xf32, #tpu.memory_space<vmem>>, vector<1x1xf32>
    %328 = vector.broadcast %327 : vector<1x1xf32> to vector<1x8xf32>
    %329 = arith.addf %326, %328 : vector<1x8xf32>
    %cst_203 = arith.constant 0.000000e+00 : f32
    %330 = vector.broadcast %cst_203 : f32 to vector<1x8xf32>
    %331 = arith.maximumf %329, %330 : vector<1x8xf32>
    %c0_204 = arith.constant 0 : index
    %c0_205 = arith.constant 0 : index
    %c0_206 = arith.constant 0 : index
    %332 = vector.load %arg15[%c0_204, %c0_205, %c0_206] : memref<1x1x8xf32, #tpu.memory_space<vmem>>, vector<1x1x8xf32>
    %333 = vector.shape_cast %332 : vector<1x1x8xf32> to vector<1x8xf32>
    %334 = vector.shape_cast %331 : vector<1x8xf32> to vector<1x1x8xf32>
    tpu.vector_store %arg15[%c0_204, %c0_205, %c0_206], %334 {strides = array<i32>} : memref<1x1x8xf32, #tpu.memory_space<vmem>>, vector<1x1x8xf32>,
    return
  }
  func.func @transform_0(%arg0: i32) -> (i32, i32, i32) {
    %c0_i32 = arith.constant 0 : i32
    %c0_i32_0 = arith.constant 0 : i32
    %c0_i32_1 = arith.constant 0 : i32
    return %arg0, %c0_i32, %c0_i32_0 : i32, i32, i32
  }
  func.func @transform_1(%arg0: i32) -> (i32, i32, i32) {
    %c0_i32 = arith.constant 0 : i32
    %c0_i32_0 = arith.constant 0 : i32
    %c0_i32_1 = arith.constant 0 : i32
    return %arg0, %c0_i32, %c0_i32_0 : i32, i32, i32
  }
  func.func @transform_2(%arg0: i32) -> (i32, i32, i32, i32) {
    %c0_i32 = arith.constant 0 : i32
    %c0_i32_0 = arith.constant 0 : i32
    %c0_i32_1 = arith.constant 0 : i32
    %c0_i32_2 = arith.constant 0 : i32
    %c0_i32_3 = arith.constant 0 : i32
    return %c0_i32, %c0_i32_0, %c0_i32_1, %c0_i32_2 : i32, i32, i32, i32
  }
  func.func @transform_3(%arg0: i32) -> (i32, i32, i32) {
    %c0_i32 = arith.constant 0 : i32
    %c0_i32_0 = arith.constant 0 : i32
    %c0_i32_1 = arith.constant 0 : i32
    %c0_i32_2 = arith.constant 0 : i32
    return %c0_i32, %c0_i32_0, %c0_i32_1 : i32, i32, i32
  }
  func.func @transform_4(%arg0: i32) -> (i32, i32, i32) {
    %c0_i32 = arith.constant 0 : i32
    %c0_i32_0 = arith.constant 0 : i32
    %c0_i32_1 = arith.constant 0 : i32
    %c0_i32_2 = arith.constant 0 : i32
    return %c0_i32, %c0_i32_0, %c0_i32_1 : i32, i32, i32
  }
  func.func @transform_5(%arg0: i32) -> (i32, i32, i32) {
    %c0_i32 = arith.constant 0 : i32
    %c0_i32_0 = arith.constant 0 : i32
    %c0_i32_1 = arith.constant 0 : i32
    %c0_i32_2 = arith.constant 0 : i32
    return %c0_i32, %c0_i32_0, %c0_i32_1 : i32, i32, i32
  }
  func.func @transform_6(%arg0: i32) -> (i32, i32, i32) {
    %c0_i32 = arith.constant 0 : i32
    %c0_i32_0 = arith.constant 0 : i32
    %c0_i32_1 = arith.constant 0 : i32
    %c0_i32_2 = arith.constant 0 : i32
    return %c0_i32, %c0_i32_0, %c0_i32_1 : i32, i32, i32
  }
  func.func @transform_7(%arg0: i32) -> (i32, i32, i32, i32) {
    %c0_i32 = arith.constant 0 : i32
    %c0_i32_0 = arith.constant 0 : i32
    %c0_i32_1 = arith.constant 0 : i32
    %c0_i32_2 = arith.constant 0 : i32
    %c0_i32_3 = arith.constant 0 : i32
    return %c0_i32, %c0_i32_0, %c0_i32_1, %c0_i32_2 : i32, i32, i32, i32
  }
  func.func @transform_8(%arg0: i32) -> (i32, i32, i32) {
    %c0_i32 = arith.constant 0 : i32
    %c0_i32_0 = arith.constant 0 : i32
    %c0_i32_1 = arith.constant 0 : i32
    %c0_i32_2 = arith.constant 0 : i32
    return %c0_i32, %c0_i32_0, %c0_i32_1 : i32, i32, i32
  }
  func.func @transform_9(%arg0: i32) -> (i32, i32, i32) {
    %c0_i32 = arith.constant 0 : i32
    %c0_i32_0 = arith.constant 0 : i32
    %c0_i32_1 = arith.constant 0 : i32
    %c0_i32_2 = arith.constant 0 : i32
    return %c0_i32, %c0_i32_0, %c0_i32_1 : i32, i32, i32
  }
  func.func @transform_10(%arg0: i32) -> (i32, i32, i32) {
    %c0_i32 = arith.constant 0 : i32
    %c0_i32_0 = arith.constant 0 : i32
    %c0_i32_1 = arith.constant 0 : i32
    %c0_i32_2 = arith.constant 0 : i32
    return %c0_i32, %c0_i32_0, %c0_i32_1 : i32, i32, i32
  }
  func.func @transform_11(%arg0: i32) -> (i32, i32, i32) {
    %c0_i32 = arith.constant 0 : i32
    %c0_i32_0 = arith.constant 0 : i32
    %c0_i32_1 = arith.constant 0 : i32
    %c0_i32_2 = arith.constant 0 : i32
    return %c0_i32, %c0_i32_0, %c0_i32_1 : i32, i32, i32
  }
  func.func @transform_12(%arg0: i32) -> (i32, i32) {
    %c0_i32 = arith.constant 0 : i32
    %c0_i32_0 = arith.constant 0 : i32
    %c0_i32_1 = arith.constant 0 : i32
    return %c0_i32, %c0_i32_0 : i32, i32
  }
  func.func @transform_13(%arg0: i32) -> (i32, i32) {
    %c0_i32 = arith.constant 0 : i32
    %c0_i32_0 = arith.constant 0 : i32
    %c0_i32_1 = arith.constant 0 : i32
    return %c0_i32, %c0_i32_0 : i32, i32
  }
  func.func @transform_14(%arg0: i32) -> (i32, i32, i32) {
    %c0_i32 = arith.constant 0 : i32
    %c0_i32_0 = arith.constant 0 : i32
    %c0_i32_1 = arith.constant 0 : i32
    return %arg0, %c0_i32, %c0_i32_0 : i32, i32, i32
  }
}

</mosaic_0001>

<llo_original>
// kernel: duration_predictor_forward.1
$region0: #{duration_predictor_forward.1}
  #allocation0 [shape = 'u32[]', space=smem, size = 0x4, offset = 0x4, fixed_abs, tag = 'smem constant byte address 0x4 - core index']
  #allocation1 [shape = 'u32[144,128]{1,0:T(1,128)}', space=vmem, size = 0x12000, scoped, tag = 'internal scratch']
  #allocation2 [shape = 'f32[1,1]{1,0:T(1,128)S(1)}', space=vmem, size = 0x200, scoped, tag = 'scoped memory for duration_predictor_forward.1']
  %s0 = inlined_call_operand.vmem [shape: f32[2,8,64], index: 0, kind: input, shape index: {}]
  %s1 = inlined_call_operand.vmem [shape: f32[2,12,64], index: 1, kind: input, shape index: {}]
  %s2 = inlined_call_operand.vmem [shape: bf16[6,3,64,64], index: 2, kind: input, shape index: {}]
  %s3 = inlined_call_operand.vmem [shape: f32[6,1,64], index: 3, kind: input, shape index: {}]
  %s4 = inlined_call_operand.vmem [shape: bf16[2,64,64], index: 4, kind: input, shape index: {}]
  %s5 = inlined_call_operand.vmem [shape: bf16[2,64,64], index: 5, kind: input, shape index: {}]
  %s6 = inlined_call_operand.vmem [shape: bf16[2,64,64], index: 6, kind: input, shape index: {}]
  %s7 = inlined_call_operand.vmem [shape: bf16[2,4,16,64], index: 7, kind: input, shape index: {}]
  %s8 = inlined_call_operand.vmem [shape: f32[2,1,64], index: 8, kind: input, shape index: {}]
  %s9 = inlined_call_operand.vmem [shape: f32[2,1,64], index: 9, kind: input, shape index: {}]
  %s10 = inlined_call_operand.vmem [shape: f32[2,1,64], index: 10, kind: input, shape index: {}]
  %s11 = inlined_call_operand.vmem [shape: f32[2,1,64], index: 11, kind: input, shape index: {}]
  %s12 = inlined_call_operand.vmem [shape: bf16[1,64], index: 12, kind: input, shape index: {}]
  %s13 = inlined_call_operand.<no memory space> [shape: f32[1,1], index: 13, kind: input, shape index: {}]
  %s14 = inlined_call_operand.hbm [shape: f32[2,1,8], index: 14, kind: output, shape index: {}]
  %s15 = sld [smem:[#allocation0]]
  $region89: #{duration_predictor_forward.1} parent=0
    _
  %s17 = ssub.s32 1, %s15
  %s18 = scalar_select 0, %s17, %s15
  %v19 = vstv %s13
  %20 = vst [vmem:[#allocation2] sm:$0x1] %v19
  $region1: #{duration_predictor_forward.1} parent=0
    #allocation3 [shape = 'u8[1024]{0}', space=vmem, size = 0x400, scoped, tag = 'output window, operand 0']
    #allocation4 [shape = 's32[2]{0}', space=sflag, size = 0x8, scoped, tag = 'scoped memory for duration_predictor_forward.1']
    %21 = vsyncpa [#allocation4], 0
    %s22 = scalar_lea.sflag [#allocation4], 1
    %23 = vsyncpa %s22, 0
    loop: start=0, step=1, limit=4
    $region2: #{duration_predictor_forward.1} parent=1 // loop_pre_header
      _
    $region3: #{duration_predictor_forward.1} parent=1 // loop_header
      %s25 = sphi 0, %s29
      %p26 = scmp.ge.s32.totalorder %s25, 4
      %s35 = sphi 0, %s37
      %s38 = sphi 0, %s35
      %s39 = sphi 0, %s38
      %s55 = sphi 0, %s39
      %s61 = sphi 0, %s63
      %s64 = sphi 0, %s61
      %s65 = sphi 0, %s64
      %s81 = sphi 0, %s65
      %s85 = sphi 0, %s85
      %s87 = sphi 0, %s85
      %s88 = sphi 0, %s87
      %s102 = sphi 0, %s88
      %s106 = sphi 0, %s106
      %s108 = sphi 0, %s106
      %s109 = sphi 0, %s108
      %s123 = sphi 0, %s109
      %s127 = sphi 0, %s127
      %s129 = sphi 0, %s127
      %s130 = sphi 0, %s129
      %s144 = sphi 0, %s130
      %s148 = sphi 0, %s148
      %s150 = sphi 0, %s148
      %s151 = sphi 0, %s150
      %s165 = sphi 0, %s151
      %s169 = sphi 0, %s169
      %s171 = sphi 0, %s169
      %s172 = sphi 0, %s171
      %s186 = sphi 0, %s172
      %s190 = sphi 0, %s190
      %s192 = sphi 0, %s190
      %s193 = sphi 0, %s192
      %s207 = sphi 0, %s193
      %s211 = sphi 0, %s211
      %s213 = sphi 0, %s211
      %s214 = sphi 0, %s213
      %s228 = sphi 0, %s214
      %s232 = sphi 0, %s232
      %s234 = sphi 0, %s232
      %s235 = sphi 0, %s234
      %s249 = sphi 0, %s235
      %s253 = sphi 0, %s253
      %s255 = sphi 0, %s253
      %s256 = sphi 0, %s255
      %s270 = sphi 0, %s256
      %s274 = sphi 0, %s274
      %s276 = sphi 0, %s274
      %s277 = sphi 0, %s276
      %s291 = sphi 0, %s277
      %s295 = sphi 0, %s295
      %s297 = sphi 0, %s295
      %s298 = sphi 0, %s297
      %s312 = sphi 0, %s298
      %s316 = sphi 0, %s316
      %s318 = sphi 0, %s316
      %s319 = sphi 0, %s318
      %s333 = sphi 0, %s319
      %s339 = sphi 0, %s341
      %s342 = sphi 0, %s339
      %s343 = sphi 0, %s342
      %s359 = sphi 0, %s343
    $region4: #{duration_predictor_forward.1} parent=1 // loop_header_branch
      %28 = sbr.rel (%p26) target = $region8
    $region5: #{duration_predictor_forward.1} parent=1 // loop_body
      %s30 = ssub.s32 %s25, 1
      %s31 = ssub.s32 %s25, 2
      %s32 = sadd.s32 %s25, 1
      %s33 = ssub.s32 %s25, %s32
      %p34 = scmp.eq.s32.totalorder %s33, 0
      %s36 = sadd.s32 %s35, 1
      %s37 = scalar_select %p34, %s35, %s36
      %p40 = pneg %p34
      %p41 = scmp.eq.s32.totalorder %s25, 1
      %p42 = por %p40, %p41
      %p43 = scmp.ne.s32.totalorder %s35, %s38
      %p44 = scmp.eq.s32.totalorder %s25, 0
      %p45 = por %p43, %p44
      %p46 = scmp.ne.s32.totalorder %s35, %s38
      %p47 = scmp.eq.s32.totalorder %s30, 1
      %p48 = por %p46, %p47
      %p49 = scmp.ne.s32.totalorder %s38, %s39
      %p50 = scmp.eq.s32.totalorder %s30, 0
      %p51 = por %p49, %p50
      %p52 = scmp.ne.s32.totalorder %s38, %s39
      %p53 = scmp.eq.s32.totalorder %s31, 1
      %p54 = por %p52, %p53
      %p56 = scmp.ne.s32.totalorder %s39, %s55
      %p57 = scmp.eq.s32.totalorder %s31, 0
      %p58 = por %p56, %p57
      %s59 = ssub.s32 %s25, %s32
      %p60 = scmp.eq.s32.totalorder %s59, 0
      %s62 = sadd.s32 %s61, 1
      %s63 = scalar_select %p60, %s61, %s62
      %p66 = pneg %p60
      %p67 = scmp.eq.s32.totalorder %s25, 1
      %p68 = por %p66, %p67
      %p69 = scmp.ne.s32.totalorder %s61, %s64
      %p70 = scmp.eq.s32.totalorder %s25, 0
      %p71 = por %p69, %p70
      %p72 = scmp.ne.s32.totalorder %s61, %s64
      %p73 = scmp.eq.s32.totalorder %s30, 1
      %p74 = por %p72, %p73
      %p75 = scmp.ne.s32.totalorder %s64, %s65
      %p76 = scmp.eq.s32.totalorder %s30, 0
      %p77 = por %p75, %p76
      %p78 = scmp.ne.s32.totalorder %s64, %s65
      %p79 = scmp.eq.s32.totalorder %s31, 1
      %p80 = por %p78, %p79
      %p82 = scmp.ne.s32.totalorder %s65, %s81
      %p83 = scmp.eq.s32.totalorder %s31, 0
      %p84 = por %p82, %p83
      %s86 = sadd.s32 %s85, 1
      %p89 = scmp.eq.s32.totalorder %s25, 1
      %p90 = scmp.ne.s32.totalorder %s85, %s87
      %p91 = scmp.eq.s32.totalorder %s25, 0
      %p92 = por %p90, %p91
      %p93 = scmp.ne.s32.totalorder %s85, %s87
      %p94 = scmp.eq.s32.totalorder %s30, 1
      %p95 = por %p93, %p94
      %p96 = scmp.ne.s32.totalorder %s87, %s88
      %p97 = scmp.eq.s32.totalorder %s30, 0
      %p98 = por %p96, %p97
      %p99 = scmp.ne.s32.totalorder %s87, %s88
      %p100 = scmp.eq.s32.totalorder %s31, 1
      %p101 = por %p99, %p100
      %p103 = scmp.ne.s32.totalorder %s88, %s102
      %p104 = scmp.eq.s32.totalorder %s31, 0
      %p105 = por %p103, %p104
      %s107 = sadd.s32 %s106, 1
      %p110 = scmp.eq.s32.totalorder %s25, 1
      %p111 = scmp.ne.s32.totalorder %s106, %s108
      %p112 = scmp.eq.s32.totalorder %s25, 0
      %p113 = por %p111, %p112
      %p114 = scmp.ne.s32.totalorder %s106, %s108
      %p115 = scmp.eq.s32.totalorder %s30, 1
      %p116 = por %p114, %p115
      %p117 = scmp.ne.s32.totalorder %s108, %s109
      %p118 = scmp.eq.s32.totalorder %s30, 0
      %p119 = por %p117, %p118
      %p120 = scmp.ne.s32.totalorder %s108, %s109
      %p121 = scmp.eq.s32.totalorder %s31, 1
      %p122 = por %p120, %p121
      %p124 = scmp.ne.s32.totalorder %s109, %s123
      %p125 = scmp.eq.s32.totalorder %s31, 0
      %p126 = por %p124, %p125
      %s128 = sadd.s32 %s127, 1
      %p131 = scmp.eq.s32.totalorder %s25, 1
      %p132 = scmp.ne.s32.totalorder %s127, %s129
      %p133 = scmp.eq.s32.totalorder %s25, 0
      %p134 = por %p132, %p133
      %p135 = scmp.ne.s32.totalorder %s127, %s129
      %p136 = scmp.eq.s32.totalorder %s30, 1
      %p137 = por %p135, %p136
      %p138 = scmp.ne.s32.totalorder %s129, %s130
      %p139 = scmp.eq.s32.totalorder %s30, 0
      %p140 = por %p138, %p139
      %p141 = scmp.ne.s32.totalorder %s129, %s130
      %p142 = scmp.eq.s32.totalorder %s31, 1
      %p143 = por %p141, %p142
      %p145 = scmp.ne.s32.totalorder %s130, %s144
      %p146 = scmp.eq.s32.totalorder %s31, 0
      %p147 = por %p145, %p146
      %s149 = sadd.s32 %s148, 1
      %p152 = scmp.eq.s32.totalorder %s25, 1
      %p153 = scmp.ne.s32.totalorder %s148, %s150
      %p154 = scmp.eq.s32.totalorder %s25, 0
      %p155 = por %p153, %p154
      %p156 = scmp.ne.s32.totalorder %s148, %s150
      %p157 = scmp.eq.s32.totalorder %s30, 1
      %p158 = por %p156, %p157
      %p159 = scmp.ne.s32.totalorder %s150, %s151
      %p160 = scmp.eq.s32.totalorder %s30, 0
      %p161 = por %p159, %p160
      %p162 = scmp.ne.s32.totalorder %s150, %s151
      %p163 = scmp.eq.s32.totalorder %s31, 1
      %p164 = por %p162, %p163
      %p166 = scmp.ne.s32.totalorder %s151, %s165
      %p167 = scmp.eq.s32.totalorder %s31, 0
      %p168 = por %p166, %p167
      %s170 = sadd.s32 %s169, 1
      %p173 = scmp.eq.s32.totalorder %s25, 1
      %p174 = scmp.ne.s32.totalorder %s169, %s171
      %p175 = scmp.eq.s32.totalorder %s25, 0
      %p176 = por %p174, %p175
      %p177 = scmp.ne.s32.totalorder %s169, %s171
      %p178 = scmp.eq.s32.totalorder %s30, 1
      %p179 = por %p177, %p178
      %p180 = scmp.ne.s32.totalorder %s171, %s172
      %p181 = scmp.eq.s32.totalorder %s30, 0
      %p182 = por %p180, %p181
      %p183 = scmp.ne.s32.totalorder %s171, %s172
      %p184 = scmp.eq.s32.totalorder %s31, 1
      %p185 = por %p183, %p184
      %p187 = scmp.ne.s32.totalorder %s172, %s186
      %p188 = scmp.eq.s32.totalorder %s31, 0
      %p189 = por %p187, %p188
      %s191 = sadd.s32 %s190, 1
      %p194 = scmp.eq.s32.totalorder %s25, 1
      %p195 = scmp.ne.s32.totalorder %s190, %s192
      %p196 = scmp.eq.s32.totalorder %s25, 0
      %p197 = por %p195, %p196
      %p198 = scmp.ne.s32.totalorder %s190, %s192
      %p199 = scmp.eq.s32.totalorder %s30, 1
      %p200 = por %p198, %p199
      %p201 = scmp.ne.s32.totalorder %s192, %s193
      %p202 = scmp.eq.s32.totalorder %s30, 0
      %p203 = por %p201, %p202
      %p204 = scmp.ne.s32.totalorder %s192, %s193
      %p205 = scmp.eq.s32.totalorder %s31, 1
      %p206 = por %p204, %p205
      %p208 = scmp.ne.s32.totalorder %s193, %s207
      %p209 = scmp.eq.s32.totalorder %s31, 0
      %p210 = por %p208, %p209
      %s212 = sadd.s32 %s211, 1
      %p215 = scmp.eq.s32.totalorder %s25, 1
      %p216 = scmp.ne.s32.totalorder %s211, %s213
      %p217 = scmp.eq.s32.totalorder %s25, 0
      %p218 = por %p216, %p217
      %p219 = scmp.ne.s32.totalorder %s211, %s213
      %p220 = scmp.eq.s32.totalorder %s30, 1
      %p221 = por %p219, %p220
      %p222 = scmp.ne.s32.totalorder %s213, %s214
      %p223 = scmp.eq.s32.totalorder %s30, 0
      %p224 = por %p222, %p223
      %p225 = scmp.ne.s32.totalorder %s213, %s214
      %p226 = scmp.eq.s32.totalorder %s31, 1
      %p227 = por %p225, %p226
      %p229 = scmp.ne.s32.totalorder %s214, %s228
      %p230 = scmp.eq.s32.totalorder %s31, 0
      %p231 = por %p229, %p230
      %s233 = sadd.s32 %s232, 1
      %p236 = scmp.eq.s32.totalorder %s25, 1
      %p237 = scmp.ne.s32.totalorder %s232, %s234
      %p238 = scmp.eq.s32.totalorder %s25, 0
      %p239 = por %p237, %p238
      %p240 = scmp.ne.s32.totalorder %s232, %s234
      %p241 = scmp.eq.s32.totalorder %s30, 1
      %p242 = por %p240, %p241
      %p243 = scmp.ne.s32.totalorder %s234, %s235
      %p244 = scmp.eq.s32.totalorder %s30, 0
      %p245 = por %p243, %p244
      %p246 = scmp.ne.s32.totalorder %s234, %s235
      %p247 = scmp.eq.s32.totalorder %s31, 1
      %p248 = por %p246, %p247
      %p250 = scmp.ne.s32.totalorder %s235, %s249
      %p251 = scmp.eq.s32.totalorder %s31, 0
      %p252 = por %p250, %p251
      %s254 = sadd.s32 %s253, 1
      %p257 = scmp.eq.s32.totalorder %s25, 1
      %p258 = scmp.ne.s32.totalorder %s253, %s255
      %p259 = scmp.eq.s32.totalorder %s25, 0
      %p260 = por %p258, %p259
      %p261 = scmp.ne.s32.totalorder %s253, %s255
      %p262 = scmp.eq.s32.totalorder %s30, 1
      %p263 = por %p261, %p262
      %p264 = scmp.ne.s32.totalorder %s255, %s256
      %p265 = scmp.eq.s32.totalorder %s30, 0
      %p266 = por %p264, %p265
      %p267 = scmp.ne.s32.totalorder %s255, %s256
      %p268 = scmp.eq.s32.totalorder %s31, 1
      %p269 = por %p267, %p268
      %p271 = scmp.ne.s32.totalorder %s256, %s270
      %p272 = scmp.eq.s32.totalorder %s31, 0
      %p273 = por %p271, %p272
      %s275 = sadd.s32 %s274, 1
      %p278 = scmp.eq.s32.totalorder %s25, 1
      %p279 = scmp.ne.s32.totalorder %s274, %s276
      %p280 = scmp.eq.s32.totalorder %s25, 0
      %p281 = por %p279, %p280
      %p282 = scmp.ne.s32.totalorder %s274, %s276
      %p283 = scmp.eq.s32.totalorder %s30, 1
      %p284 = por %p282, %p283
      %p285 = scmp.ne.s32.totalorder %s276, %s277
      %p286 = scmp.eq.s32.totalorder %s30, 0
      %p287 = por %p285, %p286
      %p288 = scmp.ne.s32.totalorder %s276, %s277
      %p289 = scmp.eq.s32.totalorder %s31, 1
      %p290 = por %p288, %p289
      %p292 = scmp.ne.s32.totalorder %s277, %s291
      %p293 = scmp.eq.s32.totalorder %s31, 0
      %p294 = por %p292, %p293
      %s296 = sadd.s32 %s295, 1
      %p299 = scmp.eq.s32.totalorder %s25, 1
      %p300 = scmp.ne.s32.totalorder %s295, %s297
      %p301 = scmp.eq.s32.totalorder %s25, 0
      %p302 = por %p300, %p301
      %p303 = scmp.ne.s32.totalorder %s295, %s297
      %p304 = scmp.eq.s32.totalorder %s30, 1
      %p305 = por %p303, %p304
      %p306 = scmp.ne.s32.totalorder %s297, %s298
      %p307 = scmp.eq.s32.totalorder %s30, 0
      %p308 = por %p306, %p307
      %p309 = scmp.ne.s32.totalorder %s297, %s298
      %p310 = scmp.eq.s32.totalorder %s31, 1
      %p311 = por %p309, %p310
      %p313 = scmp.ne.s32.totalorder %s298, %s312
      %p314 = scmp.eq.s32.totalorder %s31, 0
      %p315 = por %p313, %p314
      %s317 = sadd.s32 %s316, 1
      %p320 = scmp.eq.s32.totalorder %s25, 1
      %p321 = scmp.ne.s32.totalorder %s316, %s318
      %p322 = scmp.eq.s32.totalorder %s25, 0
      %p323 = por %p321, %p322
      %p324 = scmp.ne.s32.totalorder %s316, %s318
      %p325 = scmp.eq.s32.totalorder %s30, 1
      %p326 = por %p324, %p325
      %p327 = scmp.ne.s32.totalorder %s318, %s319
      %p328 = scmp.eq.s32.totalorder %s30, 0
      %p329 = por %p327, %p328
      %p330 = scmp.ne.s32.totalorder %s318, %s319
      %p331 = scmp.eq.s32.totalorder %s31, 1
      %p332 = por %p330, %p331
      %p334 = scmp.ne.s32.totalorder %s319, %s333
      %p335 = scmp.eq.s32.totalorder %s31, 0
      %p336 = por %p334, %p335
      %s337 = ssub.s32 %s25, %s32
      %p338 = scmp.eq.s32.totalorder %s337, 0
      %s340 = sadd.s32 %s339, 1
      %s341 = scalar_select %p338, %s339, %s340
      %p344 = pneg %p338
      %p345 = scmp.eq.s32.totalorder %s25, 1
      %p346 = por %p344, %p345
      %p347 = scmp.ne.s32.totalorder %s339, %s342
      %p348 = scmp.eq.s32.totalorder %s25, 0
      %p349 = por %p347, %p348
      %p350 = scmp.ne.s32.totalorder %s339, %s342
      %p351 = scmp.eq.s32.totalorder %s30, 1
      %p352 = por %p350, %p351
      %p353 = scmp.ne.s32.totalorder %s342, %s343
      %p354 = scmp.eq.s32.totalorder %s30, 0
      %p355 = por %p353, %p354
      %p356 = scmp.ne.s32.totalorder %s342, %s343
      %p357 = scmp.eq.s32.totalorder %s31, 1
      %p358 = por %p356, %p357
      %p360 = scmp.ne.s32.totalorder %s343, %s359
      %p361 = scmp.eq.s32.totalorder %s31, 0
      %p362 = por %p360, %p361
      %p363 = scmp.le.s32.totalorder 1, %s25
      %p364 = scmp.lt.s32.totalorder %s25, 3
      %p365 = pnand %p363, %p364
      %p366 = pneg %p365
      // Predicated region
      $region9: #{duration_predictor_forward.1} parent=5 // pred_check
        _
      $region10: #{duration_predictor_forward.1} parent=5 // pred_check_branch
        %368 = sbr.rel (%p365) target = $region12
      $region11: #{duration_predictor_forward.1} parent=5 // pred_region
        %s369 = ssub.s32 %s25, 1
        // Predicated region
        $region13: #{duration_predictor_forward.1} parent=11 // pred_check
          %p370 = pneg %p98
        $region14: #{duration_predictor_forward.1} parent=11 // pred_check_branch
          %372 = sbr.rel (%p370) target = $region16
        $region15: #{duration_predictor_forward.1} parent=11 // pred_region
          _
        $region16: #{duration_predictor_forward.1} parent=11 // pred_fallthru
          _
        // Predicated region
        $region17: #{duration_predictor_forward.1} parent=11 // pred_check
          %p373 = pneg %p119
        $region18: #{duration_predictor_forward.1} parent=11 // pred_check_branch
          %375 = sbr.rel (%p373) target = $region20
        $region19: #{duration_predictor_forward.1} parent=11 // pred_region
          _
        $region20: #{duration_predictor_forward.1} parent=11 // pred_fallthru
          _
        // Predicated region
        $region21: #{duration_predictor_forward.1} parent=11 // pred_check
          %p376 = pneg %p140
        $region22: #{duration_predictor_forward.1} parent=11 // pred_check_branch
          %378 = sbr.rel (%p376) target = $region24
        $region23: #{duration_predictor_forward.1} parent=11 // pred_region
          _
        $region24: #{duration_predictor_forward.1} parent=11 // pred_fallthru
          _
        // Predicated region
        $region25: #{duration_predictor_forward.1} parent=11 // pred_check
          %p379 = pneg %p161
        $region26: #{duration_predictor_forward.1} parent=11 // pred_check_branch
          %381 = sbr.rel (%p379) target = $region28
        $region27: #{duration_predictor_forward.1} parent=11 // pred_region
          _
        $region28: #{duration_predictor_forward.1} parent=11 // pred_fallthru
          _
        // Predicated region
        $region29: #{duration_predictor_forward.1} parent=11 // pred_check
          %p382 = pneg %p182
        $region30: #{duration_predictor_forward.1} parent=11 // pred_check_branch
          %384 = sbr.rel (%p382) target = $region32
        $region31: #{duration_predictor_forward.1} parent=11 // pred_region
          _
        $region32: #{duration_predictor_forward.1} parent=11 // pred_fallthru
          _
        // Predicated region
        $region33: #{duration_predictor_forward.1} parent=11 // pred_check
          %p385 = pneg %p203
        $region34: #{duration_predictor_forward.1} parent=11 // pred_check_branch
          %387 = sbr.rel (%p385) target = $region36
        $region35: #{duration_predictor_forward.1} parent=11 // pred_region
          _
        $region36: #{duration_predictor_forward.1} parent=11 // pred_fallthru
          _
        // Predicated region
        $region37: #{duration_predictor_forward.1} parent=11 // pred_check
          %p388 = pneg %p224
        $region38: #{duration_predictor_forward.1} parent=11 // pred_check_branch
          %390 = sbr.rel (%p388) target = $region40
        $region39: #{duration_predictor_forward.1} parent=11 // pred_region
          _
        $region40: #{duration_predictor_forward.1} parent=11 // pred_fallthru
          _
        // Predicated region
        $region41: #{duration_predictor_forward.1} parent=11 // pred_check
          %p391 = pneg %p245
        $region42: #{duration_predictor_forward.1} parent=11 // pred_check_branch
          %393 = sbr.rel (%p391) target = $region44
        $region43: #{duration_predictor_forward.1} parent=11 // pred_region
          _
        $region44: #{duration_predictor_forward.1} parent=11 // pred_fallthru
          _
        // Predicated region
        $region45: #{duration_predictor_forward.1} parent=11 // pred_check
          %p394 = pneg %p266
        $region46: #{duration_predictor_forward.1} parent=11 // pred_check_branch
          %396 = sbr.rel (%p394) target = $region48
        $region47: #{duration_predictor_forward.1} parent=11 // pred_region
          _
        $region48: #{duration_predictor_forward.1} parent=11 // pred_fallthru
          _
        // Predicated region
        $region49: #{duration_predictor_forward.1} parent=11 // pred_check
          %p397 = pneg %p287
        $region50: #{duration_predictor_forward.1} parent=11 // pred_check_branch
          %399 = sbr.rel (%p397) target = $region52
        $region51: #{duration_predictor_forward.1} parent=11 // pred_region
          _
        $region52: #{duration_predictor_forward.1} parent=11 // pred_fallthru
          _
        // Predicated region
        $region53: #{duration_predictor_forward.1} parent=11 // pred_check
          %p400 = pneg %p308
        $region54: #{duration_predictor_forward.1} parent=11 // pred_check_branch
          %402 = sbr.rel (%p400) target = $region56
        $region55: #{duration_predictor_forward.1} parent=11 // pred_region
          _
        $region56: #{duration_predictor_forward.1} parent=11 // pred_fallthru
          _
        // Predicated region
        $region57: #{duration_predictor_forward.1} parent=11 // pred_check
          %p403 = pneg %p329
        $region58: #{duration_predictor_forward.1} parent=11 // pred_check_branch
          %405 = sbr.rel (%p403) target = $region60
        $region59: #{duration_predictor_forward.1} parent=11 // pred_region
          _
        $region60: #{duration_predictor_forward.1} parent=11 // pred_fallthru
          _
      $region12: #{duration_predictor_forward.1} parent=5 // pred_fallthru
        _
      %p406 = scmp.lt.s32.totalorder %s25, 2
      // Predicated region
      $region61: #{duration_predictor_forward.1} parent=5 // pred_check
        %p407 = pneg %p406
      $region62: #{duration_predictor_forward.1} parent=5 // pred_check_branch
        %409 = sbr.rel (%p407) target = $region64
      $region63: #{duration_predictor_forward.1} parent=5 // pred_region
        // Predicated region
        $region65: #{duration_predictor_forward.1} parent=63 // pred_check
          %p410 = pneg %p45
        $region66: #{duration_predictor_forward.1} parent=63 // pred_check_branch
          %412 = sbr.rel (%p410) target = $region68
        $region67: #{duration_predictor_forward.1} parent=63 // pred_region
          %p413 = scmp.lt.s32.totalorder %s25, 1
          %s414 = scalar_select %p413, %s25, 1
          %s415 = smul.addr %s414, 8
          %s416 = scalar_lea.vmem %s0, %s415
        $region68: #{duration_predictor_forward.1} parent=63 // pred_fallthru
          _
        // Predicated region
        $region69: #{duration_predictor_forward.1} parent=63 // pred_check
          %p417 = pneg %p71
        $region70: #{duration_predictor_forward.1} parent=63 // pred_check_branch
          %419 = sbr.rel (%p417) target = $region72
        $region71: #{duration_predictor_forward.1} parent=63 // pred_region
          %p420 = scmp.lt.s32.totalorder %s25, 1
          %s421 = scalar_select %p420, %s25, 1
          %s422 = smul.addr %s421, 2
          %s423 = smul.addr %s422, 8
          %s424 = scalar_lea.vmem %s1, %s423
        $region72: #{duration_predictor_forward.1} parent=63 // pred_fallthru
          _
      $region64: #{duration_predictor_forward.1} parent=5 // pred_fallthru
        _
      %p425 = scmp.le.s32.totalorder 1, %s25
      %p426 = scmp.lt.s32.totalorder %s25, 3
      %p427 = pnand %p425, %p426
      %p428 = pneg %p427
      // Predicated region
      $region73: #{duration_predictor_forward.1} parent=5 // pred_check
        _
      $region74: #{duration_predictor_forward.1} parent=5 // pred_check_branch
        %430 = sbr.rel (%p427) target = $region76
      $region75: #{duration_predictor_forward.1} parent=5 // pred_region
        %s431 = ssub.s32 %s25, 1
        %p432 = scmp.lt.s32.totalorder %s30, 1
        %s433 = scalar_select %p432, %s30, 1
        %s434 = smul.addr %s433, 8
        %s435 = scalar_lea.vmem %s0, %s434
        %p436 = pneg %p51
        %p437 = pneg %p48
        %p438 = scmp.lt.s32.totalorder %s30, 1
        %s439 = scalar_select %p438, %s30, 1
        %s440 = smul.addr %s439, 2
        %s441 = smul.addr %s440, 8
        %s442 = scalar_lea.vmem %s1, %s441
        %p443 = pneg %p77
        %p444 = pneg %p74
        %p445 = pneg %p98
        %p446 = pneg %p95
        %p447 = pneg %p119
        %p448 = pneg %p116
        %p449 = pneg %p140
        %p450 = pneg %p137
        %p451 = pneg %p161
        %p452 = pneg %p158
        %p453 = pneg %p182
        %p454 = pneg %p179
        %p455 = pneg %p203
        %p456 = pneg %p200
        %p457 = pneg %p224
        %p458 = pneg %p221
        %p459 = pneg %p245
        %p460 = pneg %p242
        %p461 = pneg %p266
        %p462 = pneg %p263
        %p463 = pneg %p287
        %p464 = pneg %p284
        %p465 = pneg %p308
        %p466 = pneg %p305
        %p467 = pneg %p329
        %p468 = pneg %p326
        %p469 = pneg %p355
        %p470 = pneg %p352
        %s471 = sand.u32 %s342, 1
        %s472 = scalar_lea.sflag [#allocation4], %s471
        %s473 = sand.u32 %s342, 1
        %s474 = scalar_lea.vmem [#allocation3], %s473
        %p475 = scmp.lt.s32.totalorder %s30, 1
        %s476 = scalar_select %p475, %s30, 1
        %s477 = smul.addr %s476, 8
        %s478 = scalar_lea.vmem %s0, %s477
        %p479 = scmp.lt.s32.totalorder %s30, 1
        %s480 = scalar_select %p479, %s30, 1
        %s481 = smul.addr %s480, 2
        %s482 = smul.addr %s481, 8
        %s483 = scalar_lea.vmem %s1, %s482
        %v485 = vlaneseq
        %v486 = vshrl.u32 %v485, 7
        %vm487 = vcmp.eq.s32.totalorder %v486, 0
        %v488 = vsel %vm487, 0.0, 1.0
        %vm489 = vcmp.eq.s32.totalorder %v486, 7
        %v490 = vsel %vm489, 0.0, 1.0
        %v491 = vld [vmem:[%s478] sm:$0xff]
        %v492 = vld [vmem:[%s483] sm:$0xff]
        %v493 = vld [vmem:[%s483 + $0x8] sm:$0xf]
        %v494 = vpack.c.bf16 %v493, %v492
        %v495 = vrot.slane %v491, 7
        %v496 = vmul.f32 %v495, %v488
        %v497 = vpack.c.bf16 %v496, %v496
        %v498 = vrot.slane %v491, 1
        %v499 = vmul.f32 %v498, %v490
        %v500 = vpack.c.bf16 %v499, %v499
        %v501 = vld [vmem:[%s2] sm:$0xf]
        %v502 = vld [vmem:[%s2 + $0x4] sm:$0xf]
        %v503 = vld [vmem:[%s2 + $0x8] sm:$0xf]
        %v504 = vld [vmem:[%s2 + $0xc] sm:$0xf]
        %v505 = vld [vmem:[%s2 + $0x10] sm:$0xf]
        %v506 = vld [vmem:[%s2 + $0x14] sm:$0xf]
        %v507 = vld [vmem:[%s2 + $0x18] sm:$0xf]
        %v508 = vld [vmem:[%s2 + $0x1c] sm:$0xf]
        %v509 = vpack.c.bf16 %v491, %v491
        %s510 = scalar_lea.vmem %s2, 32
        %v511 = vld [vmem:[%s510] sm:$0xf]
        %v512 = vld [vmem:[%s510 + $0x4] sm:$0xf]
        %v513 = vld [vmem:[%s510 + $0x8] sm:$0xf]
        %v514 = vld [vmem:[%s510 + $0xc] sm:$0xf]
        %v515 = vld [vmem:[%s510 + $0x10] sm:$0xf]
        %v516 = vld [vmem:[%s510 + $0x14] sm:$0xf]
        %v517 = vld [vmem:[%s510 + $0x18] sm:$0xf]
        %v518 = vld [vmem:[%s510 + $0x1c] sm:$0xf]
        %v527 = vunpack.c.l.b16 %v511
        %v528 = vunpack.c.l.b16 %v512
        %v529 = vunpack.c.l.b16 %v513
        %v530 = vunpack.c.l.b16 %v514
        %v531 = vunpack.c.l.b16 %v515
        %v532 = vunpack.c.l.b16 %v516
        %v533 = vunpack.c.l.b16 %v517
        %v534 = vunpack.c.l.b16 %v518
        %v535 = vpack.c.b16 %v528, %v527
        %v536 = vpack.c.b16 %v530, %v529
        %v537 = vpack.c.b16 %v532, %v531
        %v538 = vpack.c.b16 %v534, %v533
        %vm543 = vcmask 523264
        %v545 = vsel %vm543, %v509, 0
        %547 = vmatprep.subr.bf16.mxu0 0
        %548 = vmatpush1.bf16.msra.mxu0 %v535
        %549 = vmatprep.subr.bf16.mxu0 0
        %550 = vmatpush1.bf16.msra.mxu0 %v536
        %551 = vmatprep.subr.bf16.mxu0 0
        %552 = vmatpush1.bf16.msra.mxu0 %v537
        %553 = vmatprep.subr.bf16.mxu0 0
        %554 = vmatpush1.bf16.msra.mxu0 %v538
        %555 = vmatprep.subr.bf16.mxu0 0
        %556 = vmatpush1.bf16.msra.mxu0 0
        %557 = vmatprep.subr.bf16.mxu0 0
        %558 = vmatpush1.bf16.msra.mxu0 0
        %559 = vmatprep.subr.bf16.mxu0 0
        %560 = vmatpush1.bf16.msra.mxu0 0
        %561 = vmatprep.subr.bf16.mxu0 0
        %562 = vmatpush1.bf16.msra.mxu0 0
        %563 = vmatprep.subr.bf16.mxu0 0
        %564 = vmatpush1.bf16.msra.mxu0 0
        %565 = vmatprep.subr.bf16.mxu0 0
        %566 = vmatpush1.bf16.msra.mxu0 0
        %567 = vmatprep.subr.bf16.mxu0 0
        %568 = vmatpush1.bf16.msra.mxu0 0
        %569 = vmatprep.subr.bf16.mxu0 0
        %570 = vmatpush1.bf16.msra.mxu0 0
        %571 = vmatprep.subr.bf16.mxu0 0
        %572 = vmatpush1.bf16.msra.mxu0 0
        %573 = vmatprep.subr.bf16.mxu0 0
        %574 = vmatpush1.bf16.msra.mxu0 0
        %575 = vmatprep.subr.bf16.mxu0 0
        %576 = vmatpush1.bf16.msra.mxu0 0
        %577 = vmatprep.subr.bf16.mxu0 0
        %578 = vmatpush1.bf16.msra.mxu0 0
        %579 = vmatprep.mubr.bf16.mxu0 0
        %580 = vmatmul.mubr.bf16.gmra.mrb[0].mxu0 %v545
        %v581 = vpop.f32.mrb[0].mxu0
        %v582 = vadd.f32 0.0, %v581
        %v583 = vpop.f32.mrb[0].mxu0
        %v584 = vpop.f32.mrb[0].mxu0
        %v585 = vpop.f32.mrb[0].mxu0
        %586 = vdwg.mxu0
        %v595 = vunpack.c.l.b16 %v501
        %v596 = vunpack.c.l.b16 %v502
        %v597 = vunpack.c.l.b16 %v503
        %v598 = vunpack.c.l.b16 %v504
        %v599 = vunpack.c.l.b16 %v505
        %v600 = vunpack.c.l.b16 %v506
        %v601 = vunpack.c.l.b16 %v507
        %v602 = vunpack.c.l.b16 %v508
        %v603 = vpack.c.b16 %v596, %v595
        %v604 = vpack.c.b16 %v598, %v597
        %v605 = vpack.c.b16 %v600, %v599
        %v606 = vpack.c.b16 %v602, %v601
        %v612 = vsel %vm543, %v497, 0
        %614 = vmatprep.subr.bf16.mxu0 0
        %615 = vmatpush1.bf16.msra.mxu0 %v603
        %616 = vmatprep.subr.bf16.mxu0 0
        %617 = vmatpush1.bf16.msra.mxu0 %v604
        %618 = vmatprep.subr.bf16.mxu0 0
        %619 = vmatpush1.bf16.msra.mxu0 %v605
        %620 = vmatprep.subr.bf16.mxu0 0
        %621 = vmatpush1.bf16.msra.mxu0 %v606
        %622 = vmatprep.subr.bf16.mxu0 0
        %623 = vmatpush1.bf16.msra.mxu0 0
        %624 = vmatprep.subr.bf16.mxu0 0
        %625 = vmatpush1.bf16.msra.mxu0 0
        %626 = vmatprep.subr.bf16.mxu0 0
        %627 = vmatpush1.bf16.msra.mxu0 0
        %628 = vmatprep.subr.bf16.mxu0 0
        %629 = vmatpush1.bf16.msra.mxu0 0
        %630 = vmatprep.subr.bf16.mxu0 0
        %631 = vmatpush1.bf16.msra.mxu0 0
        %632 = vmatprep.subr.bf16.mxu0 0
        %633 = vmatpush1.bf16.msra.mxu0 0
        %634 = vmatprep.subr.bf16.mxu0 0
        %635 = vmatpush1.bf16.msra.mxu0 0
        %636 = vmatprep.subr.bf16.mxu0 0
        %637 = vmatpush1.bf16.msra.mxu0 0
        %638 = vmatprep.subr.bf16.mxu0 0
        %639 = vmatpush1.bf16.msra.mxu0 0
        %640 = vmatprep.subr.bf16.mxu0 0
        %641 = vmatpush1.bf16.msra.mxu0 0
        %642 = vmatprep.subr.bf16.mxu0 0
        %643 = vmatpush1.bf16.msra.mxu0 0
        %644 = vmatprep.subr.bf16.mxu0 0
        %645 = vmatpush1.bf16.msra.mxu0 0
        %646 = vmatprep.mubr.bf16.mxu0 0
        %647 = vmatmul.mubr.bf16.gmra.mrb[0].mxu0 %v612
        %v648 = vpop.f32.mrb[0].mxu0
        %v649 = vadd.f32 %v582, %v648
        %v650 = vpop.f32.mrb[0].mxu0
        %v651 = vpop.f32.mrb[0].mxu0
        %v652 = vpop.f32.mrb[0].mxu0
        %653 = vdwg.mxu0
        %s654 = scalar_lea.vmem %s2, 64
        %v655 = vld [vmem:[%s654] sm:$0xf]
        %v656 = vld [vmem:[%s654 + $0x4] sm:$0xf]
        %v657 = vld [vmem:[%s654 + $0x8] sm:$0xf]
        %v658 = vld [vmem:[%s654 + $0xc] sm:$0xf]
        %v659 = vld [vmem:[%s654 + $0x10] sm:$0xf]
        %v660 = vld [vmem:[%s654 + $0x14] sm:$0xf]
        %v661 = vld [vmem:[%s654 + $0x18] sm:$0xf]
        %v662 = vld [vmem:[%s654 + $0x1c] sm:$0xf]
        %v671 = vunpack.c.l.b16 %v655
        %v672 = vunpack.c.l.b16 %v656
        %v673 = vunpack.c.l.b16 %v657
        %v674 = vunpack.c.l.b16 %v658
        %v675 = vunpack.c.l.b16 %v659
        %v676 = vunpack.c.l.b16 %v660
        %v677 = vunpack.c.l.b16 %v661
        %v678 = vunpack.c.l.b16 %v662
        %v679 = vpack.c.b16 %v672, %v671
        %v680 = vpack.c.b16 %v674, %v673
        %v681 = vpack.c.b16 %v676, %v675
        %v682 = vpack.c.b16 %v678, %v677
        %v688 = vsel %vm543, %v500, 0
        %690 = vmatprep.subr.bf16.mxu0 0
        %691 = vmatpush1.bf16.msra.mxu0 %v679
        %692 = vmatprep.subr.bf16.mxu0 0
        %693 = vmatpush1.bf16.msra.mxu0 %v680
        %694 = vmatprep.subr.bf16.mxu0 0
        %695 = vmatpush1.bf16.msra.mxu0 %v681
        %696 = vmatprep.subr.bf16.mxu0 0
        %697 = vmatpush1.bf16.msra.mxu0 %v682
        %698 = vmatprep.subr.bf16.mxu0 0
        %699 = vmatpush1.bf16.msra.mxu0 0
        %700 = vmatprep.subr.bf16.mxu0 0
        %701 = vmatpush1.bf16.msra.mxu0 0
        %702 = vmatprep.subr.bf16.mxu0 0
        %703 = vmatpush1.bf16.msra.mxu0 0
        %704 = vmatprep.subr.bf16.mxu0 0
        %705 = vmatpush1.bf16.msra.mxu0 0
        %706 = vmatprep.subr.bf16.mxu0 0
        %707 = vmatpush1.bf16.msra.mxu0 0
        %708 = vmatprep.subr.bf16.mxu0 0
        %709 = vmatpush1.bf16.msra.mxu0 0
        %710 = vmatprep.subr.bf16.mxu0 0
        %711 = vmatpush1.bf16.msra.mxu0 0
        %712 = vmatprep.subr.bf16.mxu0 0
        %713 = vmatpush1.bf16.msra.mxu0 0
        %714 = vmatprep.subr.bf16.mxu0 0
        %715 = vmatpush1.bf16.msra.mxu0 0
        %716 = vmatprep.subr.bf16.mxu0 0
        %717 = vmatpush1.bf16.msra.mxu0 0
        %718 = vmatprep.subr.bf16.mxu0 0
        %719 = vmatpush1.bf16.msra.mxu0 0
        %720 = vmatprep.subr.bf16.mxu0 0
        %721 = vmatpush1.bf16.msra.mxu0 0
        %722 = vmatprep.mubr.bf16.mxu0 0
        %723 = vmatmul.mubr.bf16.gmra.mrb[0].mxu0 %v688
        %v724 = vpop.f32.mrb[0].mxu0
        %v725 = vadd.f32 0.0, %v724
        %v726 = vpop.f32.mrb[0].mxu0
        %v727 = vpop.f32.mrb[0].mxu0
        %v728 = vpop.f32.mrb[0].mxu0
        %729 = vdwg.mxu0
        %v730 = vadd.f32 %v649, %v725
        %v731 = vld [vmem:[%s3] sm:$0x1]
        %v733 = vlaneseq
        %v734 = vshrl.u32 %v733, 7
        %v735 = vsub.s32 0, %v734
        %v736 = vrot.slane %v731, %v735
        %v738 = vadd.f32 %v730, %v736
        %v739 = vmax.f32 %v738, 0.0
        %v740 = vrot.slane %v739, 7
        %v741 = vmul.f32 %v740, %v488
        %v742 = vpack.c.bf16 %v741, %v741
        %v743 = vrot.slane %v739, 1
        %v744 = vmul.f32 %v743, %v490
        %v745 = vpack.c.bf16 %v744, %v744
        %s746 = scalar_lea.vmem %s2, 96
        %v747 = vld [vmem:[%s746] sm:$0xf]
        %v748 = vld [vmem:[%s746 + $0x4] sm:$0xf]
        %v749 = vld [vmem:[%s746 + $0x8] sm:$0xf]
        %v750 = vld [vmem:[%s746 + $0xc] sm:$0xf]
        %v751 = vld [vmem:[%s746 + $0x10] sm:$0xf]
        %v752 = vld [vmem:[%s746 + $0x14] sm:$0xf]
        %v753 = vld [vmem:[%s746 + $0x18] sm:$0xf]
        %v754 = vld [vmem:[%s746 + $0x1c] sm:$0xf]
        %v755 = vpack.c.bf16 %v739, %v739
        %s756 = scalar_lea.vmem %s2, 128
        %v757 = vld [vmem:[%s756] sm:$0xf]
        %v758 = vld [vmem:[%s756 + $0x4] sm:$0xf]
        %v759 = vld [vmem:[%s756 + $0x8] sm:$0xf]
        %v760 = vld [vmem:[%s756 + $0xc] sm:$0xf]
        %v761 = vld [vmem:[%s756 + $0x10] sm:$0xf]
        %v762 = vld [vmem:[%s756 + $0x14] sm:$0xf]
        %v763 = vld [vmem:[%s756 + $0x18] sm:$0xf]
        %v764 = vld [vmem:[%s756 + $0x1c] sm:$0xf]
        %v773 = vunpack.c.l.b16 %v757
        %v774 = vunpack.c.l.b16 %v758
        %v775 = vunpack.c.l.b16 %v759
        %v776 = vunpack.c.l.b16 %v760
        %v777 = vunpack.c.l.b16 %v761
        %v778 = vunpack.c.l.b16 %v762
        %v779 = vunpack.c.l.b16 %v763
        %v780 = vunpack.c.l.b16 %v764
        %v781 = vpack.c.b16 %v774, %v773
        %v782 = vpack.c.b16 %v776, %v775
        %v783 = vpack.c.b16 %v778, %v777
        %v784 = vpack.c.b16 %v780, %v779
        %v790 = vsel %vm543, %v755, 0
        %792 = vmatprep.subr.bf16.mxu0 0
        %793 = vmatpush1.bf16.msra.mxu0 %v781
        %794 = vmatprep.subr.bf16.mxu0 0
        %795 = vmatpush1.bf16.msra.mxu0 %v782
        %796 = vmatprep.subr.bf16.mxu0 0
        %797 = vmatpush1.bf16.msra.mxu0 %v783
        %798 = vmatprep.subr.bf16.mxu0 0
        %799 = vmatpush1.bf16.msra.mxu0 %v784
        %800 = vmatprep.subr.bf16.mxu0 0
        %801 = vmatpush1.bf16.msra.mxu0 0
        %802 = vmatprep.subr.bf16.mxu0 0
        %803 = vmatpush1.bf16.msra.mxu0 0
        %804 = vmatprep.subr.bf16.mxu0 0
        %805 = vmatpush1.bf16.msra.mxu0 0
        %806 = vmatprep.subr.bf16.mxu0 0
        %807 = vmatpush1.bf16.msra.mxu0 0
        %808 = vmatprep.subr.bf16.mxu0 0
        %809 = vmatpush1.bf16.msra.mxu0 0
        %810 = vmatprep.subr.bf16.mxu0 0
        %811 = vmatpush1.bf16.msra.mxu0 0
        %812 = vmatprep.subr.bf16.mxu0 0
        %813 = vmatpush1.bf16.msra.mxu0 0
        %814 = vmatprep.subr.bf16.mxu0 0
        %815 = vmatpush1.bf16.msra.mxu0 0
        %816 = vmatprep.subr.bf16.mxu0 0
        %817 = vmatpush1.bf16.msra.mxu0 0
        %818 = vmatprep.subr.bf16.mxu0 0
        %819 = vmatpush1.bf16.msra.mxu0 0
        %820 = vmatprep.subr.bf16.mxu0 0
        %821 = vmatpush1.bf16.msra.mxu0 0
        %822 = vmatprep.subr.bf16.mxu0 0
        %823 = vmatpush1.bf16.msra.mxu0 0
        %824 = vmatprep.mubr.bf16.mxu0 0
        %825 = vmatmul.mubr.bf16.gmra.mrb[0].mxu0 %v790
        %v826 = vpop.f32.mrb[0].mxu0
        %v827 = vadd.f32 0.0, %v826
        %v828 = vpop.f32.mrb[0].mxu0
        %v829 = vpop.f32.mrb[0].mxu0
        %v830 = vpop.f32.mrb[0].mxu0
        %831 = vdwg.mxu0
        %v840 = vunpack.c.l.b16 %v747
        %v841 = vunpack.c.l.b16 %v748
        %v842 = vunpack.c.l.b16 %v749
        %v843 = vunpack.c.l.b16 %v750
        %v844 = vunpack.c.l.b16 %v751
        %v845 = vunpack.c.l.b16 %v752
        %v846 = vunpack.c.l.b16 %v753
        %v847 = vunpack.c.l.b16 %v754
        %v848 = vpack.c.b16 %v841, %v840
        %v849 = vpack.c.b16 %v843, %v842
        %v850 = vpack.c.b16 %v845, %v844
        %v851 = vpack.c.b16 %v847, %v846
        %v857 = vsel %vm543, %v742, 0
        %859 = vmatprep.subr.bf16.mxu0 0
        %860 = vmatpush1.bf16.msra.mxu0 %v848
        %861 = vmatprep.subr.bf16.mxu0 0
        %862 = vmatpush1.bf16.msra.mxu0 %v849
        %863 = vmatprep.subr.bf16.mxu0 0
        %864 = vmatpush1.bf16.msra.mxu0 %v850
        %865 = vmatprep.subr.bf16.mxu0 0
        %866 = vmatpush1.bf16.msra.mxu0 %v851
        %867 = vmatprep.subr.bf16.mxu0 0
        %868 = vmatpush1.bf16.msra.mxu0 0
        %869 = vmatprep.subr.bf16.mxu0 0
        %870 = vmatpush1.bf16.msra.mxu0 0
        %871 = vmatprep.subr.bf16.mxu0 0
        %872 = vmatpush1.bf16.msra.mxu0 0
        %873 = vmatprep.subr.bf16.mxu0 0
        %874 = vmatpush1.bf16.msra.mxu0 0
        %875 = vmatprep.subr.bf16.mxu0 0
        %876 = vmatpush1.bf16.msra.mxu0 0
        %877 = vmatprep.subr.bf16.mxu0 0
        %878 = vmatpush1.bf16.msra.mxu0 0
        %879 = vmatprep.subr.bf16.mxu0 0
        %880 = vmatpush1.bf16.msra.mxu0 0
        %881 = vmatprep.subr.bf16.mxu0 0
        %882 = vmatpush1.bf16.msra.mxu0 0
        %883 = vmatprep.subr.bf16.mxu0 0
        %884 = vmatpush1.bf16.msra.mxu0 0
        %885 = vmatprep.subr.bf16.mxu0 0
        %886 = vmatpush1.bf16.msra.mxu0 0
        %887 = vmatprep.subr.bf16.mxu0 0
        %888 = vmatpush1.bf16.msra.mxu0 0
        %889 = vmatprep.subr.bf16.mxu0 0
        %890 = vmatpush1.bf16.msra.mxu0 0
        %891 = vmatprep.mubr.bf16.mxu0 0
        %892 = vmatmul.mubr.bf16.gmra.mrb[0].mxu0 %v857
        %v893 = vpop.f32.mrb[0].mxu0
        %v894 = vadd.f32 %v827, %v893
        %v895 = vpop.f32.mrb[0].mxu0
        %v896 = vpop.f32.mrb[0].mxu0
        %v897 = vpop.f32.mrb[0].mxu0
        %898 = vdwg.mxu0
        %s899 = scalar_lea.vmem %s2, 160
        %v900 = vld [vmem:[%s899] sm:$0xf]
        %v901 = vld [vmem:[%s899 + $0x4] sm:$0xf]
        %v902 = vld [vmem:[%s899 + $0x8] sm:$0xf]
        %v903 = vld [vmem:[%s899 + $0xc] sm:$0xf]
        %v904 = vld [vmem:[%s899 + $0x10] sm:$0xf]
        %v905 = vld [vmem:[%s899 + $0x14] sm:$0xf]
        %v906 = vld [vmem:[%s899 + $0x18] sm:$0xf]
        %v907 = vld [vmem:[%s899 + $0x1c] sm:$0xf]
        %v916 = vunpack.c.l.b16 %v900
        %v917 = vunpack.c.l.b16 %v901
        %v918 = vunpack.c.l.b16 %v902
        %v919 = vunpack.c.l.b16 %v903
        %v920 = vunpack.c.l.b16 %v904
        %v921 = vunpack.c.l.b16 %v905
        %v922 = vunpack.c.l.b16 %v906
        %v923 = vunpack.c.l.b16 %v907
        %v924 = vpack.c.b16 %v917, %v916
        %v925 = vpack.c.b16 %v919, %v918
        %v926 = vpack.c.b16 %v921, %v920
        %v927 = vpack.c.b16 %v923, %v922
        %v933 = vsel %vm543, %v745, 0
        %935 = vmatprep.subr.bf16.mxu0 0
        %936 = vmatpush1.bf16.msra.mxu0 %v924
        %937 = vmatprep.subr.bf16.mxu0 0
        %938 = vmatpush1.bf16.msra.mxu0 %v925
        %939 = vmatprep.subr.bf16.mxu0 0
        %940 = vmatpush1.bf16.msra.mxu0 %v926
        %941 = vmatprep.subr.bf16.mxu0 0
        %942 = vmatpush1.bf16.msra.mxu0 %v927
        %943 = vmatprep.subr.bf16.mxu0 0
        %944 = vmatpush1.bf16.msra.mxu0 0
        %945 = vmatprep.subr.bf16.mxu0 0
        %946 = vmatpush1.bf16.msra.mxu0 0
        %947 = vmatprep.subr.bf16.mxu0 0
        %948 = vmatpush1.bf16.msra.mxu0 0
        %949 = vmatprep.subr.bf16.mxu0 0
        %950 = vmatpush1.bf16.msra.mxu0 0
        %951 = vmatprep.subr.bf16.mxu0 0
        %952 = vmatpush1.bf16.msra.mxu0 0
        %953 = vmatprep.subr.bf16.mxu0 0
        %954 = vmatpush1.bf16.msra.mxu0 0
        %955 = vmatprep.subr.bf16.mxu0 0
        %956 = vmatpush1.bf16.msra.mxu0 0
        %957 = vmatprep.subr.bf16.mxu0 0
        %958 = vmatpush1.bf16.msra.mxu0 0
        %959 = vmatprep.subr.bf16.mxu0 0
        %960 = vmatpush1.bf16.msra.mxu0 0
        %961 = vmatprep.subr.bf16.mxu0 0
        %962 = vmatpush1.bf16.msra.mxu0 0
        %963 = vmatprep.subr.bf16.mxu0 0
        %964 = vmatpush1.bf16.msra.mxu0 0
        %965 = vmatprep.subr.bf16.mxu0 0
        %966 = vmatpush1.bf16.msra.mxu0 0
        %967 = vmatprep.mubr.bf16.mxu0 0
        %968 = vmatmul.mubr.bf16.gmra.mrb[0].mxu0 %v933
        %v969 = vpop.f32.mrb[0].mxu0
        %v970 = vadd.f32 0.0, %v969
        %v971 = vpop.f32.mrb[0].mxu0
        %v972 = vpop.f32.mrb[0].mxu0
        %v973 = vpop.f32.mrb[0].mxu0
        %974 = vdwg.mxu0
        %v975 = vadd.f32 %v894, %v970
        %s976 = scalar_lea.vmem %s3, 1
        %v977 = vld [vmem:[%s976] sm:$0x1]
        %v979 = vlaneseq
        %v980 = vshrl.u32 %v979, 7
        %v981 = vsub.s32 0, %v980
        %v982 = vrot.slane %v977, %v981
        %v984 = vadd.f32 %v975, %v982
        %v985 = vmax.f32 %v984, 0.0
        %v986 = vrot.slane %v985, 7
        %v987 = vmul.f32 %v986, %v488
        %v988 = vpack.c.bf16 %v987, %v987
        %v989 = vrot.slane %v985, 1
        %v990 = vmul.f32 %v989, %v490
        %v991 = vpack.c.bf16 %v990, %v990
        %s992 = scalar_lea.vmem %s2, 192
        %v993 = vld [vmem:[%s992] sm:$0xf]
        %v994 = vld [vmem:[%s992 + $0x4] sm:$0xf]
        %v995 = vld [vmem:[%s992 + $0x8] sm:$0xf]
        %v996 = vld [vmem:[%s992 + $0xc] sm:$0xf]
        %v997 = vld [vmem:[%s992 + $0x10] sm:$0xf]
        %v998 = vld [vmem:[%s992 + $0x14] sm:$0xf]
        %v999 = vld [vmem:[%s992 + $0x18] sm:$0xf]
        %v1000 = vld [vmem:[%s992 + $0x1c] sm:$0xf]
        %v1001 = vpack.c.bf16 %v985, %v985
        %s1002 = scalar_lea.vmem %s2, 224
        %v1003 = vld [vmem:[%s1002] sm:$0xf]
        %v1004 = vld [vmem:[%s1002 + $0x4] sm:$0xf]
        %v1005 = vld [vmem:[%s1002 + $0x8] sm:$0xf]
        %v1006 = vld [vmem:[%s1002 + $0xc] sm:$0xf]
        %v1007 = vld [vmem:[%s1002 + $0x10] sm:$0xf]
        %v1008 = vld [vmem:[%s1002 + $0x14] sm:$0xf]
        %v1009 = vld [vmem:[%s1002 + $0x18] sm:$0xf]
        %v1010 = vld [vmem:[%s1002 + $0x1c] sm:$0xf]
        %v1019 = vunpack.c.l.b16 %v1003
        %v1020 = vunpack.c.l.b16 %v1004
        %v1021 = vunpack.c.l.b16 %v1005
        %v1022 = vunpack.c.l.b16 %v1006
        %v1023 = vunpack.c.l.b16 %v1007
        %v1024 = vunpack.c.l.b16 %v1008
        %v1025 = vunpack.c.l.b16 %v1009
        %v1026 = vunpack.c.l.b16 %v1010
        %v1027 = vpack.c.b16 %v1020, %v1019
        %v1028 = vpack.c.b16 %v1022, %v1021
        %v1029 = vpack.c.b16 %v1024, %v1023
        %v1030 = vpack.c.b16 %v1026, %v1025
        %v1036 = vsel %vm543, %v1001, 0
        %1038 = vmatprep.subr.bf16.mxu0 0
        %1039 = vmatpush1.bf16.msra.mxu0 %v1027
        %1040 = vmatprep.subr.bf16.mxu0 0
        %1041 = vmatpush1.bf16.msra.mxu0 %v1028
        %1042 = vmatprep.subr.bf16.mxu0 0
        %1043 = vmatpush1.bf16.msra.mxu0 %v1029
        %1044 = vmatprep.subr.bf16.mxu0 0
        %1045 = vmatpush1.bf16.msra.mxu0 %v1030
        %1046 = vmatprep.subr.bf16.mxu0 0
        %1047 = vmatpush1.bf16.msra.mxu0 0
        %1048 = vmatprep.subr.bf16.mxu0 0
        %1049 = vmatpush1.bf16.msra.mxu0 0
        %1050 = vmatprep.subr.bf16.mxu0 0
        %1051 = vmatpush1.bf16.msra.mxu0 0
        %1052 = vmatprep.subr.bf16.mxu0 0
        %1053 = vmatpush1.bf16.msra.mxu0 0
        %1054 = vmatprep.subr.bf16.mxu0 0
        %1055 = vmatpush1.bf16.msra.mxu0 0
        %1056 = vmatprep.subr.bf16.mxu0 0
        %1057 = vmatpush1.bf16.msra.mxu0 0
        %1058 = vmatprep.subr.bf16.mxu0 0
        %1059 = vmatpush1.bf16.msra.mxu0 0
        %1060 = vmatprep.subr.bf16.mxu0 0
        %1061 = vmatpush1.bf16.msra.mxu0 0
        %1062 = vmatprep.subr.bf16.mxu0 0
        %1063 = vmatpush1.bf16.msra.mxu0 0
        %1064 = vmatprep.subr.bf16.mxu0 0
        %1065 = vmatpush1.bf16.msra.mxu0 0
        %1066 = vmatprep.subr.bf16.mxu0 0
        %1067 = vmatpush1.bf16.msra.mxu0 0
        %1068 = vmatprep.subr.bf16.mxu0 0
        %1069 = vmatpush1.bf16.msra.mxu0 0
        %1070 = vmatprep.mubr.bf16.mxu0 0
        %1071 = vmatmul.mubr.bf16.gmra.mrb[0].mxu0 %v1036
        %v1072 = vpop.f32.mrb[0].mxu0
        %v1073 = vadd.f32 0.0, %v1072
        %v1074 = vpop.f32.mrb[0].mxu0
        %v1075 = vpop.f32.mrb[0].mxu0
        %v1076 = vpop.f32.mrb[0].mxu0
        %1077 = vdwg.mxu0
        %v1086 = vunpack.c.l.b16 %v993
        %v1087 = vunpack.c.l.b16 %v994
        %v1088 = vunpack.c.l.b16 %v995
        %v1089 = vunpack.c.l.b16 %v996
        %v1090 = vunpack.c.l.b16 %v997
        %v1091 = vunpack.c.l.b16 %v998
        %v1092 = vunpack.c.l.b16 %v999
        %v1093 = vunpack.c.l.b16 %v1000
        %v1094 = vpack.c.b16 %v1087, %v1086
        %v1095 = vpack.c.b16 %v1089, %v1088
        %v1096 = vpack.c.b16 %v1091, %v1090
        %v1097 = vpack.c.b16 %v1093, %v1092
        %v1103 = vsel %vm543, %v988, 0
        %1105 = vmatprep.subr.bf16.mxu0 0
        %1106 = vmatpush1.bf16.msra.mxu0 %v1094
        %1107 = vmatprep.subr.bf16.mxu0 0
        %1108 = vmatpush1.bf16.msra.mxu0 %v1095
        %1109 = vmatprep.subr.bf16.mxu0 0
        %1110 = vmatpush1.bf16.msra.mxu0 %v1096
        %1111 = vmatprep.subr.bf16.mxu0 0
        %1112 = vmatpush1.bf16.msra.mxu0 %v1097
        %1113 = vmatprep.subr.bf16.mxu0 0
        %1114 = vmatpush1.bf16.msra.mxu0 0
        %1115 = vmatprep.subr.bf16.mxu0 0
        %1116 = vmatpush1.bf16.msra.mxu0 0
        %1117 = vmatprep.subr.bf16.mxu0 0
        %1118 = vmatpush1.bf16.msra.mxu0 0
        %1119 = vmatprep.subr.bf16.mxu0 0
        %1120 = vmatpush1.bf16.msra.mxu0 0
        %1121 = vmatprep.subr.bf16.mxu0 0
        %1122 = vmatpush1.bf16.msra.mxu0 0
        %1123 = vmatprep.subr.bf16.mxu0 0
        %1124 = vmatpush1.bf16.msra.mxu0 0
        %1125 = vmatprep.subr.bf16.mxu0 0
        %1126 = vmatpush1.bf16.msra.mxu0 0
        %1127 = vmatprep.subr.bf16.mxu0 0
        %1128 = vmatpush1.bf16.msra.mxu0 0
        %1129 = vmatprep.subr.bf16.mxu0 0
        %1130 = vmatpush1.bf16.msra.mxu0 0
        %1131 = vmatprep.subr.bf16.mxu0 0
        %1132 = vmatpush1.bf16.msra.mxu0 0
        %1133 = vmatprep.subr.bf16.mxu0 0
        %1134 = vmatpush1.bf16.msra.mxu0 0
        %1135 = vmatprep.subr.bf16.mxu0 0
        %1136 = vmatpush1.bf16.msra.mxu0 0
        %1137 = vmatprep.mubr.bf16.mxu0 0
        %1138 = vmatmul.mubr.bf16.gmra.mrb[0].mxu0 %v1103
        %v1139 = vpop.f32.mrb[0].mxu0
        %v1140 = vadd.f32 %v1073, %v1139
        %v1141 = vpop.f32.mrb[0].mxu0
        %v1142 = vpop.f32.mrb[0].mxu0
        %v1143 = vpop.f32.mrb[0].mxu0
        %1144 = vdwg.mxu0
        %s1145 = scalar_lea.vmem %s2, 256
        %v1146 = vld [vmem:[%s1145] sm:$0xf]
        %v1147 = vld [vmem:[%s1145 + $0x4] sm:$0xf]
        %v1148 = vld [vmem:[%s1145 + $0x8] sm:$0xf]
        %v1149 = vld [vmem:[%s1145 + $0xc] sm:$0xf]
        %v1150 = vld [vmem:[%s1145 + $0x10] sm:$0xf]
        %v1151 = vld [vmem:[%s1145 + $0x14] sm:$0xf]
        %v1152 = vld [vmem:[%s1145 + $0x18] sm:$0xf]
        %v1153 = vld [vmem:[%s1145 + $0x1c] sm:$0xf]
        %v1162 = vunpack.c.l.b16 %v1146
        %v1163 = vunpack.c.l.b16 %v1147
        %v1164 = vunpack.c.l.b16 %v1148
        %v1165 = vunpack.c.l.b16 %v1149
        %v1166 = vunpack.c.l.b16 %v1150
        %v1167 = vunpack.c.l.b16 %v1151
        %v1168 = vunpack.c.l.b16 %v1152
        %v1169 = vunpack.c.l.b16 %v1153
        %v1170 = vpack.c.b16 %v1163, %v1162
        %v1171 = vpack.c.b16 %v1165, %v1164
        %v1172 = vpack.c.b16 %v1167, %v1166
        %v1173 = vpack.c.b16 %v1169, %v1168
        %v1179 = vsel %vm543, %v991, 0
        %1181 = vmatprep.subr.bf16.mxu0 0
        %1182 = vmatpush1.bf16.msra.mxu0 %v1170
        %1183 = vmatprep.subr.bf16.mxu0 0
        %1184 = vmatpush1.bf16.msra.mxu0 %v1171
        %1185 = vmatprep.subr.bf16.mxu0 0
        %1186 = vmatpush1.bf16.msra.mxu0 %v1172
        %1187 = vmatprep.subr.bf16.mxu0 0
        %1188 = vmatpush1.bf16.msra.mxu0 %v1173
        %1189 = vmatprep.subr.bf16.mxu0 0
        %1190 = vmatpush1.bf16.msra.mxu0 0
        %1191 = vmatprep.subr.bf16.mxu0 0
        %1192 = vmatpush1.bf16.msra.mxu0 0
        %1193 = vmatprep.subr.bf16.mxu0 0
        %1194 = vmatpush1.bf16.msra.mxu0 0
        %1195 = vmatprep.subr.bf16.mxu0 0
        %1196 = vmatpush1.bf16.msra.mxu0 0
        %1197 = vmatprep.subr.bf16.mxu0 0
        %1198 = vmatpush1.bf16.msra.mxu0 0
        %1199 = vmatprep.subr.bf16.mxu0 0
        %1200 = vmatpush1.bf16.msra.mxu0 0
        %1201 = vmatprep.subr.bf16.mxu0 0
        %1202 = vmatpush1.bf16.msra.mxu0 0
        %1203 = vmatprep.subr.bf16.mxu0 0
        %1204 = vmatpush1.bf16.msra.mxu0 0
        %1205 = vmatprep.subr.bf16.mxu0 0
        %1206 = vmatpush1.bf16.msra.mxu0 0
        %1207 = vmatprep.subr.bf16.mxu0 0
        %1208 = vmatpush1.bf16.msra.mxu0 0
        %1209 = vmatprep.subr.bf16.mxu0 0
        %1210 = vmatpush1.bf16.msra.mxu0 0
        %1211 = vmatprep.subr.bf16.mxu0 0
        %1212 = vmatpush1.bf16.msra.mxu0 0
        %1213 = vmatprep.mubr.bf16.mxu0 0
        %1214 = vmatmul.mubr.bf16.gmra.mrb[0].mxu0 %v1179
        %v1215 = vpop.f32.mrb[0].mxu0
        %v1216 = vadd.f32 0.0, %v1215
        %v1217 = vpop.f32.mrb[0].mxu0
        %v1218 = vpop.f32.mrb[0].mxu0
        %v1219 = vpop.f32.mrb[0].mxu0
        %1220 = vdwg.mxu0
        %v1221 = vadd.f32 %v1140, %v1216
        %s1222 = scalar_lea.vmem %s3, 2
        %v1223 = vld [vmem:[%s1222] sm:$0x1]
        %v1225 = vlaneseq
        %v1226 = vshrl.u32 %v1225, 7
        %v1227 = vsub.s32 0, %v1226
        %v1228 = vrot.slane %v1223, %v1227
        %v1230 = vadd.f32 %v1221, %v1228
        %v1231 = vmax.f32 %v1230, 0.0
        %v1232 = vpack.c.bf16 %v1231, %v1231
        %v1233 = vld [vmem:[%s4] sm:$0xf]
        %v1234 = vld [vmem:[%s4 + $0x4] sm:$0xf]
        %v1235 = vld [vmem:[%s4 + $0x8] sm:$0xf]
        %v1236 = vld [vmem:[%s4 + $0xc] sm:$0xf]
        %v1237 = vld [vmem:[%s4 + $0x10] sm:$0xf]
        %v1238 = vld [vmem:[%s4 + $0x14] sm:$0xf]
        %v1239 = vld [vmem:[%s4 + $0x18] sm:$0xf]
        %v1240 = vld [vmem:[%s4 + $0x1c] sm:$0xf]
        %v1241 = vld [vmem:[%s8] sm:$0x1]
        %v1243 = vlaneseq
        %v1244 = vshrl.u32 %v1243, 7
        %v1245 = vsub.s32 0, %v1244
        %v1246 = vrot.slane %v1241, %v1245
        %v1256 = vunpack.c.l.b16 %v1233
        %v1257 = vunpack.c.l.b16 %v1234
        %v1258 = vunpack.c.l.b16 %v1235
        %v1259 = vunpack.c.l.b16 %v1236
        %v1260 = vunpack.c.l.b16 %v1237
        %v1261 = vunpack.c.l.b16 %v1238
        %v1262 = vunpack.c.l.b16 %v1239
        %v1263 = vunpack.c.l.b16 %v1240
        %v1264 = vpack.c.b16 %v1257, %v1256
        %v1265 = vpack.c.b16 %v1259, %v1258
        %v1266 = vpack.c.b16 %v1261, %v1260
        %v1267 = vpack.c.b16 %v1263, %v1262
        %v1273 = vsel %vm543, %v1232, 0
        %1275 = vmatprep.subr.bf16.mxu0 0
        %1276 = vmatpush1.bf16.msra.mxu0 %v1264
        %1277 = vmatprep.subr.bf16.mxu0 0
        %1278 = vmatpush1.bf16.msra.mxu0 %v1265
        %1279 = vmatprep.subr.bf16.mxu0 0
        %1280 = vmatpush1.bf16.msra.mxu0 %v1266
        %1281 = vmatprep.subr.bf16.mxu0 0
        %1282 = vmatpush1.bf16.msra.mxu0 %v1267
        %1283 = vmatprep.subr.bf16.mxu0 0
        %1284 = vmatpush1.bf16.msra.mxu0 0
        %1285 = vmatprep.subr.bf16.mxu0 0
        %1286 = vmatpush1.bf16.msra.mxu0 0
        %1287 = vmatprep.subr.bf16.mxu0 0
        %1288 = vmatpush1.bf16.msra.mxu0 0
        %1289 = vmatprep.subr.bf16.mxu0 0
        %1290 = vmatpush1.bf16.msra.mxu0 0
        %1291 = vmatprep.subr.bf16.mxu0 0
        %1292 = vmatpush1.bf16.msra.mxu0 0
        %1293 = vmatprep.subr.bf16.mxu0 0
        %1294 = vmatpush1.bf16.msra.mxu0 0
        %1295 = vmatprep.subr.bf16.mxu0 0
        %1296 = vmatpush1.bf16.msra.mxu0 0
        %1297 = vmatprep.subr.bf16.mxu0 0
        %1298 = vmatpush1.bf16.msra.mxu0 0
        %1299 = vmatprep.subr.bf16.mxu0 0
        %1300 = vmatpush1.bf16.msra.mxu0 0
        %1301 = vmatprep.subr.bf16.mxu0 0
        %1302 = vmatpush1.bf16.msra.mxu0 0
        %1303 = vmatprep.subr.bf16.mxu0 0
        %1304 = vmatpush1.bf16.msra.mxu0 0
        %1305 = vmatprep.subr.bf16.mxu0 0
        %1306 = vmatpush1.bf16.msra.mxu0 0
        %1307 = vmatprep.mubr.bf16.mxu0 0
        %1308 = vmatmul.mubr.bf16.gmra.mrb[0].mxu0 %v1273
        %v1309 = vpop.f32.mrb[0].mxu0
        %v1310 = vadd.f32 %v1246, %v1309
        %v1311 = vpop.f32.mrb[0].mxu0
        %v1312 = vpop.f32.mrb[0].mxu0
        %v1313 = vpop.f32.mrb[0].mxu0
        %1314 = vdwg.mxu0
        %v1315 = vld [vmem:[%s5] sm:$0xf]
        %v1316 = vld [vmem:[%s5 + $0x4] sm:$0xf]
        %v1317 = vld [vmem:[%s5 + $0x8] sm:$0xf]
        %v1318 = vld [vmem:[%s5 + $0xc] sm:$0xf]
        %v1319 = vld [vmem:[%s5 + $0x10] sm:$0xf]
        %v1320 = vld [vmem:[%s5 + $0x14] sm:$0xf]
        %v1321 = vld [vmem:[%s5 + $0x18] sm:$0xf]
        %v1322 = vld [vmem:[%s5 + $0x1c] sm:$0xf]
        %v1323 = vld [vmem:[%s9] sm:$0x1]
        %v1325 = vlaneseq
        %v1326 = vshrl.u32 %v1325, 7
        %v1327 = vsub.s32 0, %v1326
        %v1328 = vrot.slane %v1323, %v1327
        %v1338 = vunpack.c.l.b16 %v1315
        %v1339 = vunpack.c.l.b16 %v1316
        %v1340 = vunpack.c.l.b16 %v1317
        %v1341 = vunpack.c.l.b16 %v1318
        %v1342 = vunpack.c.l.b16 %v1319
        %v1343 = vunpack.c.l.b16 %v1320
        %v1344 = vunpack.c.l.b16 %v1321
        %v1345 = vunpack.c.l.b16 %v1322
        %v1346 = vpack.c.b16 %v1339, %v1338
        %v1347 = vpack.c.b16 %v1341, %v1340
        %v1348 = vpack.c.b16 %v1343, %v1342
        %v1349 = vpack.c.b16 %v1345, %v1344
        %v1355 = vsel %vm543, %v494, 0
        %1357 = vmatprep.subr.bf16.mxu0 0
        %1358 = vmatpush1.bf16.msra.mxu0 %v1346
        %1359 = vmatprep.subr.bf16.mxu0 0
        %1360 = vmatpush1.bf16.msra.mxu0 %v1347
        %1361 = vmatprep.subr.bf16.mxu0 0
        %1362 = vmatpush1.bf16.msra.mxu0 %v1348
        %1363 = vmatprep.subr.bf16.mxu0 0
        %1364 = vmatpush1.bf16.msra.mxu0 %v1349
        %1365 = vmatprep.subr.bf16.mxu0 0
        %1366 = vmatpush1.bf16.msra.mxu0 0
        %1367 = vmatprep.subr.bf16.mxu0 0
        %1368 = vmatpush1.bf16.msra.mxu0 0
        %1369 = vmatprep.subr.bf16.mxu0 0
        %1370 = vmatpush1.bf16.msra.mxu0 0
        %1371 = vmatprep.subr.bf16.mxu0 0
        %1372 = vmatpush1.bf16.msra.mxu0 0
        %1373 = vmatprep.subr.bf16.mxu0 0
        %1374 = vmatpush1.bf16.msra.mxu0 0
        %1375 = vmatprep.subr.bf16.mxu0 0
        %1376 = vmatpush1.bf16.msra.mxu0 0
        %1377 = vmatprep.subr.bf16.mxu0 0
        %1378 = vmatpush1.bf16.msra.mxu0 0
        %1379 = vmatprep.subr.bf16.mxu0 0
        %1380 = vmatpush1.bf16.msra.mxu0 0
        %1381 = vmatprep.subr.bf16.mxu0 0
        %1382 = vmatpush1.bf16.msra.mxu0 0
        %1383 = vmatprep.subr.bf16.mxu0 0
        %1384 = vmatpush1.bf16.msra.mxu0 0
        %1385 = vmatprep.subr.bf16.mxu0 0
        %1386 = vmatpush1.bf16.msra.mxu0 0
        %1387 = vmatprep.subr.bf16.mxu0 0
        %1388 = vmatpush1.bf16.msra.mxu0 0
        %1389 = vmatprep.mubr.bf16.mxu0 0
        %1390 = vmatmul.mubr.bf16.gmra.mrb[0].mxu0 %v1355
        %v1391 = vpop.f32.mrb[0].mxu0
        %v1392 = vadd.f32 %v1328, %v1391
        %v1393 = vpop.f32.mrb[0].mxu0
        %v1394 = vpop.f32.mrb[0].mxu0
        %v1395 = vadd.f32 %v1328, %v1394
        %v1396 = vpop.f32.mrb[0].mxu0
        %1397 = vdwg.mxu0
        %v1398 = vld [vmem:[%s6] sm:$0xf]
        %v1399 = vld [vmem:[%s6 + $0x4] sm:$0xf]
        %v1400 = vld [vmem:[%s6 + $0x8] sm:$0xf]
        %v1401 = vld [vmem:[%s6 + $0xc] sm:$0xf]
        %v1402 = vld [vmem:[%s6 + $0x10] sm:$0xf]
        %v1403 = vld [vmem:[%s6 + $0x14] sm:$0xf]
        %v1404 = vld [vmem:[%s6 + $0x18] sm:$0xf]
        %v1405 = vld [vmem:[%s6 + $0x1c] sm:$0xf]
        %v1406 = vld [vmem:[%s10] sm:$0x1]
        %v1408 = vlaneseq
        %v1409 = vshrl.u32 %v1408, 7
        %v1410 = vsub.s32 0, %v1409
        %v1411 = vrot.slane %v1406, %v1410
        %v1421 = vunpack.c.l.b16 %v1398
        %v1422 = vunpack.c.l.b16 %v1399
        %v1423 = vunpack.c.l.b16 %v1400
        %v1424 = vunpack.c.l.b16 %v1401
        %v1425 = vunpack.c.l.b16 %v1402
        %v1426 = vunpack.c.l.b16 %v1403
        %v1427 = vunpack.c.l.b16 %v1404
        %v1428 = vunpack.c.l.b16 %v1405
        %v1429 = vpack.c.b16 %v1422, %v1421
        %v1430 = vpack.c.b16 %v1424, %v1423
        %v1431 = vpack.c.b16 %v1426, %v1425
        %v1432 = vpack.c.b16 %v1428, %v1427
        %1437 = vmatprep.subr.bf16.mxu0 0
        %1438 = vmatpush1.bf16.msra.mxu0 %v1429
        %1439 = vmatprep.subr.bf16.mxu0 0
        %1440 = vmatpush1.bf16.msra.mxu0 %v1430
        %1441 = vmatprep.subr.bf16.mxu0 0
        %1442 = vmatpush1.bf16.msra.mxu0 %v1431
        %1443 = vmatprep.subr.bf16.mxu0 0
        %1444 = vmatpush1.bf16.msra.mxu0 %v1432
        %1445 = vmatprep.subr.bf16.mxu0 0
        %1446 = vmatpush1.bf16.msra.mxu0 0
        %1447 = vmatprep.subr.bf16.mxu0 0
        %1448 = vmatpush1.bf16.msra.mxu0 0
        %1449 = vmatprep.subr.bf16.mxu0 0
        %1450 = vmatpush1.bf16.msra.mxu0 0
        %1451 = vmatprep.subr.bf16.mxu0 0
        %1452 = vmatpush1.bf16.msra.mxu0 0
        %1453 = vmatprep.subr.bf16.mxu0 0
        %1454 = vmatpush1.bf16.msra.mxu0 0
        %1455 = vmatprep.subr.bf16.mxu0 0
        %1456 = vmatpush1.bf16.msra.mxu0 0
        %1457 = vmatprep.subr.bf16.mxu0 0
        %1458 = vmatpush1.bf16.msra.mxu0 0
        %1459 = vmatprep.subr.bf16.mxu0 0
        %1460 = vmatpush1.bf16.msra.mxu0 0
        %1461 = vmatprep.subr.bf16.mxu0 0
        %1462 = vmatpush1.bf16.msra.mxu0 0
        %1463 = vmatprep.subr.bf16.mxu0 0
        %1464 = vmatpush1.bf16.msra.mxu0 0
        %1465 = vmatprep.subr.bf16.mxu0 0
        %1466 = vmatpush1.bf16.msra.mxu0 0
        %1467 = vmatprep.subr.bf16.mxu0 0
        %1468 = vmatpush1.bf16.msra.mxu0 0
        %1469 = vmatprep.mubr.bf16.mxu0 0
        %1470 = vmatmul.mubr.bf16.gmra.mrb[0].mxu0 %v1355
        %v1471 = vpop.f32.mrb[0].mxu0
        %v1472 = vadd.f32 %v1411, %v1471
        %v1473 = vpop.f32.mrb[0].mxu0
        %v1474 = vpop.f32.mrb[0].mxu0
        %v1475 = vadd.f32 %v1411, %v1474
        %v1476 = vpop.f32.mrb[0].mxu0
        %1477 = vdwg.mxu0
        %1479 = vrot.lane.b32.xlu0 %v1310, 112
        %v1480 = vpop.permute.xlu0 %1479
        %1482 = vrot.lane.b32.xlu0 %v1310, 96
        %v1483 = vpop.permute.xlu0 %1482
        %1485 = vrot.lane.b32.xlu0 %v1310, 80
        %v1486 = vpop.permute.xlu0 %1485
        %v1488 = vpack.c.bf16 %v1310, %v1310
        %v1489 = vpack.c.bf16 %v1480, %v1480
        %v1490 = vpack.c.bf16 %v1483, %v1483
        %v1491 = vpack.c.bf16 %v1486, %v1486
        %1494 = vrot.lane.b32.xlu0 %v1392, 112
        %v1495 = vpop.permute.xlu0 %1494
        %1496 = vrot.lane.b32.xlu0 %v1395, 112
        %v1497 = vpop.permute.xlu0 %1496
        %1500 = vrot.lane.b32.xlu0 %v1392, 96
        %v1501 = vpop.permute.xlu0 %1500
        %1502 = vrot.lane.b32.xlu0 %v1395, 96
        %v1503 = vpop.permute.xlu0 %1502
        %1506 = vrot.lane.b32.xlu0 %v1392, 80
        %v1507 = vpop.permute.xlu0 %1506
        %1508 = vrot.lane.b32.xlu0 %v1395, 80
        %v1509 = vpop.permute.xlu0 %1508
        %v1512 = vpack.c.bf16 %v1395, %v1392
        %v1513 = vpack.c.bf16 %v1497, %v1495
        %v1514 = vpack.c.bf16 %v1503, %v1501
        %v1515 = vpack.c.bf16 %v1509, %v1507
        %1518 = vrot.lane.b32.xlu0 %v1472, 112
        %v1519 = vpop.permute.xlu0 %1518
        %1520 = vrot.lane.b32.xlu0 %v1475, 112
        %v1521 = vpop.permute.xlu0 %1520
        %1524 = vrot.lane.b32.xlu0 %v1472, 96
        %v1525 = vpop.permute.xlu0 %1524
        %1526 = vrot.lane.b32.xlu0 %v1475, 96
        %v1527 = vpop.permute.xlu0 %1526
        %1530 = vrot.lane.b32.xlu0 %v1472, 80
        %v1531 = vpop.permute.xlu0 %1530
        %1532 = vrot.lane.b32.xlu0 %v1475, 80
        %v1533 = vpop.permute.xlu0 %1532
        %v1536 = vpack.c.bf16 %v1475, %v1472
        %v1537 = vpack.c.bf16 %v1521, %v1519
        %v1538 = vpack.c.bf16 %v1527, %v1525
        %v1539 = vpack.c.bf16 %v1533, %v1531
        %vm1540 = vcmask 130048
        %v1542 = vsel %vm1540, %v1488, 0
        %v1545 = vsel %vm1540, %v1512, 0
        %1547 = vmatprep.subr.bf16.mxu0 0
        %1548 = vmatpush1.bf16.xpose.msra.mxu0 %v1545
        %1549 = vmatprep.subr.bf16.mxu0 0
        %1550 = vmatpush1.bf16.xpose.msra.mxu0 0
        %1551 = vmatprep.subr.bf16.mxu0 0
        %1552 = vmatpush1.bf16.xpose.msra.mxu0 0
        %1553 = vmatprep.subr.bf16.mxu0 0
        %1554 = vmatpush1.bf16.xpose.msra.mxu0 0
        %1555 = vmatprep.subr.bf16.mxu0 0
        %1556 = vmatpush1.bf16.xpose.msra.mxu0 0
        %1557 = vmatprep.subr.bf16.mxu0 0
        %1558 = vmatpush1.bf16.xpose.msra.mxu0 0
        %1559 = vmatprep.subr.bf16.mxu0 0
        %1560 = vmatpush1.bf16.xpose.msra.mxu0 0
        %1561 = vmatprep.subr.bf16.mxu0 0
        %1562 = vmatpush1.bf16.xpose.msra.mxu0 0
        %1563 = vmatprep.subr.bf16.mxu0 0
        %1564 = vmatpush1.bf16.xpose.msra.mxu0 0
        %1565 = vmatprep.subr.bf16.mxu0 0
        %1566 = vmatpush1.bf16.xpose.msra.mxu0 0
        %1567 = vmatprep.subr.bf16.mxu0 0
        %1568 = vmatpush1.bf16.xpose.msra.mxu0 0
        %1569 = vmatprep.subr.bf16.mxu0 0
        %1570 = vmatpush1.bf16.xpose.msra.mxu0 0
        %1571 = vmatprep.subr.bf16.mxu0 0
        %1572 = vmatpush1.bf16.xpose.msra.mxu0 0
        %1573 = vmatprep.subr.bf16.mxu0 0
        %1574 = vmatpush1.bf16.xpose.msra.mxu0 0
        %1575 = vmatprep.subr.bf16.mxu0 0
        %1576 = vmatpush1.bf16.xpose.msra.mxu0 0
        %1577 = vmatprep.subr.bf16.mxu0 0
        %1578 = vmatpush1.bf16.xpose.msra.mxu0 0
        %1579 = vmatprep.mubr.bf16.mxu0 0
        %1580 = vmatmul.mubr.bf16.gmra.mrb[0].mxu0 %v1542
        %v1581 = vpop.f32.mrb[0].mxu0
        %v1582 = vadd.f32 0.0, %v1581
        %v1583 = vpop.f32.mrb[0].mxu0
        %v1584 = vpop.f32.mrb[0].mxu0
        %v1585 = vpop.f32.mrb[0].mxu0
        %1586 = vdwg.mxu0
        %v1588 = vsel %vm1540, %v1489, 0
        %v1591 = vsel %vm1540, %v1513, 0
        %1593 = vmatprep.subr.bf16.mxu0 0
        %1594 = vmatpush1.bf16.xpose.msra.mxu0 %v1591
        %1595 = vmatprep.subr.bf16.mxu0 0
        %1596 = vmatpush1.bf16.xpose.msra.mxu0 0
        %1597 = vmatprep.subr.bf16.mxu0 0
        %1598 = vmatpush1.bf16.xpose.msra.mxu0 0
        %1599 = vmatprep.subr.bf16.mxu0 0
        %1600 = vmatpush1.bf16.xpose.msra.mxu0 0
        %1601 = vmatprep.subr.bf16.mxu0 0
        %1602 = vmatpush1.bf16.xpose.msra.mxu0 0
        %1603 = vmatprep.subr.bf16.mxu0 0
        %1604 = vmatpush1.bf16.xpose.msra.mxu0 0
        %1605 = vmatprep.subr.bf16.mxu0 0
        %1606 = vmatpush1.bf16.xpose.msra.mxu0 0
        %1607 = vmatprep.subr.bf16.mxu0 0
        %1608 = vmatpush1.bf16.xpose.msra.mxu0 0
        %1609 = vmatprep.subr.bf16.mxu0 0
        %1610 = vmatpush1.bf16.xpose.msra.mxu0 0
        %1611 = vmatprep.subr.bf16.mxu0 0
        %1612 = vmatpush1.bf16.xpose.msra.mxu0 0
        %1613 = vmatprep.subr.bf16.mxu0 0
        %1614 = vmatpush1.bf16.xpose.msra.mxu0 0
        %1615 = vmatprep.subr.bf16.mxu0 0
        %1616 = vmatpush1.bf16.xpose.msra.mxu0 0
        %1617 = vmatprep.subr.bf16.mxu0 0
        %1618 = vmatpush1.bf16.xpose.msra.mxu0 0
        %1619 = vmatprep.subr.bf16.mxu0 0
        %1620 = vmatpush1.bf16.xpose.msra.mxu0 0
        %1621 = vmatprep.subr.bf16.mxu0 0
        %1622 = vmatpush1.bf16.xpose.msra.mxu0 0
        %1623 = vmatprep.subr.bf16.mxu0 0
        %1624 = vmatpush1.bf16.xpose.msra.mxu0 0
        %1625 = vmatprep.mubr.bf16.mxu0 0
        %1626 = vmatmul.mubr.bf16.gmra.mrb[0].mxu0 %v1588
        %v1627 = vpop.f32.mrb[0].mxu0
        %v1628 = vadd.f32 0.0, %v1627
        %v1629 = vpop.f32.mrb[0].mxu0
        %v1630 = vpop.f32.mrb[0].mxu0
        %v1631 = vpop.f32.mrb[0].mxu0
        %1632 = vdwg.mxu0
        %v1634 = vsel %vm1540, %v1490, 0
        %v1637 = vsel %vm1540, %v1514, 0
        %1639 = vmatprep.subr.bf16.mxu0 0
        %1640 = vmatpush1.bf16.xpose.msra.mxu0 %v1637
        %1641 = vmatprep.subr.bf16.mxu0 0
        %1642 = vmatpush1.bf16.xpose.msra.mxu0 0
        %1643 = vmatprep.subr.bf16.mxu0 0
        %1644 = vmatpush1.bf16.xpose.msra.mxu0 0
        %1645 = vmatprep.subr.bf16.mxu0 0
        %1646 = vmatpush1.bf16.xpose.msra.mxu0 0
        %1647 = vmatprep.subr.bf16.mxu0 0
        %1648 = vmatpush1.bf16.xpose.msra.mxu0 0
        %1649 = vmatprep.subr.bf16.mxu0 0
        %1650 = vmatpush1.bf16.xpose.msra.mxu0 0
        %1651 = vmatprep.subr.bf16.mxu0 0
        %1652 = vmatpush1.bf16.xpose.msra.mxu0 0
        %1653 = vmatprep.subr.bf16.mxu0 0
        %1654 = vmatpush1.bf16.xpose.msra.mxu0 0
        %1655 = vmatprep.subr.bf16.mxu0 0
        %1656 = vmatpush1.bf16.xpose.msra.mxu0 0
        %1657 = vmatprep.subr.bf16.mxu0 0
        %1658 = vmatpush1.bf16.xpose.msra.mxu0 0
        %1659 = vmatprep.subr.bf16.mxu0 0
        %1660 = vmatpush1.bf16.xpose.msra.mxu0 0
        %1661 = vmatprep.subr.bf16.mxu0 0
        %1662 = vmatpush1.bf16.xpose.msra.mxu0 0
        %1663 = vmatprep.subr.bf16.mxu0 0
        %1664 = vmatpush1.bf16.xpose.msra.mxu0 0
        %1665 = vmatprep.subr.bf16.mxu0 0
        %1666 = vmatpush1.bf16.xpose.msra.mxu0 0
        %1667 = vmatprep.subr.bf16.mxu0 0
        %1668 = vmatpush1.bf16.xpose.msra.mxu0 0
        %1669 = vmatprep.subr.bf16.mxu0 0
        %1670 = vmatpush1.bf16.xpose.msra.mxu0 0
        %1671 = vmatprep.mubr.bf16.mxu0 0
        %1672 = vmatmul.mubr.bf16.gmra.mrb[0].mxu0 %v1634
        %v1673 = vpop.f32.mrb[0].mxu0
        %v1674 = vadd.f32 0.0, %v1673
        %v1675 = vpop.f32.mrb[0].mxu0
        %v1676 = vpop.f32.mrb[0].mxu0
        %v1677 = vpop.f32.mrb[0].mxu0
        %1678 = vdwg.mxu0
        %v1680 = vsel %vm1540, %v1491, 0
        %v1683 = vsel %vm1540, %v1515, 0
        %1685 = vmatprep.subr.bf16.mxu0 0
        %1686 = vmatpush1.bf16.xpose.msra.mxu0 %v1683
        %1687 = vmatprep.subr.bf16.mxu0 0
        %1688 = vmatpush1.bf16.xpose.msra.mxu0 0
        %1689 = vmatprep.subr.bf16.mxu0 0
        %1690 = vmatpush1.bf16.xpose.msra.mxu0 0
        %1691 = vmatprep.subr.bf16.mxu0 0
        %1692 = vmatpush1.bf16.xpose.msra.mxu0 0
        %1693 = vmatprep.subr.bf16.mxu0 0
        %1694 = vmatpush1.bf16.xpose.msra.mxu0 0
        %1695 = vmatprep.subr.bf16.mxu0 0
        %1696 = vmatpush1.bf16.xpose.msra.mxu0 0
        %1697 = vmatprep.subr.bf16.mxu0 0
        %1698 = vmatpush1.bf16.xpose.msra.mxu0 0
        %1699 = vmatprep.subr.bf16.mxu0 0
        %1700 = vmatpush1.bf16.xpose.msra.mxu0 0
        %1701 = vmatprep.subr.bf16.mxu0 0
        %1702 = vmatpush1.bf16.xpose.msra.mxu0 0
        %1703 = vmatprep.subr.bf16.mxu0 0
        %1704 = vmatpush1.bf16.xpose.msra.mxu0 0
        %1705 = vmatprep.subr.bf16.mxu0 0
        %1706 = vmatpush1.bf16.xpose.msra.mxu0 0
        %1707 = vmatprep.subr.bf16.mxu0 0
        %1708 = vmatpush1.bf16.xpose.msra.mxu0 0
        %1709 = vmatprep.subr.bf16.mxu0 0
        %1710 = vmatpush1.bf16.xpose.msra.mxu0 0
        %1711 = vmatprep.subr.bf16.mxu0 0
        %1712 = vmatpush1.bf16.xpose.msra.mxu0 0
        %1713 = vmatprep.subr.bf16.mxu0 0
        %1714 = vmatpush1.bf16.xpose.msra.mxu0 0
        %1715 = vmatprep.subr.bf16.mxu0 0
        %1716 = vmatpush1.bf16.xpose.msra.mxu0 0
        %1717 = vmatprep.mubr.bf16.mxu0 0
        %1718 = vmatmul.mubr.bf16.gmra.mrb[0].mxu0 %v1680
        %v1719 = vpop.f32.mrb[0].mxu0
        %v1720 = vadd.f32 0.0, %v1719
        %v1721 = vpop.f32.mrb[0].mxu0
        %v1722 = vpop.f32.mrb[0].mxu0
        %v1723 = vpop.f32.mrb[0].mxu0
        %1724 = vdwg.mxu0
        %v1725 = vmul.f32 %v1582, 0.25
        %v1726 = vmul.f32 %v1628, 0.25
        %v1727 = vmul.f32 %v1674, 0.25
        %v1728 = vmul.f32 %v1720, 0.25
        %vm1729 = vcmask 97280
        %v1730 = vsel %vm1729, %v1725, -inf
        %1731 = vmax.xlane.f32.xlu0 %v1730
        %v1732 = vpop.xlane.xlu0 %1731
        %v1733 = vsel %vm1729, %v1726, -inf
        %1734 = vmax.xlane.f32.xlu0 %v1733
        %v1735 = vpop.xlane.xlu0 %1734
        %v1736 = vsel %vm1729, %v1727, -inf
        %1737 = vmax.xlane.f32.xlu0 %v1736
        %v1738 = vpop.xlane.xlu0 %1737
        %v1739 = vsel %vm1729, %v1728, -inf
        %1740 = vmax.xlane.f32.xlu0 %v1739
        %v1741 = vpop.xlane.xlu0 %1740
        %v1742 = vsub.f32 %v1725, %v1732
        %v1743 = vsub.f32 %v1726, %v1735
        %v1744 = vsub.f32 %v1727, %v1738
        %v1745 = vsub.f32 %v1728, %v1741
        %v1746 = vmul.f32 %v1742, 1.442695
        %v1747 = vpow.pop %v1746
        %v1748 = vmul.f32 %v1743, 1.442695
        %v1749 = vpow.pop %v1748
        %v1750 = vmul.f32 %v1744, 1.442695
        %v1751 = vpow.pop %v1750
        %v1752 = vmul.f32 %v1745, 1.442695
        %v1753 = vpow.pop %v1752
        %v1754 = vsel %vm1729, %v1747, 0.0
        %1755 = vadd.xlane.f32.xlu0 %v1754
        %v1756 = vpop.xlane.xlu0 %1755
        %v1757 = vsel %vm1729, %v1749, 0.0
        %1758 = vadd.xlane.f32.xlu0 %v1757
        %v1759 = vpop.xlane.xlu0 %1758
        %v1760 = vsel %vm1729, %v1751, 0.0
        %1761 = vadd.xlane.f32.xlu0 %v1760
        %v1762 = vpop.xlane.xlu0 %1761
        %v1763 = vsel %vm1729, %v1753, 0.0
        %1764 = vadd.xlane.f32.xlu0 %v1763
        %v1765 = vpop.xlane.xlu0 %1764
        %v1766 = vrcp.pop %v1756
        %v1767 = vmul.f32 %v1747, %v1766
        %v1768 = vrcp.pop %v1759
        %v1769 = vmul.f32 %v1749, %v1768
        %v1770 = vrcp.pop %v1762
        %v1771 = vmul.f32 %v1751, %v1770
        %v1772 = vrcp.pop %v1765
        %v1773 = vmul.f32 %v1753, %v1772
        %v1774 = vpack.c.bf16 %v1767, %v1767
        %v1775 = vpack.c.bf16 %v1769, %v1769
        %v1776 = vpack.c.bf16 %v1771, %v1771
        %v1777 = vpack.c.bf16 %v1773, %v1773
        %v1779 = vsel %vm1729, %v1774, 0
        %vm1781 = vcmask 1045504
        %v1783 = vsel %vm1781, %v1536, 0
        %1785 = vmatprep.subr.bf16.mxu0 0
        %1786 = vmatpush1.bf16.msra.mxu0 %v1783
        %1787 = vmatprep.subr.bf16.mxu0 0
        %1788 = vmatpush1.bf16.msra.mxu0 0
        %1789 = vmatprep.subr.bf16.mxu0 0
        %1790 = vmatpush1.bf16.msra.mxu0 0
        %1791 = vmatprep.subr.bf16.mxu0 0
        %1792 = vmatpush1.bf16.msra.mxu0 0
        %1793 = vmatprep.subr.bf16.mxu0 0
        %1794 = vmatpush1.bf16.msra.mxu0 0
        %1795 = vmatprep.subr.bf16.mxu0 0
        %1796 = vmatpush1.bf16.msra.mxu0 0
        %1797 = vmatprep.subr.bf16.mxu0 0
        %1798 = vmatpush1.bf16.msra.mxu0 0
        %1799 = vmatprep.subr.bf16.mxu0 0
        %1800 = vmatpush1.bf16.msra.mxu0 0
        %1801 = vmatprep.subr.bf16.mxu0 0
        %1802 = vmatpush1.bf16.msra.mxu0 0
        %1803 = vmatprep.subr.bf16.mxu0 0
        %1804 = vmatpush1.bf16.msra.mxu0 0
        %1805 = vmatprep.subr.bf16.mxu0 0
        %1806 = vmatpush1.bf16.msra.mxu0 0
        %1807 = vmatprep.subr.bf16.mxu0 0
        %1808 = vmatpush1.bf16.msra.mxu0 0
        %1809 = vmatprep.subr.bf16.mxu0 0
        %1810 = vmatpush1.bf16.msra.mxu0 0
        %1811 = vmatprep.subr.bf16.mxu0 0
        %1812 = vmatpush1.bf16.msra.mxu0 0
        %1813 = vmatprep.subr.bf16.mxu0 0
        %1814 = vmatpush1.bf16.msra.mxu0 0
        %1815 = vmatprep.subr.bf16.mxu0 0
        %1816 = vmatpush1.bf16.msra.mxu0 0
        %1817 = vmatprep.mubr.bf16.mxu0 0
        %1818 = vmatmul.mubr.bf16.gmra.mrb[0].mxu0 %v1779
        %v1819 = vpop.f32.mrb[0].mxu0
        %v1820 = vadd.f32 0.0, %v1819
        %v1821 = vpop.f32.mrb[0].mxu0
        %v1822 = vpop.f32.mrb[0].mxu0
        %v1823 = vpop.f32.mrb[0].mxu0
        %1824 = vdwg.mxu0
        %v1826 = vsel %vm1729, %v1775, 0
        %v1829 = vsel %vm1781, %v1537, 0
        %1831 = vmatprep.subr.bf16.mxu0 0
        %1832 = vmatpush1.bf16.msra.mxu0 %v1829
        %1833 = vmatprep.subr.bf16.mxu0 0
        %1834 = vmatpush1.bf16.msra.mxu0 0
        %1835 = vmatprep.subr.bf16.mxu0 0
        %1836 = vmatpush1.bf16.msra.mxu0 0
        %1837 = vmatprep.subr.bf16.mxu0 0
        %1838 = vmatpush1.bf16.msra.mxu0 0
        %1839 = vmatprep.subr.bf16.mxu0 0
        %1840 = vmatpush1.bf16.msra.mxu0 0
        %1841 = vmatprep.subr.bf16.mxu0 0
        %1842 = vmatpush1.bf16.msra.mxu0 0
        %1843 = vmatprep.subr.bf16.mxu0 0
        %1844 = vmatpush1.bf16.msra.mxu0 0
        %1845 = vmatprep.subr.bf16.mxu0 0
        %1846 = vmatpush1.bf16.msra.mxu0 0
        %1847 = vmatprep.subr.bf16.mxu0 0
        %1848 = vmatpush1.bf16.msra.mxu0 0
        %1849 = vmatprep.subr.bf16.mxu0 0
        %1850 = vmatpush1.bf16.msra.mxu0 0
        %1851 = vmatprep.subr.bf16.mxu0 0
        %1852 = vmatpush1.bf16.msra.mxu0 0
        %1853 = vmatprep.subr.bf16.mxu0 0
        %1854 = vmatpush1.bf16.msra.mxu0 0
        %1855 = vmatprep.subr.bf16.mxu0 0
        %1856 = vmatpush1.bf16.msra.mxu0 0
        %1857 = vmatprep.subr.bf16.mxu0 0
        %1858 = vmatpush1.bf16.msra.mxu0 0
        %1859 = vmatprep.subr.bf16.mxu0 0
        %1860 = vmatpush1.bf16.msra.mxu0 0
        %1861 = vmatprep.subr.bf16.mxu0 0
        %1862 = vmatpush1.bf16.msra.mxu0 0
        %1863 = vmatprep.mubr.bf16.mxu0 0
        %1864 = vmatmul.mubr.bf16.gmra.mrb[0].mxu0 %v1826
        %v1865 = vpop.f32.mrb[0].mxu0
        %v1866 = vadd.f32 0.0, %v1865
        %v1867 = vpop.f32.mrb[0].mxu0
        %v1868 = vpop.f32.mrb[0].mxu0
        %v1869 = vpop.f32.mrb[0].mxu0
        %1870 = vdwg.mxu0
        %v1872 = vsel %vm1729, %v1776, 0
        %v1875 = vsel %vm1781, %v1538, 0
        %1877 = vmatprep.subr.bf16.mxu0 0
        %1878 = vmatpush1.bf16.msra.mxu0 %v1875
        %1879 = vmatprep.subr.bf16.mxu0 0
        %1880 = vmatpush1.bf16.msra.mxu0 0
        %1881 = vmatprep.subr.bf16.mxu0 0
        %1882 = vmatpush1.bf16.msra.mxu0 0
        %1883 = vmatprep.subr.bf16.mxu0 0
        %1884 = vmatpush1.bf16.msra.mxu0 0
        %1885 = vmatprep.subr.bf16.mxu0 0
        %1886 = vmatpush1.bf16.msra.mxu0 0
        %1887 = vmatprep.subr.bf16.mxu0 0
        %1888 = vmatpush1.bf16.msra.mxu0 0
        %1889 = vmatprep.subr.bf16.mxu0 0
        %1890 = vmatpush1.bf16.msra.mxu0 0
        %1891 = vmatprep.subr.bf16.mxu0 0
        %1892 = vmatpush1.bf16.msra.mxu0 0
        %1893 = vmatprep.subr.bf16.mxu0 0
        %1894 = vmatpush1.bf16.msra.mxu0 0
        %1895 = vmatprep.subr.bf16.mxu0 0
        %1896 = vmatpush1.bf16.msra.mxu0 0
        %1897 = vmatprep.subr.bf16.mxu0 0
        %1898 = vmatpush1.bf16.msra.mxu0 0
        %1899 = vmatprep.subr.bf16.mxu0 0
        %1900 = vmatpush1.bf16.msra.mxu0 0
        %1901 = vmatprep.subr.bf16.mxu0 0
        %1902 = vmatpush1.bf16.msra.mxu0 0
        %1903 = vmatprep.subr.bf16.mxu0 0
        %1904 = vmatpush1.bf16.msra.mxu0 0
        %1905 = vmatprep.subr.bf16.mxu0 0
        %1906 = vmatpush1.bf16.msra.mxu0 0
        %1907 = vmatprep.subr.bf16.mxu0 0
        %1908 = vmatpush1.bf16.msra.mxu0 0
        %1909 = vmatprep.mubr.bf16.mxu0 0
        %1910 = vmatmul.mubr.bf16.gmra.mrb[0].mxu0 %v1872
        %v1911 = vpop.f32.mrb[0].mxu0
        %v1912 = vadd.f32 0.0, %v1911
        %v1913 = vpop.f32.mrb[0].mxu0
        %v1914 = vpop.f32.mrb[0].mxu0
        %v1915 = vpop.f32.mrb[0].mxu0
        %1916 = vdwg.mxu0
        %v1918 = vsel %vm1729, %v1777, 0
        %v1921 = vsel %vm1781, %v1539, 0
        %1923 = vmatprep.subr.bf16.mxu0 0
        %1924 = vmatpush1.bf16.msra.mxu0 %v1921
        %1925 = vmatprep.subr.bf16.mxu0 0
        %1926 = vmatpush1.bf16.msra.mxu0 0
        %1927 = vmatprep.subr.bf16.mxu0 0
        %1928 = vmatpush1.bf16.msra.mxu0 0
        %1929 = vmatprep.subr.bf16.mxu0 0
        %1930 = vmatpush1.bf16.msra.mxu0 0
        %1931 = vmatprep.subr.bf16.mxu0 0
        %1932 = vmatpush1.bf16.msra.mxu0 0
        %1933 = vmatprep.subr.bf16.mxu0 0
        %1934 = vmatpush1.bf16.msra.mxu0 0
        %1935 = vmatprep.subr.bf16.mxu0 0
        %1936 = vmatpush1.bf16.msra.mxu0 0
        %1937 = vmatprep.subr.bf16.mxu0 0
        %1938 = vmatpush1.bf16.msra.mxu0 0
        %1939 = vmatprep.subr.bf16.mxu0 0
        %1940 = vmatpush1.bf16.msra.mxu0 0
        %1941 = vmatprep.subr.bf16.mxu0 0
        %1942 = vmatpush1.bf16.msra.mxu0 0
        %1943 = vmatprep.subr.bf16.mxu0 0
        %1944 = vmatpush1.bf16.msra.mxu0 0
        %1945 = vmatprep.subr.bf16.mxu0 0
        %1946 = vmatpush1.bf16.msra.mxu0 0
        %1947 = vmatprep.subr.bf16.mxu0 0
        %1948 = vmatpush1.bf16.msra.mxu0 0
        %1949 = vmatprep.subr.bf16.mxu0 0
        %1950 = vmatpush1.bf16.msra.mxu0 0
        %1951 = vmatprep.subr.bf16.mxu0 0
        %1952 = vmatpush1.bf16.msra.mxu0 0
        %1953 = vmatprep.subr.bf16.mxu0 0
        %1954 = vmatpush1.bf16.msra.mxu0 0
        %1955 = vmatprep.mubr.bf16.mxu0 0
        %1956 = vmatmul.mubr.bf16.gmra.mrb[0].mxu0 %v1918
        %v1957 = vpop.f32.mrb[0].mxu0
        %v1958 = vadd.f32 0.0, %v1957
        %v1959 = vpop.f32.mrb[0].mxu0
        %v1960 = vpop.f32.mrb[0].mxu0
        %v1961 = vpop.f32.mrb[0].mxu0
        %1962 = vdwg.mxu0
        %v1963 = vpack.c.bf16 %v1820, %v1820
        %v1964 = vpack.c.bf16 %v1866, %v1866
        %v1965 = vpack.c.bf16 %v1912, %v1912
        %v1966 = vpack.c.bf16 %v1958, %v1958
        %v1967 = vld [vmem:[%s7] sm:$0xf]
        %v1968 = vld [vmem:[%s7 + $0x4] sm:$0xf]
        %v1969 = vld [vmem:[%s7 + $0x8] sm:$0xf]
        %v1970 = vld [vmem:[%s7 + $0xc] sm:$0xf]
        %v1971 = vld [vmem:[%s7 + $0x10] sm:$0xf]
        %v1972 = vld [vmem:[%s7 + $0x14] sm:$0xf]
        %v1973 = vld [vmem:[%s7 + $0x18] sm:$0xf]
        %v1974 = vld [vmem:[%s7 + $0x1c] sm:$0xf]
        %v1977 = vunpack.c.l.b16 %v1967
        %v1978 = vunpack.c.l.b16 %v1968
        %v1979 = vpack.c.b16 %v1978, %v1977
        %v1982 = vsel %vm1540, %v1963, 0
        %1984 = vmatprep.subr.bf16.mxu0 0
        %1985 = vmatpush1.bf16.msra.mxu0 %v1979
        %1986 = vmatprep.subr.bf16.mxu0 0
        %1987 = vmatpush1.bf16.msra.mxu0 0
        %1988 = vmatprep.subr.bf16.mxu0 0
        %1989 = vmatpush1.bf16.msra.mxu0 0
        %1990 = vmatprep.subr.bf16.mxu0 0
        %1991 = vmatpush1.bf16.msra.mxu0 0
        %1992 = vmatprep.subr.bf16.mxu0 0
        %1993 = vmatpush1.bf16.msra.mxu0 0
        %1994 = vmatprep.subr.bf16.mxu0 0
        %1995 = vmatpush1.bf16.msra.mxu0 0
        %1996 = vmatprep.subr.bf16.mxu0 0
        %1997 = vmatpush1.bf16.msra.mxu0 0
        %1998 = vmatprep.subr.bf16.mxu0 0
        %1999 = vmatpush1.bf16.msra.mxu0 0
        %2000 = vmatprep.subr.bf16.mxu0 0
        %2001 = vmatpush1.bf16.msra.mxu0 0
        %2002 = vmatprep.subr.bf16.mxu0 0
        %2003 = vmatpush1.bf16.msra.mxu0 0
        %2004 = vmatprep.subr.bf16.mxu0 0
        %2005 = vmatpush1.bf16.msra.mxu0 0
        %2006 = vmatprep.subr.bf16.mxu0 0
        %2007 = vmatpush1.bf16.msra.mxu0 0
        %2008 = vmatprep.subr.bf16.mxu0 0
        %2009 = vmatpush1.bf16.msra.mxu0 0
        %2010 = vmatprep.subr.bf16.mxu0 0
        %2011 = vmatpush1.bf16.msra.mxu0 0
        %2012 = vmatprep.subr.bf16.mxu0 0
        %2013 = vmatpush1.bf16.msra.mxu0 0
        %2014 = vmatprep.subr.bf16.mxu0 0
        %2015 = vmatpush1.bf16.msra.mxu0 0
        %2016 = vmatprep.mubr.bf16.mxu0 0
        %2017 = vmatmul.mubr.bf16.gmra.mrb[0].mxu0 %v1982
        %v2018 = vpop.f32.mrb[0].mxu0
        %v2019 = vadd.f32 0.0, %v2018
        %v2020 = vpop.f32.mrb[0].mxu0
        %v2021 = vpop.f32.mrb[0].mxu0
        %v2022 = vpop.f32.mrb[0].mxu0
        %2023 = vdwg.mxu0
        %v2026 = vunpack.c.l.b16 %v1969
        %v2027 = vunpack.c.l.b16 %v1970
        %v2028 = vpack.c.b16 %v2027, %v2026
        %v2031 = vsel %vm1540, %v1964, 0
        %2033 = vmatprep.subr.bf16.mxu0 0
        %2034 = vmatpush1.bf16.msra.mxu0 %v2028
        %2035 = vmatprep.subr.bf16.mxu0 0
        %2036 = vmatpush1.bf16.msra.mxu0 0
        %2037 = vmatprep.subr.bf16.mxu0 0
        %2038 = vmatpush1.bf16.msra.mxu0 0
        %2039 = vmatprep.subr.bf16.mxu0 0
        %2040 = vmatpush1.bf16.msra.mxu0 0
        %2041 = vmatprep.subr.bf16.mxu0 0
        %2042 = vmatpush1.bf16.msra.mxu0 0
        %2043 = vmatprep.subr.bf16.mxu0 0
        %2044 = vmatpush1.bf16.msra.mxu0 0
        %2045 = vmatprep.subr.bf16.mxu0 0
        %2046 = vmatpush1.bf16.msra.mxu0 0
        %2047 = vmatprep.subr.bf16.mxu0 0
        %2048 = vmatpush1.bf16.msra.mxu0 0
        %2049 = vmatprep.subr.bf16.mxu0 0
        %2050 = vmatpush1.bf16.msra.mxu0 0
        %2051 = vmatprep.subr.bf16.mxu0 0
        %2052 = vmatpush1.bf16.msra.mxu0 0
        %2053 = vmatprep.subr.bf16.mxu0 0
        %2054 = vmatpush1.bf16.msra.mxu0 0
        %2055 = vmatprep.subr.bf16.mxu0 0
        %2056 = vmatpush1.bf16.msra.mxu0 0
        %2057 = vmatprep.subr.bf16.mxu0 0
        %2058 = vmatpush1.bf16.msra.mxu0 0
        %2059 = vmatprep.subr.bf16.mxu0 0
        %2060 = vmatpush1.bf16.msra.mxu0 0
        %2061 = vmatprep.subr.bf16.mxu0 0
        %2062 = vmatpush1.bf16.msra.mxu0 0
        %2063 = vmatprep.subr.bf16.mxu0 0
        %2064 = vmatpush1.bf16.msra.mxu0 0
        %2065 = vmatprep.mubr.bf16.mxu0 0
        %2066 = vmatmul.mubr.bf16.gmra.mrb[0].mxu0 %v2031
        %v2067 = vpop.f32.mrb[0].mxu0
        %v2068 = vadd.f32 0.0, %v2067
        %v2069 = vpop.f32.mrb[0].mxu0
        %v2070 = vpop.f32.mrb[0].mxu0
        %v2071 = vpop.f32.mrb[0].mxu0
        %2072 = vdwg.mxu0
        %v2075 = vunpack.c.l.b16 %v1971
        %v2076 = vunpack.c.l.b16 %v1972
        %v2077 = vpack.c.b16 %v2076, %v2075
        %v2080 = vsel %vm1540, %v1965, 0
        %2082 = vmatprep.subr.bf16.mxu0 0
        %2083 = vmatpush1.bf16.msra.mxu0 %v2077
        %2084 = vmatprep.subr.bf16.mxu0 0
        %2085 = vmatpush1.bf16.msra.mxu0 0
        %2086 = vmatprep.subr.bf16.mxu0 0
        %2087 = vmatpush1.bf16.msra.mxu0 0
        %2088 = vmatprep.subr.bf16.mxu0 0
        %2089 = vmatpush1.bf16.msra.mxu0 0
        %2090 = vmatprep.subr.bf16.mxu0 0
        %2091 = vmatpush1.bf16.msra.mxu0 0
        %2092 = vmatprep.subr.bf16.mxu0 0
        %2093 = vmatpush1.bf16.msra.mxu0 0
        %2094 = vmatprep.subr.bf16.mxu0 0
        %2095 = vmatpush1.bf16.msra.mxu0 0
        %2096 = vmatprep.subr.bf16.mxu0 0
        %2097 = vmatpush1.bf16.msra.mxu0 0
        %2098 = vmatprep.subr.bf16.mxu0 0
        %2099 = vmatpush1.bf16.msra.mxu0 0
        %2100 = vmatprep.subr.bf16.mxu0 0
        %2101 = vmatpush1.bf16.msra.mxu0 0
        %2102 = vmatprep.subr.bf16.mxu0 0
        %2103 = vmatpush1.bf16.msra.mxu0 0
        %2104 = vmatprep.subr.bf16.mxu0 0
        %2105 = vmatpush1.bf16.msra.mxu0 0
        %2106 = vmatprep.subr.bf16.mxu0 0
        %2107 = vmatpush1.bf16.msra.mxu0 0
        %2108 = vmatprep.subr.bf16.mxu0 0
        %2109 = vmatpush1.bf16.msra.mxu0 0
        %2110 = vmatprep.subr.bf16.mxu0 0
        %2111 = vmatpush1.bf16.msra.mxu0 0
        %2112 = vmatprep.subr.bf16.mxu0 0
        %2113 = vmatpush1.bf16.msra.mxu0 0
        %2114 = vmatprep.mubr.bf16.mxu0 0
        %2115 = vmatmul.mubr.bf16.gmra.mrb[0].mxu0 %v2080
        %v2116 = vpop.f32.mrb[0].mxu0
        %v2117 = vadd.f32 0.0, %v2116
        %v2118 = vpop.f32.mrb[0].mxu0
        %v2119 = vpop.f32.mrb[0].mxu0
        %v2120 = vpop.f32.mrb[0].mxu0
        %2121 = vdwg.mxu0
        %v2124 = vunpack.c.l.b16 %v1973
        %v2125 = vunpack.c.l.b16 %v1974
        %v2126 = vpack.c.b16 %v2125, %v2124
        %v2129 = vsel %vm1540, %v1966, 0
        %2131 = vmatprep.subr.bf16.mxu0 0
        %2132 = vmatpush1.bf16.msra.mxu0 %v2126
        %2133 = vmatprep.subr.bf16.mxu0 0
        %2134 = vmatpush1.bf16.msra.mxu0 0
        %2135 = vmatprep.subr.bf16.mxu0 0
        %2136 = vmatpush1.bf16.msra.mxu0 0
        %2137 = vmatprep.subr.bf16.mxu0 0
        %2138 = vmatpush1.bf16.msra.mxu0 0
        %2139 = vmatprep.subr.bf16.mxu0 0
        %2140 = vmatpush1.bf16.msra.mxu0 0
        %2141 = vmatprep.subr.bf16.mxu0 0
        %2142 = vmatpush1.bf16.msra.mxu0 0
        %2143 = vmatprep.subr.bf16.mxu0 0
        %2144 = vmatpush1.bf16.msra.mxu0 0
        %2145 = vmatprep.subr.bf16.mxu0 0
        %2146 = vmatpush1.bf16.msra.mxu0 0
        %2147 = vmatprep.subr.bf16.mxu0 0
        %2148 = vmatpush1.bf16.msra.mxu0 0
        %2149 = vmatprep.subr.bf16.mxu0 0
        %2150 = vmatpush1.bf16.msra.mxu0 0
        %2151 = vmatprep.subr.bf16.mxu0 0
        %2152 = vmatpush1.bf16.msra.mxu0 0
        %2153 = vmatprep.subr.bf16.mxu0 0
        %2154 = vmatpush1.bf16.msra.mxu0 0
        %2155 = vmatprep.subr.bf16.mxu0 0
        %2156 = vmatpush1.bf16.msra.mxu0 0
        %2157 = vmatprep.subr.bf16.mxu0 0
        %2158 = vmatpush1.bf16.msra.mxu0 0
        %2159 = vmatprep.subr.bf16.mxu0 0
        %2160 = vmatpush1.bf16.msra.mxu0 0
        %2161 = vmatprep.subr.bf16.mxu0 0
        %2162 = vmatpush1.bf16.msra.mxu0 0
        %2163 = vmatprep.mubr.bf16.mxu0 0
        %2164 = vmatmul.mubr.bf16.gmra.mrb[0].mxu0 %v2129
        %v2165 = vpop.f32.mrb[0].mxu0
        %v2166 = vadd.f32 0.0, %v2165
        %v2167 = vpop.f32.mrb[0].mxu0
        %v2168 = vpop.f32.mrb[0].mxu0
        %v2169 = vpop.f32.mrb[0].mxu0
        %2170 = vdwg.mxu0
        %v2171 = vsel %vm543, %v2019, 0.0
        %v2172 = vsel %vm543, %v2068, 0.0
        %v2173 = vadd.f32 %v2171, %v2172
        %v2174 = vsel %vm543, %v2117, 0.0
        %v2175 = vadd.f32 %v2173, %v2174
        %v2176 = vsel %vm543, %v2166, 0.0
        %v2177 = vadd.f32 %v2175, %v2176
        %v2178 = vadd.f32 %v1231, %v2177
        %v2179 = vld [vmem:[%s11] sm:$0x1]
        %v2181 = vlaneseq
        %v2182 = vshrl.u32 %v2181, 7
        %v2183 = vsub.s32 0, %v2182
        %v2184 = vrot.slane %v2179, %v2183
        %v2186 = vadd.f32 %v2178, %v2184
        %v2187 = vrot.slane %v2186, 7
        %v2188 = vmul.f32 %v2187, %v488
        %v2189 = vpack.c.bf16 %v2188, %v2188
        %v2190 = vrot.slane %v2186, 1
        %v2191 = vmul.f32 %v2190, %v490
        %v2192 = vpack.c.bf16 %v2191, %v2191
        %s2193 = scalar_lea.vmem %s2, 288
        %v2194 = vld [vmem:[%s2193] sm:$0xf]
        %v2195 = vld [vmem:[%s2193 + $0x4] sm:$0xf]
        %v2196 = vld [vmem:[%s2193 + $0x8] sm:$0xf]
        %v2197 = vld [vmem:[%s2193 + $0xc] sm:$0xf]
        %v2198 = vld [vmem:[%s2193 + $0x10] sm:$0xf]
        %v2199 = vld [vmem:[%s2193 + $0x14] sm:$0xf]
        %v2200 = vld [vmem:[%s2193 + $0x18] sm:$0xf]
        %v2201 = vld [vmem:[%s2193 + $0x1c] sm:$0xf]
        %v2202 = vpack.c.bf16 %v2186, %v2186
        %s2203 = scalar_lea.vmem %s2, 320
        %v2204 = vld [vmem:[%s2203] sm:$0xf]
        %v2205 = vld [vmem:[%s2203 + $0x4] sm:$0xf]
        %v2206 = vld [vmem:[%s2203 + $0x8] sm:$0xf]
        %v2207 = vld [vmem:[%s2203 + $0xc] sm:$0xf]
        %v2208 = vld [vmem:[%s2203 + $0x10] sm:$0xf]
        %v2209 = vld [vmem:[%s2203 + $0x14] sm:$0xf]
        %v2210 = vld [vmem:[%s2203 + $0x18] sm:$0xf]
        %v2211 = vld [vmem:[%s2203 + $0x1c] sm:$0xf]
        %v2220 = vunpack.c.l.b16 %v2204
        %v2221 = vunpack.c.l.b16 %v2205
        %v2222 = vunpack.c.l.b16 %v2206
        %v2223 = vunpack.c.l.b16 %v2207
        %v2224 = vunpack.c.l.b16 %v2208
        %v2225 = vunpack.c.l.b16 %v2209
        %v2226 = vunpack.c.l.b16 %v2210
        %v2227 = vunpack.c.l.b16 %v2211
        %v2228 = vpack.c.b16 %v2221, %v2220
        %v2229 = vpack.c.b16 %v2223, %v2222
        %v2230 = vpack.c.b16 %v2225, %v2224
        %v2231 = vpack.c.b16 %v2227, %v2226
        %v2237 = vsel %vm543, %v2202, 0
        %2239 = vmatprep.subr.bf16.mxu0 0
        %2240 = vmatpush1.bf16.msra.mxu0 %v2228
        %2241 = vmatprep.subr.bf16.mxu0 0
        %2242 = vmatpush1.bf16.msra.mxu0 %v2229
        %2243 = vmatprep.subr.bf16.mxu0 0
        %2244 = vmatpush1.bf16.msra.mxu0 %v2230
        %2245 = vmatprep.subr.bf16.mxu0 0
        %2246 = vmatpush1.bf16.msra.mxu0 %v2231
        %2247 = vmatprep.subr.bf16.mxu0 0
        %2248 = vmatpush1.bf16.msra.mxu0 0
        %2249 = vmatprep.subr.bf16.mxu0 0
        %2250 = vmatpush1.bf16.msra.mxu0 0
        %2251 = vmatprep.subr.bf16.mxu0 0
        %2252 = vmatpush1.bf16.msra.mxu0 0
        %2253 = vmatprep.subr.bf16.mxu0 0
        %2254 = vmatpush1.bf16.msra.mxu0 0
        %2255 = vmatprep.subr.bf16.mxu0 0
        %2256 = vmatpush1.bf16.msra.mxu0 0
        %2257 = vmatprep.subr.bf16.mxu0 0
        %2258 = vmatpush1.bf16.msra.mxu0 0
        %2259 = vmatprep.subr.bf16.mxu0 0
        %2260 = vmatpush1.bf16.msra.mxu0 0
        %2261 = vmatprep.subr.bf16.mxu0 0
        %2262 = vmatpush1.bf16.msra.mxu0 0
        %2263 = vmatprep.subr.bf16.mxu0 0
        %2264 = vmatpush1.bf16.msra.mxu0 0
        %2265 = vmatprep.subr.bf16.mxu0 0
        %2266 = vmatpush1.bf16.msra.mxu0 0
        %2267 = vmatprep.subr.bf16.mxu0 0
        %2268 = vmatpush1.bf16.msra.mxu0 0
        %2269 = vmatprep.subr.bf16.mxu0 0
        %2270 = vmatpush1.bf16.msra.mxu0 0
        %2271 = vmatprep.mubr.bf16.mxu0 0
        %2272 = vmatmul.mubr.bf16.gmra.mrb[0].mxu0 %v2237
        %v2273 = vpop.f32.mrb[0].mxu0
        %v2274 = vadd.f32 0.0, %v2273
        %v2275 = vpop.f32.mrb[0].mxu0
        %v2276 = vpop.f32.mrb[0].mxu0
        %v2277 = vpop.f32.mrb[0].mxu0
        %2278 = vdwg.mxu0
        %v2287 = vunpack.c.l.b16 %v2194
        %v2288 = vunpack.c.l.b16 %v2195
        %v2289 = vunpack.c.l.b16 %v2196
        %v2290 = vunpack.c.l.b16 %v2197
        %v2291 = vunpack.c.l.b16 %v2198
        %v2292 = vunpack.c.l.b16 %v2199
        %v2293 = vunpack.c.l.b16 %v2200
        %v2294 = vunpack.c.l.b16 %v2201
        %v2295 = vpack.c.b16 %v2288, %v2287
        %v2296 = vpack.c.b16 %v2290, %v2289
        %v2297 = vpack.c.b16 %v2292, %v2291
        %v2298 = vpack.c.b16 %v2294, %v2293
        %v2304 = vsel %vm543, %v2189, 0
        %2306 = vmatprep.subr.bf16.mxu0 0
        %2307 = vmatpush1.bf16.msra.mxu0 %v2295
        %2308 = vmatprep.subr.bf16.mxu0 0
        %2309 = vmatpush1.bf16.msra.mxu0 %v2296
        %2310 = vmatprep.subr.bf16.mxu0 0
        %2311 = vmatpush1.bf16.msra.mxu0 %v2297
        %2312 = vmatprep.subr.bf16.mxu0 0
        %2313 = vmatpush1.bf16.msra.mxu0 %v2298
        %2314 = vmatprep.subr.bf16.mxu0 0
        %2315 = vmatpush1.bf16.msra.mxu0 0
        %2316 = vmatprep.subr.bf16.mxu0 0
        %2317 = vmatpush1.bf16.msra.mxu0 0
        %2318 = vmatprep.subr.bf16.mxu0 0
        %2319 = vmatpush1.bf16.msra.mxu0 0
        %2320 = vmatprep.subr.bf16.mxu0 0
        %2321 = vmatpush1.bf16.msra.mxu0 0
        %2322 = vmatprep.subr.bf16.mxu0 0
        %2323 = vmatpush1.bf16.msra.mxu0 0
        %2324 = vmatprep.subr.bf16.mxu0 0
        %2325 = vmatpush1.bf16.msra.mxu0 0
        %2326 = vmatprep.subr.bf16.mxu0 0
        %2327 = vmatpush1.bf16.msra.mxu0 0
        %2328 = vmatprep.subr.bf16.mxu0 0
        %2329 = vmatpush1.bf16.msra.mxu0 0
        %2330 = vmatprep.subr.bf16.mxu0 0
        %2331 = vmatpush1.bf16.msra.mxu0 0
        %2332 = vmatprep.subr.bf16.mxu0 0
        %2333 = vmatpush1.bf16.msra.mxu0 0
        %2334 = vmatprep.subr.bf16.mxu0 0
        %2335 = vmatpush1.bf16.msra.mxu0 0
        %2336 = vmatprep.subr.bf16.mxu0 0
        %2337 = vmatpush1.bf16.msra.mxu0 0
        %2338 = vmatprep.mubr.bf16.mxu0 0
        %2339 = vmatmul.mubr.bf16.gmra.mrb[0].mxu0 %v2304
        %v2340 = vpop.f32.mrb[0].mxu0
        %v2341 = vadd.f32 %v2274, %v2340
        %v2342 = vpop.f32.mrb[0].mxu0
        %v2343 = vpop.f32.mrb[0].mxu0
        %v2344 = vpop.f32.mrb[0].mxu0
        %2345 = vdwg.mxu0
        %s2346 = scalar_lea.vmem %s2, 352
        %v2347 = vld [vmem:[%s2346] sm:$0xf]
        %v2348 = vld [vmem:[%s2346 + $0x4] sm:$0xf]
        %v2349 = vld [vmem:[%s2346 + $0x8] sm:$0xf]
        %v2350 = vld [vmem:[%s2346 + $0xc] sm:$0xf]
        %v2351 = vld [vmem:[%s2346 + $0x10] sm:$0xf]
        %v2352 = vld [vmem:[%s2346 + $0x14] sm:$0xf]
        %v2353 = vld [vmem:[%s2346 + $0x18] sm:$0xf]
        %v2354 = vld [vmem:[%s2346 + $0x1c] sm:$0xf]
        %v2363 = vunpack.c.l.b16 %v2347
        %v2364 = vunpack.c.l.b16 %v2348
        %v2365 = vunpack.c.l.b16 %v2349
        %v2366 = vunpack.c.l.b16 %v2350
        %v2367 = vunpack.c.l.b16 %v2351
        %v2368 = vunpack.c.l.b16 %v2352
        %v2369 = vunpack.c.l.b16 %v2353
        %v2370 = vunpack.c.l.b16 %v2354
        %v2371 = vpack.c.b16 %v2364, %v2363
        %v2372 = vpack.c.b16 %v2366, %v2365
        %v2373 = vpack.c.b16 %v2368, %v2367
        %v2374 = vpack.c.b16 %v2370, %v2369
        %v2380 = vsel %vm543, %v2192, 0
        %2382 = vmatprep.subr.bf16.mxu0 0
        %2383 = vmatpush1.bf16.msra.mxu0 %v2371
        %2384 = vmatprep.subr.bf16.mxu0 0
        %2385 = vmatpush1.bf16.msra.mxu0 %v2372
        %2386 = vmatprep.subr.bf16.mxu0 0
        %2387 = vmatpush1.bf16.msra.mxu0 %v2373
        %2388 = vmatprep.subr.bf16.mxu0 0
        %2389 = vmatpush1.bf16.msra.mxu0 %v2374
        %2390 = vmatprep.subr.bf16.mxu0 0
        %2391 = vmatpush1.bf16.msra.mxu0 0
        %2392 = vmatprep.subr.bf16.mxu0 0
        %2393 = vmatpush1.bf16.msra.mxu0 0
        %2394 = vmatprep.subr.bf16.mxu0 0
        %2395 = vmatpush1.bf16.msra.mxu0 0
        %2396 = vmatprep.subr.bf16.mxu0 0
        %2397 = vmatpush1.bf16.msra.mxu0 0
        %2398 = vmatprep.subr.bf16.mxu0 0
        %2399 = vmatpush1.bf16.msra.mxu0 0
        %2400 = vmatprep.subr.bf16.mxu0 0
        %2401 = vmatpush1.bf16.msra.mxu0 0
        %2402 = vmatprep.subr.bf16.mxu0 0
        %2403 = vmatpush1.bf16.msra.mxu0 0
        %2404 = vmatprep.subr.bf16.mxu0 0
        %2405 = vmatpush1.bf16.msra.mxu0 0
        %2406 = vmatprep.subr.bf16.mxu0 0
        %2407 = vmatpush1.bf16.msra.mxu0 0
        %2408 = vmatprep.subr.bf16.mxu0 0
        %2409 = vmatpush1.bf16.msra.mxu0 0
        %2410 = vmatprep.subr.bf16.mxu0 0
        %2411 = vmatpush1.bf16.msra.mxu0 0
        %2412 = vmatprep.subr.bf16.mxu0 0
        %2413 = vmatpush1.bf16.msra.mxu0 0
        %2414 = vmatprep.mubr.bf16.mxu0 0
        %2415 = vmatmul.mubr.bf16.gmra.mrb[0].mxu0 %v2380
        %v2416 = vpop.f32.mrb[0].mxu0
        %v2417 = vadd.f32 0.0, %v2416
        %v2418 = vpop.f32.mrb[0].mxu0
        %v2419 = vpop.f32.mrb[0].mxu0
        %v2420 = vpop.f32.mrb[0].mxu0
        %2421 = vdwg.mxu0
        %v2422 = vadd.f32 %v2341, %v2417
        %s2423 = scalar_lea.vmem %s3, 3
        %v2424 = vld [vmem:[%s2423] sm:$0x1]
        %v2426 = vlaneseq
        %v2427 = vshrl.u32 %v2426, 7
        %v2428 = vsub.s32 0, %v2427
        %v2429 = vrot.slane %v2424, %v2428
        %v2431 = vadd.f32 %v2422, %v2429
        %v2432 = vmax.f32 %v2431, 0.0
        %v2433 = vrot.slane %v2432, 7
        %v2434 = vmul.f32 %v2433, %v488
        %v2435 = vpack.c.bf16 %v2434, %v2434
        %v2436 = vrot.slane %v2432, 1
        %v2437 = vmul.f32 %v2436, %v490
        %v2438 = vpack.c.bf16 %v2437, %v2437
        %s2439 = scalar_lea.vmem %s2, 384
        %v2440 = vld [vmem:[%s2439] sm:$0xf]
        %v2441 = vld [vmem:[%s2439 + $0x4] sm:$0xf]
        %v2442 = vld [vmem:[%s2439 + $0x8] sm:$0xf]
        %v2443 = vld [vmem:[%s2439 + $0xc] sm:$0xf]
        %v2444 = vld [vmem:[%s2439 + $0x10] sm:$0xf]
        %v2445 = vld [vmem:[%s2439 + $0x14] sm:$0xf]
        %v2446 = vld [vmem:[%s2439 + $0x18] sm:$0xf]
        %v2447 = vld [vmem:[%s2439 + $0x1c] sm:$0xf]
        %v2448 = vpack.c.bf16 %v2432, %v2432
        %s2449 = scalar_lea.vmem %s2, 416
        %v2450 = vld [vmem:[%s2449] sm:$0xf]
        %v2451 = vld [vmem:[%s2449 + $0x4] sm:$0xf]
        %v2452 = vld [vmem:[%s2449 + $0x8] sm:$0xf]
        %v2453 = vld [vmem:[%s2449 + $0xc] sm:$0xf]
        %v2454 = vld [vmem:[%s2449 + $0x10] sm:$0xf]
        %v2455 = vld [vmem:[%s2449 + $0x14] sm:$0xf]
        %v2456 = vld [vmem:[%s2449 + $0x18] sm:$0xf]
        %v2457 = vld [vmem:[%s2449 + $0x1c] sm:$0xf]
        %v2466 = vunpack.c.l.b16 %v2450
        %v2467 = vunpack.c.l.b16 %v2451
        %v2468 = vunpack.c.l.b16 %v2452
        %v2469 = vunpack.c.l.b16 %v2453
        %v2470 = vunpack.c.l.b16 %v2454
        %v2471 = vunpack.c.l.b16 %v2455
        %v2472 = vunpack.c.l.b16 %v2456
        %v2473 = vunpack.c.l.b16 %v2457
        %v2474 = vpack.c.b16 %v2467, %v2466
        %v2475 = vpack.c.b16 %v2469, %v2468
        %v2476 = vpack.c.b16 %v2471, %v2470
        %v2477 = vpack.c.b16 %v2473, %v2472
        %v2483 = vsel %vm543, %v2448, 0
        %2485 = vmatprep.subr.bf16.mxu0 0
        %2486 = vmatpush1.bf16.msra.mxu0 %v2474
        %2487 = vmatprep.subr.bf16.mxu0 0
        %2488 = vmatpush1.bf16.msra.mxu0 %v2475
        %2489 = vmatprep.subr.bf16.mxu0 0
        %2490 = vmatpush1.bf16.msra.mxu0 %v2476
        %2491 = vmatprep.subr.bf16.mxu0 0
        %2492 = vmatpush1.bf16.msra.mxu0 %v2477
        %2493 = vmatprep.subr.bf16.mxu0 0
        %2494 = vmatpush1.bf16.msra.mxu0 0
        %2495 = vmatprep.subr.bf16.mxu0 0
        %2496 = vmatpush1.bf16.msra.mxu0 0
        %2497 = vmatprep.subr.bf16.mxu0 0
        %2498 = vmatpush1.bf16.msra.mxu0 0
        %2499 = vmatprep.subr.bf16.mxu0 0
        %2500 = vmatpush1.bf16.msra.mxu0 0
        %2501 = vmatprep.subr.bf16.mxu0 0
        %2502 = vmatpush1.bf16.msra.mxu0 0
        %2503 = vmatprep.subr.bf16.mxu0 0
        %2504 = vmatpush1.bf16.msra.mxu0 0
        %2505 = vmatprep.subr.bf16.mxu0 0
        %2506 = vmatpush1.bf16.msra.mxu0 0
        %2507 = vmatprep.subr.bf16.mxu0 0
        %2508 = vmatpush1.bf16.msra.mxu0 0
        %2509 = vmatprep.subr.bf16.mxu0 0
        %2510 = vmatpush1.bf16.msra.mxu0 0
        %2511 = vmatprep.subr.bf16.mxu0 0
        %2512 = vmatpush1.bf16.msra.mxu0 0
        %2513 = vmatprep.subr.bf16.mxu0 0
        %2514 = vmatpush1.bf16.msra.mxu0 0
        %2515 = vmatprep.subr.bf16.mxu0 0
        %2516 = vmatpush1.bf16.msra.mxu0 0
        %2517 = vmatprep.mubr.bf16.mxu0 0
        %2518 = vmatmul.mubr.bf16.gmra.mrb[0].mxu0 %v2483
        %v2519 = vpop.f32.mrb[0].mxu0
        %v2520 = vadd.f32 0.0, %v2519
        %v2521 = vpop.f32.mrb[0].mxu0
        %v2522 = vpop.f32.mrb[0].mxu0
        %v2523 = vpop.f32.mrb[0].mxu0
        %2524 = vdwg.mxu0
        %v2533 = vunpack.c.l.b16 %v2440
        %v2534 = vunpack.c.l.b16 %v2441
        %v2535 = vunpack.c.l.b16 %v2442
        %v2536 = vunpack.c.l.b16 %v2443
        %v2537 = vunpack.c.l.b16 %v2444
        %v2538 = vunpack.c.l.b16 %v2445
        %v2539 = vunpack.c.l.b16 %v2446
        %v2540 = vunpack.c.l.b16 %v2447
        %v2541 = vpack.c.b16 %v2534, %v2533
        %v2542 = vpack.c.b16 %v2536, %v2535
        %v2543 = vpack.c.b16 %v2538, %v2537
        %v2544 = vpack.c.b16 %v2540, %v2539
        %v2550 = vsel %vm543, %v2435, 0
        %2552 = vmatprep.subr.bf16.mxu0 0
        %2553 = vmatpush1.bf16.msra.mxu0 %v2541
        %2554 = vmatprep.subr.bf16.mxu0 0
        %2555 = vmatpush1.bf16.msra.mxu0 %v2542
        %2556 = vmatprep.subr.bf16.mxu0 0
        %2557 = vmatpush1.bf16.msra.mxu0 %v2543
        %2558 = vmatprep.subr.bf16.mxu0 0
        %2559 = vmatpush1.bf16.msra.mxu0 %v2544
        %2560 = vmatprep.subr.bf16.mxu0 0
        %2561 = vmatpush1.bf16.msra.mxu0 0
        %2562 = vmatprep.subr.bf16.mxu0 0
        %2563 = vmatpush1.bf16.msra.mxu0 0
        %2564 = vmatprep.subr.bf16.mxu0 0
        %2565 = vmatpush1.bf16.msra.mxu0 0
        %2566 = vmatprep.subr.bf16.mxu0 0
        %2567 = vmatpush1.bf16.msra.mxu0 0
        %2568 = vmatprep.subr.bf16.mxu0 0
        %2569 = vmatpush1.bf16.msra.mxu0 0
        %2570 = vmatprep.subr.bf16.mxu0 0
        %2571 = vmatpush1.bf16.msra.mxu0 0
        %2572 = vmatprep.subr.bf16.mxu0 0
        %2573 = vmatpush1.bf16.msra.mxu0 0
        %2574 = vmatprep.subr.bf16.mxu0 0
        %2575 = vmatpush1.bf16.msra.mxu0 0
        %2576 = vmatprep.subr.bf16.mxu0 0
        %2577 = vmatpush1.bf16.msra.mxu0 0
        %2578 = vmatprep.subr.bf16.mxu0 0
        %2579 = vmatpush1.bf16.msra.mxu0 0
        %2580 = vmatprep.subr.bf16.mxu0 0
        %2581 = vmatpush1.bf16.msra.mxu0 0
        %2582 = vmatprep.subr.bf16.mxu0 0
        %2583 = vmatpush1.bf16.msra.mxu0 0
        %2584 = vmatprep.mubr.bf16.mxu0 0
        %2585 = vmatmul.mubr.bf16.gmra.mrb[0].mxu0 %v2550
        %v2586 = vpop.f32.mrb[0].mxu0
        %v2587 = vadd.f32 %v2520, %v2586
        %v2588 = vpop.f32.mrb[0].mxu0
        %v2589 = vpop.f32.mrb[0].mxu0
        %v2590 = vpop.f32.mrb[0].mxu0
        %2591 = vdwg.mxu0
        %s2592 = scalar_lea.vmem %s2, 448
        %v2593 = vld [vmem:[%s2592] sm:$0xf]
        %v2594 = vld [vmem:[%s2592 + $0x4] sm:$0xf]
        %v2595 = vld [vmem:[%s2592 + $0x8] sm:$0xf]
        %v2596 = vld [vmem:[%s2592 + $0xc] sm:$0xf]
        %v2597 = vld [vmem:[%s2592 + $0x10] sm:$0xf]
        %v2598 = vld [vmem:[%s2592 + $0x14] sm:$0xf]
        %v2599 = vld [vmem:[%s2592 + $0x18] sm:$0xf]
        %v2600 = vld [vmem:[%s2592 + $0x1c] sm:$0xf]
        %v2609 = vunpack.c.l.b16 %v2593
        %v2610 = vunpack.c.l.b16 %v2594
        %v2611 = vunpack.c.l.b16 %v2595
        %v2612 = vunpack.c.l.b16 %v2596
        %v2613 = vunpack.c.l.b16 %v2597
        %v2614 = vunpack.c.l.b16 %v2598
        %v2615 = vunpack.c.l.b16 %v2599
        %v2616 = vunpack.c.l.b16 %v2600
        %v2617 = vpack.c.b16 %v2610, %v2609
        %v2618 = vpack.c.b16 %v2612, %v2611
        %v2619 = vpack.c.b16 %v2614, %v2613
        %v2620 = vpack.c.b16 %v2616, %v2615
        %v2626 = vsel %vm543, %v2438, 0
        %2628 = vmatprep.subr.bf16.mxu0 0
        %2629 = vmatpush1.bf16.msra.mxu0 %v2617
        %2630 = vmatprep.subr.bf16.mxu0 0
        %2631 = vmatpush1.bf16.msra.mxu0 %v2618
        %2632 = vmatprep.subr.bf16.mxu0 0
        %2633 = vmatpush1.bf16.msra.mxu0 %v2619
        %2634 = vmatprep.subr.bf16.mxu0 0
        %2635 = vmatpush1.bf16.msra.mxu0 %v2620
        %2636 = vmatprep.subr.bf16.mxu0 0
        %2637 = vmatpush1.bf16.msra.mxu0 0
        %2638 = vmatprep.subr.bf16.mxu0 0
        %2639 = vmatpush1.bf16.msra.mxu0 0
        %2640 = vmatprep.subr.bf16.mxu0 0
        %2641 = vmatpush1.bf16.msra.mxu0 0
        %2642 = vmatprep.subr.bf16.mxu0 0
        %2643 = vmatpush1.bf16.msra.mxu0 0
        %2644 = vmatprep.subr.bf16.mxu0 0
        %2645 = vmatpush1.bf16.msra.mxu0 0
        %2646 = vmatprep.subr.bf16.mxu0 0
        %2647 = vmatpush1.bf16.msra.mxu0 0
        %2648 = vmatprep.subr.bf16.mxu0 0
        %2649 = vmatpush1.bf16.msra.mxu0 0
        %2650 = vmatprep.subr.bf16.mxu0 0
        %2651 = vmatpush1.bf16.msra.mxu0 0
        %2652 = vmatprep.subr.bf16.mxu0 0
        %2653 = vmatpush1.bf16.msra.mxu0 0
        %2654 = vmatprep.subr.bf16.mxu0 0
        %2655 = vmatpush1.bf16.msra.mxu0 0
        %2656 = vmatprep.subr.bf16.mxu0 0
        %2657 = vmatpush1.bf16.msra.mxu0 0
        %2658 = vmatprep.subr.bf16.mxu0 0
        %2659 = vmatpush1.bf16.msra.mxu0 0
        %2660 = vmatprep.mubr.bf16.mxu0 0
        %2661 = vmatmul.mubr.bf16.gmra.mrb[0].mxu0 %v2626
        %v2662 = vpop.f32.mrb[0].mxu0
        %v2663 = vadd.f32 0.0, %v2662
        %v2664 = vpop.f32.mrb[0].mxu0
        %v2665 = vpop.f32.mrb[0].mxu0
        %v2666 = vpop.f32.mrb[0].mxu0
        %2667 = vdwg.mxu0
        %v2668 = vadd.f32 %v2587, %v2663
        %s2669 = scalar_lea.vmem %s3, 4
        %v2670 = vld [vmem:[%s2669] sm:$0x1]
        %v2672 = vlaneseq
        %v2673 = vshrl.u32 %v2672, 7
        %v2674 = vsub.s32 0, %v2673
        %v2675 = vrot.slane %v2670, %v2674
        %v2677 = vadd.f32 %v2668, %v2675
        %v2678 = vmax.f32 %v2677, 0.0
        %v2679 = vrot.slane %v2678, 7
        %v2680 = vmul.f32 %v2679, %v488
        %v2681 = vpack.c.bf16 %v2680, %v2680
        %v2682 = vrot.slane %v2678, 1
        %v2683 = vmul.f32 %v2682, %v490
        %v2684 = vpack.c.bf16 %v2683, %v2683
        %s2685 = scalar_lea.vmem %s2, 480
        %v2686 = vld [vmem:[%s2685] sm:$0xf]
        %v2687 = vld [vmem:[%s2685 + $0x4] sm:$0xf]
        %v2688 = vld [vmem:[%s2685 + $0x8] sm:$0xf]
        %v2689 = vld [vmem:[%s2685 + $0xc] sm:$0xf]
        %v2690 = vld [vmem:[%s2685 + $0x10] sm:$0xf]
        %v2691 = vld [vmem:[%s2685 + $0x14] sm:$0xf]
        %v2692 = vld [vmem:[%s2685 + $0x18] sm:$0xf]
        %v2693 = vld [vmem:[%s2685 + $0x1c] sm:$0xf]
        %v2694 = vpack.c.bf16 %v2678, %v2678
        %s2695 = scalar_lea.vmem %s2, 512
        %v2696 = vld [vmem:[%s2695] sm:$0xf]
        %v2697 = vld [vmem:[%s2695 + $0x4] sm:$0xf]
        %v2698 = vld [vmem:[%s2695 + $0x8] sm:$0xf]
        %v2699 = vld [vmem:[%s2695 + $0xc] sm:$0xf]
        %v2700 = vld [vmem:[%s2695 + $0x10] sm:$0xf]
        %v2701 = vld [vmem:[%s2695 + $0x14] sm:$0xf]
        %v2702 = vld [vmem:[%s2695 + $0x18] sm:$0xf]
        %v2703 = vld [vmem:[%s2695 + $0x1c] sm:$0xf]
        %v2712 = vunpack.c.l.b16 %v2696
        %v2713 = vunpack.c.l.b16 %v2697
        %v2714 = vunpack.c.l.b16 %v2698
        %v2715 = vunpack.c.l.b16 %v2699
        %v2716 = vunpack.c.l.b16 %v2700
        %v2717 = vunpack.c.l.b16 %v2701
        %v2718 = vunpack.c.l.b16 %v2702
        %v2719 = vunpack.c.l.b16 %v2703
        %v2720 = vpack.c.b16 %v2713, %v2712
        %v2721 = vpack.c.b16 %v2715, %v2714
        %v2722 = vpack.c.b16 %v2717, %v2716
        %v2723 = vpack.c.b16 %v2719, %v2718
        %v2729 = vsel %vm543, %v2694, 0
        %2731 = vmatprep.subr.bf16.mxu0 0
        %2732 = vmatpush1.bf16.msra.mxu0 %v2720
        %2733 = vmatprep.subr.bf16.mxu0 0
        %2734 = vmatpush1.bf16.msra.mxu0 %v2721
        %2735 = vmatprep.subr.bf16.mxu0 0
        %2736 = vmatpush1.bf16.msra.mxu0 %v2722
        %2737 = vmatprep.subr.bf16.mxu0 0
        %2738 = vmatpush1.bf16.msra.mxu0 %v2723
        %2739 = vmatprep.subr.bf16.mxu0 0
        %2740 = vmatpush1.bf16.msra.mxu0 0
        %2741 = vmatprep.subr.bf16.mxu0 0
        %2742 = vmatpush1.bf16.msra.mxu0 0
        %2743 = vmatprep.subr.bf16.mxu0 0
        %2744 = vmatpush1.bf16.msra.mxu0 0
        %2745 = vmatprep.subr.bf16.mxu0 0
        %2746 = vmatpush1.bf16.msra.mxu0 0
        %2747 = vmatprep.subr.bf16.mxu0 0
        %2748 = vmatpush1.bf16.msra.mxu0 0
        %2749 = vmatprep.subr.bf16.mxu0 0
        %2750 = vmatpush1.bf16.msra.mxu0 0
        %2751 = vmatprep.subr.bf16.mxu0 0
        %2752 = vmatpush1.bf16.msra.mxu0 0
        %2753 = vmatprep.subr.bf16.mxu0 0
        %2754 = vmatpush1.bf16.msra.mxu0 0
        %2755 = vmatprep.subr.bf16.mxu0 0
        %2756 = vmatpush1.bf16.msra.mxu0 0
        %2757 = vmatprep.subr.bf16.mxu0 0
        %2758 = vmatpush1.bf16.msra.mxu0 0
        %2759 = vmatprep.subr.bf16.mxu0 0
        %2760 = vmatpush1.bf16.msra.mxu0 0
        %2761 = vmatprep.subr.bf16.mxu0 0
        %2762 = vmatpush1.bf16.msra.mxu0 0
        %2763 = vmatprep.mubr.bf16.mxu0 0
        %2764 = vmatmul.mubr.bf16.gmra.mrb[0].mxu0 %v2729
        %v2765 = vpop.f32.mrb[0].mxu0
        %v2766 = vadd.f32 0.0, %v2765
        %v2767 = vpop.f32.mrb[0].mxu0
        %v2768 = vpop.f32.mrb[0].mxu0
        %v2769 = vpop.f32.mrb[0].mxu0
        %2770 = vdwg.mxu0
        %v2779 = vunpack.c.l.b16 %v2686
        %v2780 = vunpack.c.l.b16 %v2687
        %v2781 = vunpack.c.l.b16 %v2688
        %v2782 = vunpack.c.l.b16 %v2689
        %v2783 = vunpack.c.l.b16 %v2690
        %v2784 = vunpack.c.l.b16 %v2691
        %v2785 = vunpack.c.l.b16 %v2692
        %v2786 = vunpack.c.l.b16 %v2693
        %v2787 = vpack.c.b16 %v2780, %v2779
        %v2788 = vpack.c.b16 %v2782, %v2781
        %v2789 = vpack.c.b16 %v2784, %v2783
        %v2790 = vpack.c.b16 %v2786, %v2785
        %v2796 = vsel %vm543, %v2681, 0
        %2798 = vmatprep.subr.bf16.mxu0 0
        %2799 = vmatpush1.bf16.msra.mxu0 %v2787
        %2800 = vmatprep.subr.bf16.mxu0 0
        %2801 = vmatpush1.bf16.msra.mxu0 %v2788
        %2802 = vmatprep.subr.bf16.mxu0 0
        %2803 = vmatpush1.bf16.msra.mxu0 %v2789
        %2804 = vmatprep.subr.bf16.mxu0 0
        %2805 = vmatpush1.bf16.msra.mxu0 %v2790
        %2806 = vmatprep.subr.bf16.mxu0 0
        %2807 = vmatpush1.bf16.msra.mxu0 0
        %2808 = vmatprep.subr.bf16.mxu0 0
        %2809 = vmatpush1.bf16.msra.mxu0 0
        %2810 = vmatprep.subr.bf16.mxu0 0
        %2811 = vmatpush1.bf16.msra.mxu0 0
        %2812 = vmatprep.subr.bf16.mxu0 0
        %2813 = vmatpush1.bf16.msra.mxu0 0
        %2814 = vmatprep.subr.bf16.mxu0 0
        %2815 = vmatpush1.bf16.msra.mxu0 0
        %2816 = vmatprep.subr.bf16.mxu0 0
        %2817 = vmatpush1.bf16.msra.mxu0 0
        %2818 = vmatprep.subr.bf16.mxu0 0
        %2819 = vmatpush1.bf16.msra.mxu0 0
        %2820 = vmatprep.subr.bf16.mxu0 0
        %2821 = vmatpush1.bf16.msra.mxu0 0
        %2822 = vmatprep.subr.bf16.mxu0 0
        %2823 = vmatpush1.bf16.msra.mxu0 0
        %2824 = vmatprep.subr.bf16.mxu0 0
        %2825 = vmatpush1.bf16.msra.mxu0 0
        %2826 = vmatprep.subr.bf16.mxu0 0
        %2827 = vmatpush1.bf16.msra.mxu0 0
        %2828 = vmatprep.subr.bf16.mxu0 0
        %2829 = vmatpush1.bf16.msra.mxu0 0
        %2830 = vmatprep.mubr.bf16.mxu0 0
        %2831 = vmatmul.mubr.bf16.gmra.mrb[0].mxu0 %v2796
        %v2832 = vpop.f32.mrb[0].mxu0
        %v2833 = vadd.f32 %v2766, %v2832
        %v2834 = vpop.f32.mrb[0].mxu0
        %v2835 = vpop.f32.mrb[0].mxu0
        %v2836 = vpop.f32.mrb[0].mxu0
        %2837 = vdwg.mxu0
        %s2838 = scalar_lea.vmem %s2, 544
        %v2839 = vld [vmem:[%s2838] sm:$0xf]
        %v2840 = vld [vmem:[%s2838 + $0x4] sm:$0xf]
        %v2841 = vld [vmem:[%s2838 + $0x8] sm:$0xf]
        %v2842 = vld [vmem:[%s2838 + $0xc] sm:$0xf]
        %v2843 = vld [vmem:[%s2838 + $0x10] sm:$0xf]
        %v2844 = vld [vmem:[%s2838 + $0x14] sm:$0xf]
        %v2845 = vld [vmem:[%s2838 + $0x18] sm:$0xf]
        %v2846 = vld [vmem:[%s2838 + $0x1c] sm:$0xf]
        %v2855 = vunpack.c.l.b16 %v2839
        %v2856 = vunpack.c.l.b16 %v2840
        %v2857 = vunpack.c.l.b16 %v2841
        %v2858 = vunpack.c.l.b16 %v2842
        %v2859 = vunpack.c.l.b16 %v2843
        %v2860 = vunpack.c.l.b16 %v2844
        %v2861 = vunpack.c.l.b16 %v2845
        %v2862 = vunpack.c.l.b16 %v2846
        %v2863 = vpack.c.b16 %v2856, %v2855
        %v2864 = vpack.c.b16 %v2858, %v2857
        %v2865 = vpack.c.b16 %v2860, %v2859
        %v2866 = vpack.c.b16 %v2862, %v2861
        %v2872 = vsel %vm543, %v2684, 0
        %2874 = vmatprep.subr.bf16.mxu0 0
        %2875 = vmatpush1.bf16.msra.mxu0 %v2863
        %2876 = vmatprep.subr.bf16.mxu0 0
        %2877 = vmatpush1.bf16.msra.mxu0 %v2864
        %2878 = vmatprep.subr.bf16.mxu0 0
        %2879 = vmatpush1.bf16.msra.mxu0 %v2865
        %2880 = vmatprep.subr.bf16.mxu0 0
        %2881 = vmatpush1.bf16.msra.mxu0 %v2866
        %2882 = vmatprep.subr.bf16.mxu0 0
        %2883 = vmatpush1.bf16.msra.mxu0 0
        %2884 = vmatprep.subr.bf16.mxu0 0
        %2885 = vmatpush1.bf16.msra.mxu0 0
        %2886 = vmatprep.subr.bf16.mxu0 0
        %2887 = vmatpush1.bf16.msra.mxu0 0
        %2888 = vmatprep.subr.bf16.mxu0 0
        %2889 = vmatpush1.bf16.msra.mxu0 0
        %2890 = vmatprep.subr.bf16.mxu0 0
        %2891 = vmatpush1.bf16.msra.mxu0 0
        %2892 = vmatprep.subr.bf16.mxu0 0
        %2893 = vmatpush1.bf16.msra.mxu0 0
        %2894 = vmatprep.subr.bf16.mxu0 0
        %2895 = vmatpush1.bf16.msra.mxu0 0
        %2896 = vmatprep.subr.bf16.mxu0 0
        %2897 = vmatpush1.bf16.msra.mxu0 0
        %2898 = vmatprep.subr.bf16.mxu0 0
        %2899 = vmatpush1.bf16.msra.mxu0 0
        %2900 = vmatprep.subr.bf16.mxu0 0
        %2901 = vmatpush1.bf16.msra.mxu0 0
        %2902 = vmatprep.subr.bf16.mxu0 0
        %2903 = vmatpush1.bf16.msra.mxu0 0
        %2904 = vmatprep.subr.bf16.mxu0 0
        %2905 = vmatpush1.bf16.msra.mxu0 0
        %2906 = vmatprep.mubr.bf16.mxu0 0
        %2907 = vmatmul.mubr.bf16.gmra.mrb[0].mxu0 %v2872
        %v2908 = vpop.f32.mrb[0].mxu0
        %v2909 = vadd.f32 0.0, %v2908
        %v2910 = vpop.f32.mrb[0].mxu0
        %v2911 = vpop.f32.mrb[0].mxu0
        %v2912 = vpop.f32.mrb[0].mxu0
        %2913 = vdwg.mxu0
        %v2914 = vadd.f32 %v2833, %v2909
        %s2915 = scalar_lea.vmem %s3, 5
        %v2916 = vld [vmem:[%s2915] sm:$0x1]
        %v2918 = vlaneseq
        %v2919 = vshrl.u32 %v2918, 7
        %v2920 = vsub.s32 0, %v2919
        %v2921 = vrot.slane %v2916, %v2920
        %v2923 = vadd.f32 %v2914, %v2921
        %v2924 = vmax.f32 %v2923, 0.0
        %v2925 = vpack.c.bf16 %v2924, %v2924
        %s2926 = scalar_lea.vmem %s4, 32
        %v2927 = vld [vmem:[%s2926] sm:$0xf]
        %v2928 = vld [vmem:[%s2926 + $0x4] sm:$0xf]
        %v2929 = vld [vmem:[%s2926 + $0x8] sm:$0xf]
        %v2930 = vld [vmem:[%s2926 + $0xc] sm:$0xf]
        %v2931 = vld [vmem:[%s2926 + $0x10] sm:$0xf]
        %v2932 = vld [vmem:[%s2926 + $0x14] sm:$0xf]
        %v2933 = vld [vmem:[%s2926 + $0x18] sm:$0xf]
        %v2934 = vld [vmem:[%s2926 + $0x1c] sm:$0xf]
        %s2935 = scalar_lea.vmem %s8, 1
        %v2936 = vld [vmem:[%s2935] sm:$0x1]
        %v2938 = vlaneseq
        %v2939 = vshrl.u32 %v2938, 7
        %v2940 = vsub.s32 0, %v2939
        %v2941 = vrot.slane %v2936, %v2940
        %v2951 = vunpack.c.l.b16 %v2927
        %v2952 = vunpack.c.l.b16 %v2928
        %v2953 = vunpack.c.l.b16 %v2929
        %v2954 = vunpack.c.l.b16 %v2930
        %v2955 = vunpack.c.l.b16 %v2931
        %v2956 = vunpack.c.l.b16 %v2932
        %v2957 = vunpack.c.l.b16 %v2933
        %v2958 = vunpack.c.l.b16 %v2934
        %v2959 = vpack.c.b16 %v2952, %v2951
        %v2960 = vpack.c.b16 %v2954, %v2953
        %v2961 = vpack.c.b16 %v2956, %v2955
        %v2962 = vpack.c.b16 %v2958, %v2957
        %v2968 = vsel %vm543, %v2925, 0
        %2970 = vmatprep.subr.bf16.mxu0 0
        %2971 = vmatpush1.bf16.msra.mxu0 %v2959
        %2972 = vmatprep.subr.bf16.mxu0 0
        %2973 = vmatpush1.bf16.msra.mxu0 %v2960
        %2974 = vmatprep.subr.bf16.mxu0 0
        %2975 = vmatpush1.bf16.msra.mxu0 %v2961
        %2976 = vmatprep.subr.bf16.mxu0 0
        %2977 = vmatpush1.bf16.msra.mxu0 %v2962
        %2978 = vmatprep.subr.bf16.mxu0 0
        %2979 = vmatpush1.bf16.msra.mxu0 0
        %2980 = vmatprep.subr.bf16.mxu0 0
        %2981 = vmatpush1.bf16.msra.mxu0 0
        %2982 = vmatprep.subr.bf16.mxu0 0
        %2983 = vmatpush1.bf16.msra.mxu0 0
        %2984 = vmatprep.subr.bf16.mxu0 0
        %2985 = vmatpush1.bf16.msra.mxu0 0
        %2986 = vmatprep.subr.bf16.mxu0 0
        %2987 = vmatpush1.bf16.msra.mxu0 0
        %2988 = vmatprep.subr.bf16.mxu0 0
        %2989 = vmatpush1.bf16.msra.mxu0 0
        %2990 = vmatprep.subr.bf16.mxu0 0
        %2991 = vmatpush1.bf16.msra.mxu0 0
        %2992 = vmatprep.subr.bf16.mxu0 0
        %2993 = vmatpush1.bf16.msra.mxu0 0
        %2994 = vmatprep.subr.bf16.mxu0 0
        %2995 = vmatpush1.bf16.msra.mxu0 0
        %2996 = vmatprep.subr.bf16.mxu0 0
        %2997 = vmatpush1.bf16.msra.mxu0 0
        %2998 = vmatprep.subr.bf16.mxu0 0
        %2999 = vmatpush1.bf16.msra.mxu0 0
        %3000 = vmatprep.subr.bf16.mxu0 0
        %3001 = vmatpush1.bf16.msra.mxu0 0
        %3002 = vmatprep.mubr.bf16.mxu0 0
        %3003 = vmatmul.mubr.bf16.gmra.mrb[0].mxu0 %v2968
        %v3004 = vpop.f32.mrb[0].mxu0
        %v3005 = vadd.f32 %v2941, %v3004
        %v3006 = vpop.f32.mrb[0].mxu0
        %v3007 = vpop.f32.mrb[0].mxu0
        %v3008 = vpop.f32.mrb[0].mxu0
        %3009 = vdwg.mxu0
        %s3010 = scalar_lea.vmem %s5, 32
        %v3011 = vld [vmem:[%s3010] sm:$0xf]
        %v3012 = vld [vmem:[%s3010 + $0x4] sm:$0xf]
        %v3013 = vld [vmem:[%s3010 + $0x8] sm:$0xf]
        %v3014 = vld [vmem:[%s3010 + $0xc] sm:$0xf]
        %v3015 = vld [vmem:[%s3010 + $0x10] sm:$0xf]
        %v3016 = vld [vmem:[%s3010 + $0x14] sm:$0xf]
        %v3017 = vld [vmem:[%s3010 + $0x18] sm:$0xf]
        %v3018 = vld [vmem:[%s3010 + $0x1c] sm:$0xf]
        %s3019 = scalar_lea.vmem %s9, 1
        %v3020 = vld [vmem:[%s3019] sm:$0x1]
        %v3022 = vlaneseq
        %v3023 = vshrl.u32 %v3022, 7
        %v3024 = vsub.s32 0, %v3023
        %v3025 = vrot.slane %v3020, %v3024
        %v3035 = vunpack.c.l.b16 %v3011
        %v3036 = vunpack.c.l.b16 %v3012
        %v3037 = vunpack.c.l.b16 %v3013
        %v3038 = vunpack.c.l.b16 %v3014
        %v3039 = vunpack.c.l.b16 %v3015
        %v3040 = vunpack.c.l.b16 %v3016
        %v3041 = vunpack.c.l.b16 %v3017
        %v3042 = vunpack.c.l.b16 %v3018
        %v3043 = vpack.c.b16 %v3036, %v3035
        %v3044 = vpack.c.b16 %v3038, %v3037
        %v3045 = vpack.c.b16 %v3040, %v3039
        %v3046 = vpack.c.b16 %v3042, %v3041
        %3051 = vmatprep.subr.bf16.mxu0 0
        %3052 = vmatpush1.bf16.msra.mxu0 %v3043
        %3053 = vmatprep.subr.bf16.mxu0 0
        %3054 = vmatpush1.bf16.msra.mxu0 %v3044
        %3055 = vmatprep.subr.bf16.mxu0 0
        %3056 = vmatpush1.bf16.msra.mxu0 %v3045
        %3057 = vmatprep.subr.bf16.mxu0 0
        %3058 = vmatpush1.bf16.msra.mxu0 %v3046
        %3059 = vmatprep.subr.bf16.mxu0 0
        %3060 = vmatpush1.bf16.msra.mxu0 0
        %3061 = vmatprep.subr.bf16.mxu0 0
        %3062 = vmatpush1.bf16.msra.mxu0 0
        %3063 = vmatprep.subr.bf16.mxu0 0
        %3064 = vmatpush1.bf16.msra.mxu0 0
        %3065 = vmatprep.subr.bf16.mxu0 0
        %3066 = vmatpush1.bf16.msra.mxu0 0
        %3067 = vmatprep.subr.bf16.mxu0 0
        %3068 = vmatpush1.bf16.msra.mxu0 0
        %3069 = vmatprep.subr.bf16.mxu0 0
        %3070 = vmatpush1.bf16.msra.mxu0 0
        %3071 = vmatprep.subr.bf16.mxu0 0
        %3072 = vmatpush1.bf16.msra.mxu0 0
        %3073 = vmatprep.subr.bf16.mxu0 0
        %3074 = vmatpush1.bf16.msra.mxu0 0
        %3075 = vmatprep.subr.bf16.mxu0 0
        %3076 = vmatpush1.bf16.msra.mxu0 0
        %3077 = vmatprep.subr.bf16.mxu0 0
        %3078 = vmatpush1.bf16.msra.mxu0 0
        %3079 = vmatprep.subr.bf16.mxu0 0
        %3080 = vmatpush1.bf16.msra.mxu0 0
        %3081 = vmatprep.subr.bf16.mxu0 0
        %3082 = vmatpush1.bf16.msra.mxu0 0
        %3083 = vmatprep.mubr.bf16.mxu0 0
        %3084 = vmatmul.mubr.bf16.gmra.mrb[0].mxu0 %v1355
        %v3085 = vpop.f32.mrb[0].mxu0
        %v3086 = vadd.f32 %v3025, %v3085
        %v3087 = vpop.f32.mrb[0].mxu0
        %v3088 = vpop.f32.mrb[0].mxu0
        %v3089 = vadd.f32 %v3025, %v3088
        %v3090 = vpop.f32.mrb[0].mxu0
        %3091 = vdwg.mxu0
        %s3092 = scalar_lea.vmem %s6, 32
        %v3093 = vld [vmem:[%s3092] sm:$0xf]
        %v3094 = vld [vmem:[%s3092 + $0x4] sm:$0xf]
        %v3095 = vld [vmem:[%s3092 + $0x8] sm:$0xf]
        %v3096 = vld [vmem:[%s3092 + $0xc] sm:$0xf]
        %v3097 = vld [vmem:[%s3092 + $0x10] sm:$0xf]
        %v3098 = vld [vmem:[%s3092 + $0x14] sm:$0xf]
        %v3099 = vld [vmem:[%s3092 + $0x18] sm:$0xf]
        %v3100 = vld [vmem:[%s3092 + $0x1c] sm:$0xf]
        %s3101 = scalar_lea.vmem %s10, 1
        %v3102 = vld [vmem:[%s3101] sm:$0x1]
        %v3104 = vlaneseq
        %v3105 = vshrl.u32 %v3104, 7
        %v3106 = vsub.s32 0, %v3105
        %v3107 = vrot.slane %v3102, %v3106
        %v3117 = vunpack.c.l.b16 %v3093
        %v3118 = vunpack.c.l.b16 %v3094
        %v3119 = vunpack.c.l.b16 %v3095
        %v3120 = vunpack.c.l.b16 %v3096
        %v3121 = vunpack.c.l.b16 %v3097
        %v3122 = vunpack.c.l.b16 %v3098
        %v3123 = vunpack.c.l.b16 %v3099
        %v3124 = vunpack.c.l.b16 %v3100
        %v3125 = vpack.c.b16 %v3118, %v3117
        %v3126 = vpack.c.b16 %v3120, %v3119
        %v3127 = vpack.c.b16 %v3122, %v3121
        %v3128 = vpack.c.b16 %v3124, %v3123
        %3133 = vmatprep.subr.bf16.mxu0 0
        %3134 = vmatpush1.bf16.msra.mxu0 %v3125
        %3135 = vmatprep.subr.bf16.mxu0 0
        %3136 = vmatpush1.bf16.msra.mxu0 %v3126
        %3137 = vmatprep.subr.bf16.mxu0 0
        %3138 = vmatpush1.bf16.msra.mxu0 %v3127
        %3139 = vmatprep.subr.bf16.mxu0 0
        %3140 = vmatpush1.bf16.msra.mxu0 %v3128
        %3141 = vmatprep.subr.bf16.mxu0 0
        %3142 = vmatpush1.bf16.msra.mxu0 0
        %3143 = vmatprep.subr.bf16.mxu0 0
        %3144 = vmatpush1.bf16.msra.mxu0 0
        %3145 = vmatprep.subr.bf16.mxu0 0
        %3146 = vmatpush1.bf16.msra.mxu0 0
        %3147 = vmatprep.subr.bf16.mxu0 0
        %3148 = vmatpush1.bf16.msra.mxu0 0
        %3149 = vmatprep.subr.bf16.mxu0 0
        %3150 = vmatpush1.bf16.msra.mxu0 0
        %3151 = vmatprep.subr.bf16.mxu0 0
        %3152 = vmatpush1.bf16.msra.mxu0 0
        %3153 = vmatprep.subr.bf16.mxu0 0
        %3154 = vmatpush1.bf16.msra.mxu0 0
        %3155 = vmatprep.subr.bf16.mxu0 0
        %3156 = vmatpush1.bf16.msra.mxu0 0
        %3157 = vmatprep.subr.bf16.mxu0 0
        %3158 = vmatpush1.bf16.msra.mxu0 0
        %3159 = vmatprep.subr.bf16.mxu0 0
        %3160 = vmatpush1.bf16.msra.mxu0 0
        %3161 = vmatprep.subr.bf16.mxu0 0
        %3162 = vmatpush1.bf16.msra.mxu0 0
        %3163 = vmatprep.subr.bf16.mxu0 0
        %3164 = vmatpush1.bf16.msra.mxu0 0
        %3165 = vmatprep.mubr.bf16.mxu0 0
        %3166 = vmatmul.mubr.bf16.gmra.mrb[0].mxu0 %v1355
        %v3167 = vpop.f32.mrb[0].mxu0
        %v3168 = vadd.f32 %v3107, %v3167
        %v3169 = vpop.f32.mrb[0].mxu0
        %v3170 = vpop.f32.mrb[0].mxu0
        %v3171 = vadd.f32 %v3107, %v3170
        %v3172 = vpop.f32.mrb[0].mxu0
        %3173 = vdwg.mxu0
        %3175 = vrot.lane.b32.xlu0 %v3005, 112
        %v3176 = vpop.permute.xlu0 %3175
        %3178 = vrot.lane.b32.xlu0 %v3005, 96
        %v3179 = vpop.permute.xlu0 %3178
        %3181 = vrot.lane.b32.xlu0 %v3005, 80
        %v3182 = vpop.permute.xlu0 %3181
        %v3184 = vpack.c.bf16 %v3005, %v3005
        %v3185 = vpack.c.bf16 %v3176, %v3176
        %v3186 = vpack.c.bf16 %v3179, %v3179
        %v3187 = vpack.c.bf16 %v3182, %v3182
        %3190 = vrot.lane.b32.xlu0 %v3086, 112
        %v3191 = vpop.permute.xlu0 %3190
        %3192 = vrot.lane.b32.xlu0 %v3089, 112
        %v3193 = vpop.permute.xlu0 %3192
        %3196 = vrot.lane.b32.xlu0 %v3086, 96
        %v3197 = vpop.permute.xlu0 %3196
        %3198 = vrot.lane.b32.xlu0 %v3089, 96
        %v3199 = vpop.permute.xlu0 %3198
        %3202 = vrot.lane.b32.xlu0 %v3086, 80
        %v3203 = vpop.permute.xlu0 %3202
        %3204 = vrot.lane.b32.xlu0 %v3089, 80
        %v3205 = vpop.permute.xlu0 %3204
        %v3208 = vpack.c.bf16 %v3089, %v3086
        %v3209 = vpack.c.bf16 %v3193, %v3191
        %v3210 = vpack.c.bf16 %v3199, %v3197
        %v3211 = vpack.c.bf16 %v3205, %v3203
        %3214 = vrot.lane.b32.xlu0 %v3168, 112
        %v3215 = vpop.permute.xlu0 %3214
        %3216 = vrot.lane.b32.xlu0 %v3171, 112
        %v3217 = vpop.permute.xlu0 %3216
        %3220 = vrot.lane.b32.xlu0 %v3168, 96
        %v3221 = vpop.permute.xlu0 %3220
        %3222 = vrot.lane.b32.xlu0 %v3171, 96
        %v3223 = vpop.permute.xlu0 %3222
        %3226 = vrot.lane.b32.xlu0 %v3168, 80
        %v3227 = vpop.permute.xlu0 %3226
        %3228 = vrot.lane.b32.xlu0 %v3171, 80
        %v3229 = vpop.permute.xlu0 %3228
        %v3232 = vpack.c.bf16 %v3171, %v3168
        %v3233 = vpack.c.bf16 %v3217, %v3215
        %v3234 = vpack.c.bf16 %v3223, %v3221
        %v3235 = vpack.c.bf16 %v3229, %v3227
        %v3237 = vsel %vm1540, %v3184, 0
        %v3240 = vsel %vm1540, %v3208, 0
        %3242 = vmatprep.subr.bf16.mxu0 0
        %3243 = vmatpush1.bf16.xpose.msra.mxu0 %v3240
        %3244 = vmatprep.subr.bf16.mxu0 0
        %3245 = vmatpush1.bf16.xpose.msra.mxu0 0
        %3246 = vmatprep.subr.bf16.mxu0 0
        %3247 = vmatpush1.bf16.xpose.msra.mxu0 0
        %3248 = vmatprep.subr.bf16.mxu0 0
        %3249 = vmatpush1.bf16.xpose.msra.mxu0 0
        %3250 = vmatprep.subr.bf16.mxu0 0
        %3251 = vmatpush1.bf16.xpose.msra.mxu0 0
        %3252 = vmatprep.subr.bf16.mxu0 0
        %3253 = vmatpush1.bf16.xpose.msra.mxu0 0
        %3254 = vmatprep.subr.bf16.mxu0 0
        %3255 = vmatpush1.bf16.xpose.msra.mxu0 0
        %3256 = vmatprep.subr.bf16.mxu0 0
        %3257 = vmatpush1.bf16.xpose.msra.mxu0 0
        %3258 = vmatprep.subr.bf16.mxu0 0
        %3259 = vmatpush1.bf16.xpose.msra.mxu0 0
        %3260 = vmatprep.subr.bf16.mxu0 0
        %3261 = vmatpush1.bf16.xpose.msra.mxu0 0
        %3262 = vmatprep.subr.bf16.mxu0 0
        %3263 = vmatpush1.bf16.xpose.msra.mxu0 0
        %3264 = vmatprep.subr.bf16.mxu0 0
        %3265 = vmatpush1.bf16.xpose.msra.mxu0 0
        %3266 = vmatprep.subr.bf16.mxu0 0
        %3267 = vmatpush1.bf16.xpose.msra.mxu0 0
        %3268 = vmatprep.subr.bf16.mxu0 0
        %3269 = vmatpush1.bf16.xpose.msra.mxu0 0
        %3270 = vmatprep.subr.bf16.mxu0 0
        %3271 = vmatpush1.bf16.xpose.msra.mxu0 0
        %3272 = vmatprep.subr.bf16.mxu0 0
        %3273 = vmatpush1.bf16.xpose.msra.mxu0 0
        %3274 = vmatprep.mubr.bf16.mxu0 0
        %3275 = vmatmul.mubr.bf16.gmra.mrb[0].mxu0 %v3237
        %v3276 = vpop.f32.mrb[0].mxu0
        %v3277 = vadd.f32 0.0, %v3276
        %v3278 = vpop.f32.mrb[0].mxu0
        %v3279 = vpop.f32.mrb[0].mxu0
        %v3280 = vpop.f32.mrb[0].mxu0
        %3281 = vdwg.mxu0
        %v3283 = vsel %vm1540, %v3185, 0
        %v3286 = vsel %vm1540, %v3209, 0
        %3288 = vmatprep.subr.bf16.mxu0 0
        %3289 = vmatpush1.bf16.xpose.msra.mxu0 %v3286
        %3290 = vmatprep.subr.bf16.mxu0 0
        %3291 = vmatpush1.bf16.xpose.msra.mxu0 0
        %3292 = vmatprep.subr.bf16.mxu0 0
        %3293 = vmatpush1.bf16.xpose.msra.mxu0 0
        %3294 = vmatprep.subr.bf16.mxu0 0
        %3295 = vmatpush1.bf16.xpose.msra.mxu0 0
        %3296 = vmatprep.subr.bf16.mxu0 0
        %3297 = vmatpush1.bf16.xpose.msra.mxu0 0
        %3298 = vmatprep.subr.bf16.mxu0 0
        %3299 = vmatpush1.bf16.xpose.msra.mxu0 0
        %3300 = vmatprep.subr.bf16.mxu0 0
        %3301 = vmatpush1.bf16.xpose.msra.mxu0 0
        %3302 = vmatprep.subr.bf16.mxu0 0
        %3303 = vmatpush1.bf16.xpose.msra.mxu0 0
        %3304 = vmatprep.subr.bf16.mxu0 0
        %3305 = vmatpush1.bf16.xpose.msra.mxu0 0
        %3306 = vmatprep.subr.bf16.mxu0 0
        %3307 = vmatpush1.bf16.xpose.msra.mxu0 0
        %3308 = vmatprep.subr.bf16.mxu0 0
        %3309 = vmatpush1.bf16.xpose.msra.mxu0 0
        %3310 = vmatprep.subr.bf16.mxu0 0
        %3311 = vmatpush1.bf16.xpose.msra.mxu0 0
        %3312 = vmatprep.subr.bf16.mxu0 0
        %3313 = vmatpush1.bf16.xpose.msra.mxu0 0
        %3314 = vmatprep.subr.bf16.mxu0 0
        %3315 = vmatpush1.bf16.xpose.msra.mxu0 0
        %3316 = vmatprep.subr.bf16.mxu0 0
        %3317 = vmatpush1.bf16.xpose.msra.mxu0 0
        %3318 = vmatprep.subr.bf16.mxu0 0
        %3319 = vmatpush1.bf16.xpose.msra.mxu0 0
        %3320 = vmatprep.mubr.bf16.mxu0 0
        %3321 = vmatmul.mubr.bf16.gmra.mrb[0].mxu0 %v3283
        %v3322 = vpop.f32.mrb[0].mxu0
        %v3323 = vadd.f32 0.0, %v3322
        %v3324 = vpop.f32.mrb[0].mxu0
        %v3325 = vpop.f32.mrb[0].mxu0
        %v3326 = vpop.f32.mrb[0].mxu0
        %3327 = vdwg.mxu0
        %v3329 = vsel %vm1540, %v3186, 0
        %v3332 = vsel %vm1540, %v3210, 0
        %3334 = vmatprep.subr.bf16.mxu0 0
        %3335 = vmatpush1.bf16.xpose.msra.mxu0 %v3332
        %3336 = vmatprep.subr.bf16.mxu0 0
        %3337 = vmatpush1.bf16.xpose.msra.mxu0 0
        %3338 = vmatprep.subr.bf16.mxu0 0
        %3339 = vmatpush1.bf16.xpose.msra.mxu0 0
        %3340 = vmatprep.subr.bf16.mxu0 0
        %3341 = vmatpush1.bf16.xpose.msra.mxu0 0
        %3342 = vmatprep.subr.bf16.mxu0 0
        %3343 = vmatpush1.bf16.xpose.msra.mxu0 0
        %3344 = vmatprep.subr.bf16.mxu0 0
        %3345 = vmatpush1.bf16.xpose.msra.mxu0 0
        %3346 = vmatprep.subr.bf16.mxu0 0
        %3347 = vmatpush1.bf16.xpose.msra.mxu0 0
        %3348 = vmatprep.subr.bf16.mxu0 0
        %3349 = vmatpush1.bf16.xpose.msra.mxu0 0
        %3350 = vmatprep.subr.bf16.mxu0 0
        %3351 = vmatpush1.bf16.xpose.msra.mxu0 0
        %3352 = vmatprep.subr.bf16.mxu0 0
        %3353 = vmatpush1.bf16.xpose.msra.mxu0 0
        %3354 = vmatprep.subr.bf16.mxu0 0
        %3355 = vmatpush1.bf16.xpose.msra.mxu0 0
        %3356 = vmatprep.subr.bf16.mxu0 0
        %3357 = vmatpush1.bf16.xpose.msra.mxu0 0
        %3358 = vmatprep.subr.bf16.mxu0 0
        %3359 = vmatpush1.bf16.xpose.msra.mxu0 0
        %3360 = vmatprep.subr.bf16.mxu0 0
        %3361 = vmatpush1.bf16.xpose.msra.mxu0 0
        %3362 = vmatprep.subr.bf16.mxu0 0
        %3363 = vmatpush1.bf16.xpose.msra.mxu0 0
        %3364 = vmatprep.subr.bf16.mxu0 0
        %3365 = vmatpush1.bf16.xpose.msra.mxu0 0
        %3366 = vmatprep.mubr.bf16.mxu0 0
        %3367 = vmatmul.mubr.bf16.gmra.mrb[0].mxu0 %v3329
        %v3368 = vpop.f32.mrb[0].mxu0
        %v3369 = vadd.f32 0.0, %v3368
        %v3370 = vpop.f32.mrb[0].mxu0
        %v3371 = vpop.f32.mrb[0].mxu0
        %v3372 = vpop.f32.mrb[0].mxu0
        %3373 = vdwg.mxu0
        %v3375 = vsel %vm1540, %v3187, 0
        %v3378 = vsel %vm1540, %v3211, 0
        %3380 = vmatprep.subr.bf16.mxu0 0
        %3381 = vmatpush1.bf16.xpose.msra.mxu0 %v3378
        %3382 = vmatprep.subr.bf16.mxu0 0
        %3383 = vmatpush1.bf16.xpose.msra.mxu0 0
        %3384 = vmatprep.subr.bf16.mxu0 0
        %3385 = vmatpush1.bf16.xpose.msra.mxu0 0
        %3386 = vmatprep.subr.bf16.mxu0 0
        %3387 = vmatpush1.bf16.xpose.msra.mxu0 0
        %3388 = vmatprep.subr.bf16.mxu0 0
        %3389 = vmatpush1.bf16.xpose.msra.mxu0 0
        %3390 = vmatprep.subr.bf16.mxu0 0
        %3391 = vmatpush1.bf16.xpose.msra.mxu0 0
        %3392 = vmatprep.subr.bf16.mxu0 0
        %3393 = vmatpush1.bf16.xpose.msra.mxu0 0
        %3394 = vmatprep.subr.bf16.mxu0 0
        %3395 = vmatpush1.bf16.xpose.msra.mxu0 0
        %3396 = vmatprep.subr.bf16.mxu0 0
        %3397 = vmatpush1.bf16.xpose.msra.mxu0 0
        %3398 = vmatprep.subr.bf16.mxu0 0
        %3399 = vmatpush1.bf16.xpose.msra.mxu0 0
        %3400 = vmatprep.subr.bf16.mxu0 0
        %3401 = vmatpush1.bf16.xpose.msra.mxu0 0
        %3402 = vmatprep.subr.bf16.mxu0 0
        %3403 = vmatpush1.bf16.xpose.msra.mxu0 0
        %3404 = vmatprep.subr.bf16.mxu0 0
        %3405 = vmatpush1.bf16.xpose.msra.mxu0 0
        %3406 = vmatprep.subr.bf16.mxu0 0
        %3407 = vmatpush1.bf16.xpose.msra.mxu0 0
        %3408 = vmatprep.subr.bf16.mxu0 0
        %3409 = vmatpush1.bf16.xpose.msra.mxu0 0
        %3410 = vmatprep.subr.bf16.mxu0 0
        %3411 = vmatpush1.bf16.xpose.msra.mxu0 0
        %3412 = vmatprep.mubr.bf16.mxu0 0
        %3413 = vmatmul.mubr.bf16.gmra.mrb[0].mxu0 %v3375
        %v3414 = vpop.f32.mrb[0].mxu0
        %v3415 = vadd.f32 0.0, %v3414
        %v3416 = vpop.f32.mrb[0].mxu0
        %v3417 = vpop.f32.mrb[0].mxu0
        %v3418 = vpop.f32.mrb[0].mxu0
        %3419 = vdwg.mxu0
        %v3420 = vmul.f32 %v3277, 0.25
        %v3421 = vmul.f32 %v3323, 0.25
        %v3422 = vmul.f32 %v3369, 0.25
        %v3423 = vmul.f32 %v3415, 0.25
        %v3424 = vsel %vm1729, %v3420, -inf
        %3425 = vmax.xlane.f32.xlu0 %v3424
        %v3426 = vpop.xlane.xlu0 %3425
        %v3427 = vsel %vm1729, %v3421, -inf
        %3428 = vmax.xlane.f32.xlu0 %v3427
        %v3429 = vpop.xlane.xlu0 %3428
        %v3430 = vsel %vm1729, %v3422, -inf
        %3431 = vmax.xlane.f32.xlu0 %v3430
        %v3432 = vpop.xlane.xlu0 %3431
        %v3433 = vsel %vm1729, %v3423, -inf
        %3434 = vmax.xlane.f32.xlu0 %v3433
        %v3435 = vpop.xlane.xlu0 %3434
        %v3436 = vsub.f32 %v3420, %v3426
        %v3437 = vsub.f32 %v3421, %v3429
        %v3438 = vsub.f32 %v3422, %v3432
        %v3439 = vsub.f32 %v3423, %v3435
        %v3440 = vmul.f32 %v3436, 1.442695
        %v3441 = vpow.pop %v3440
        %v3442 = vmul.f32 %v3437, 1.442695
        %v3443 = vpow.pop %v3442
        %v3444 = vmul.f32 %v3438, 1.442695
        %v3445 = vpow.pop %v3444
        %v3446 = vmul.f32 %v3439, 1.442695
        %v3447 = vpow.pop %v3446
        %v3448 = vsel %vm1729, %v3441, 0.0
        %3449 = vadd.xlane.f32.xlu0 %v3448
        %v3450 = vpop.xlane.xlu0 %3449
        %v3451 = vsel %vm1729, %v3443, 0.0
        %3452 = vadd.xlane.f32.xlu0 %v3451
        %v3453 = vpop.xlane.xlu0 %3452
        %v3454 = vsel %vm1729, %v3445, 0.0
        %3455 = vadd.xlane.f32.xlu0 %v3454
        %v3456 = vpop.xlane.xlu0 %3455
        %v3457 = vsel %vm1729, %v3447, 0.0
        %3458 = vadd.xlane.f32.xlu0 %v3457
        %v3459 = vpop.xlane.xlu0 %3458
        %v3460 = vrcp.pop %v3450
        %v3461 = vmul.f32 %v3441, %v3460
        %v3462 = vrcp.pop %v3453
        %v3463 = vmul.f32 %v3443, %v3462
        %v3464 = vrcp.pop %v3456
        %v3465 = vmul.f32 %v3445, %v3464
        %v3466 = vrcp.pop %v3459
        %v3467 = vmul.f32 %v3447, %v3466
        %v3468 = vpack.c.bf16 %v3461, %v3461
        %v3469 = vpack.c.bf16 %v3463, %v3463
        %v3470 = vpack.c.bf16 %v3465, %v3465
        %v3471 = vpack.c.bf16 %v3467, %v3467
        %v3473 = vsel %vm1729, %v3468, 0
        %v3476 = vsel %vm1781, %v3232, 0
        %3478 = vmatprep.subr.bf16.mxu0 0
        %3479 = vmatpush1.bf16.msra.mxu0 %v3476
        %3480 = vmatprep.subr.bf16.mxu0 0
        %3481 = vmatpush1.bf16.msra.mxu0 0
        %3482 = vmatprep.subr.bf16.mxu0 0
        %3483 = vmatpush1.bf16.msra.mxu0 0
        %3484 = vmatprep.subr.bf16.mxu0 0
        %3485 = vmatpush1.bf16.msra.mxu0 0
        %3486 = vmatprep.subr.bf16.mxu0 0
        %3487 = vmatpush1.bf16.msra.mxu0 0
        %3488 = vmatprep.subr.bf16.mxu0 0
        %3489 = vmatpush1.bf16.msra.mxu0 0
        %3490 = vmatprep.subr.bf16.mxu0 0
        %3491 = vmatpush1.bf16.msra.mxu0 0
        %3492 = vmatprep.subr.bf16.mxu0 0
        %3493 = vmatpush1.bf16.msra.mxu0 0
        %3494 = vmatprep.subr.bf16.mxu0 0
        %3495 = vmatpush1.bf16.msra.mxu0 0
        %3496 = vmatprep.subr.bf16.mxu0 0
        %3497 = vmatpush1.bf16.msra.mxu0 0
        %3498 = vmatprep.subr.bf16.mxu0 0
        %3499 = vmatpush1.bf16.msra.mxu0 0
        %3500 = vmatprep.subr.bf16.mxu0 0
        %3501 = vmatpush1.bf16.msra.mxu0 0
        %3502 = vmatprep.subr.bf16.mxu0 0
        %3503 = vmatpush1.bf16.msra.mxu0 0
        %3504 = vmatprep.subr.bf16.mxu0 0
        %3505 = vmatpush1.bf16.msra.mxu0 0
        %3506 = vmatprep.subr.bf16.mxu0 0
        %3507 = vmatpush1.bf16.msra.mxu0 0
        %3508 = vmatprep.subr.bf16.mxu0 0
        %3509 = vmatpush1.bf16.msra.mxu0 0
        %3510 = vmatprep.mubr.bf16.mxu0 0
        %3511 = vmatmul.mubr.bf16.gmra.mrb[0].mxu0 %v3473
        %v3512 = vpop.f32.mrb[0].mxu0
        %v3513 = vadd.f32 0.0, %v3512
        %v3514 = vpop.f32.mrb[0].mxu0
        %v3515 = vpop.f32.mrb[0].mxu0
        %v3516 = vpop.f32.mrb[0].mxu0
        %3517 = vdwg.mxu0
        %v3519 = vsel %vm1729, %v3469, 0
        %v3522 = vsel %vm1781, %v3233, 0
        %3524 = vmatprep.subr.bf16.mxu0 0
        %3525 = vmatpush1.bf16.msra.mxu0 %v3522
        %3526 = vmatprep.subr.bf16.mxu0 0
        %3527 = vmatpush1.bf16.msra.mxu0 0
        %3528 = vmatprep.subr.bf16.mxu0 0
        %3529 = vmatpush1.bf16.msra.mxu0 0
        %3530 = vmatprep.subr.bf16.mxu0 0
        %3531 = vmatpush1.bf16.msra.mxu0 0
        %3532 = vmatprep.subr.bf16.mxu0 0
        %3533 = vmatpush1.bf16.msra.mxu0 0
        %3534 = vmatprep.subr.bf16.mxu0 0
        %3535 = vmatpush1.bf16.msra.mxu0 0
        %3536 = vmatprep.subr.bf16.mxu0 0
        %3537 = vmatpush1.bf16.msra.mxu0 0
        %3538 = vmatprep.subr.bf16.mxu0 0
        %3539 = vmatpush1.bf16.msra.mxu0 0
        %3540 = vmatprep.subr.bf16.mxu0 0
        %3541 = vmatpush1.bf16.msra.mxu0 0
        %3542 = vmatprep.subr.bf16.mxu0 0
        %3543 = vmatpush1.bf16.msra.mxu0 0
        %3544 = vmatprep.subr.bf16.mxu0 0
        %3545 = vmatpush1.bf16.msra.mxu0 0
        %3546 = vmatprep.subr.bf16.mxu0 0
        %3547 = vmatpush1.bf16.msra.mxu0 0
        %3548 = vmatprep.subr.bf16.mxu0 0
        %3549 = vmatpush1.bf16.msra.mxu0 0
        %3550 = vmatprep.subr.bf16.mxu0 0
        %3551 = vmatpush1.bf16.msra.mxu0 0
        %3552 = vmatprep.subr.bf16.mxu0 0
        %3553 = vmatpush1.bf16.msra.mxu0 0
        %3554 = vmatprep.subr.bf16.mxu0 0
        %3555 = vmatpush1.bf16.msra.mxu0 0
        %3556 = vmatprep.mubr.bf16.mxu0 0
        %3557 = vmatmul.mubr.bf16.gmra.mrb[0].mxu0 %v3519
        %v3558 = vpop.f32.mrb[0].mxu0
        %v3559 = vadd.f32 0.0, %v3558
        %v3560 = vpop.f32.mrb[0].mxu0
        %v3561 = vpop.f32.mrb[0].mxu0
        %v3562 = vpop.f32.mrb[0].mxu0
        %3563 = vdwg.mxu0
        %v3565 = vsel %vm1729, %v3470, 0
        %v3568 = vsel %vm1781, %v3234, 0
        %3570 = vmatprep.subr.bf16.mxu0 0
        %3571 = vmatpush1.bf16.msra.mxu0 %v3568
        %3572 = vmatprep.subr.bf16.mxu0 0
        %3573 = vmatpush1.bf16.msra.mxu0 0
        %3574 = vmatprep.subr.bf16.mxu0 0
        %3575 = vmatpush1.bf16.msra.mxu0 0
        %3576 = vmatprep.subr.bf16.mxu0 0
        %3577 = vmatpush1.bf16.msra.mxu0 0
        %3578 = vmatprep.subr.bf16.mxu0 0
        %3579 = vmatpush1.bf16.msra.mxu0 0
        %3580 = vmatprep.subr.bf16.mxu0 0
        %3581 = vmatpush1.bf16.msra.mxu0 0
        %3582 = vmatprep.subr.bf16.mxu0 0
        %3583 = vmatpush1.bf16.msra.mxu0 0
        %3584 = vmatprep.subr.bf16.mxu0 0
        %3585 = vmatpush1.bf16.msra.mxu0 0
        %3586 = vmatprep.subr.bf16.mxu0 0
        %3587 = vmatpush1.bf16.msra.mxu0 0
        %3588 = vmatprep.subr.bf16.mxu0 0
        %3589 = vmatpush1.bf16.msra.mxu0 0
        %3590 = vmatprep.subr.bf16.mxu0 0
        %3591 = vmatpush1.bf16.msra.mxu0 0
        %3592 = vmatprep.subr.bf16.mxu0 0
        %3593 = vmatpush1.bf16.msra.mxu0 0
        %3594 = vmatprep.subr.bf16.mxu0 0
        %3595 = vmatpush1.bf16.msra.mxu0 0
        %3596 = vmatprep.subr.bf16.mxu0 0
        %3597 = vmatpush1.bf16.msra.mxu0 0
        %3598 = vmatprep.subr.bf16.mxu0 0
        %3599 = vmatpush1.bf16.msra.mxu0 0
        %3600 = vmatprep.subr.bf16.mxu0 0
        %3601 = vmatpush1.bf16.msra.mxu0 0
        %3602 = vmatprep.mubr.bf16.mxu0 0
        %3603 = vmatmul.mubr.bf16.gmra.mrb[0].mxu0 %v3565
        %v3604 = vpop.f32.mrb[0].mxu0
        %v3605 = vadd.f32 0.0, %v3604
        %v3606 = vpop.f32.mrb[0].mxu0
        %v3607 = vpop.f32.mrb[0].mxu0
        %v3608 = vpop.f32.mrb[0].mxu0
        %3609 = vdwg.mxu0
        %v3611 = vsel %vm1729, %v3471, 0
        %v3614 = vsel %vm1781, %v3235, 0
        %3616 = vmatprep.subr.bf16.mxu0 0
        %3617 = vmatpush1.bf16.msra.mxu0 %v3614
        %3618 = vmatprep.subr.bf16.mxu0 0
        %3619 = vmatpush1.bf16.msra.mxu0 0
        %3620 = vmatprep.subr.bf16.mxu0 0
        %3621 = vmatpush1.bf16.msra.mxu0 0
        %3622 = vmatprep.subr.bf16.mxu0 0
        %3623 = vmatpush1.bf16.msra.mxu0 0
        %3624 = vmatprep.subr.bf16.mxu0 0
        %3625 = vmatpush1.bf16.msra.mxu0 0
        %3626 = vmatprep.subr.bf16.mxu0 0
        %3627 = vmatpush1.bf16.msra.mxu0 0
        %3628 = vmatprep.subr.bf16.mxu0 0
        %3629 = vmatpush1.bf16.msra.mxu0 0
        %3630 = vmatprep.subr.bf16.mxu0 0
        %3631 = vmatpush1.bf16.msra.mxu0 0
        %3632 = vmatprep.subr.bf16.mxu0 0
        %3633 = vmatpush1.bf16.msra.mxu0 0
        %3634 = vmatprep.subr.bf16.mxu0 0
        %3635 = vmatpush1.bf16.msra.mxu0 0
        %3636 = vmatprep.subr.bf16.mxu0 0
        %3637 = vmatpush1.bf16.msra.mxu0 0
        %3638 = vmatprep.subr.bf16.mxu0 0
        %3639 = vmatpush1.bf16.msra.mxu0 0
        %3640 = vmatprep.subr.bf16.mxu0 0
        %3641 = vmatpush1.bf16.msra.mxu0 0
        %3642 = vmatprep.subr.bf16.mxu0 0
        %3643 = vmatpush1.bf16.msra.mxu0 0
        %3644 = vmatprep.subr.bf16.mxu0 0
        %3645 = vmatpush1.bf16.msra.mxu0 0
        %3646 = vmatprep.subr.bf16.mxu0 0
        %3647 = vmatpush1.bf16.msra.mxu0 0
        %3648 = vmatprep.mubr.bf16.mxu0 0
        %3649 = vmatmul.mubr.bf16.gmra.mrb[0].mxu0 %v3611
        %v3650 = vpop.f32.mrb[0].mxu0
        %v3651 = vadd.f32 0.0, %v3650
        %v3652 = vpop.f32.mrb[0].mxu0
        %v3653 = vpop.f32.mrb[0].mxu0
        %v3654 = vpop.f32.mrb[0].mxu0
        %3655 = vdwg.mxu0
        %v3656 = vpack.c.bf16 %v3513, %v3513
        %v3657 = vpack.c.bf16 %v3559, %v3559
        %v3658 = vpack.c.bf16 %v3605, %v3605
        %v3659 = vpack.c.bf16 %v3651, %v3651
        %s3660 = scalar_lea.vmem %s7, 32
        %v3661 = vld [vmem:[%s3660] sm:$0xf]
        %v3662 = vld [vmem:[%s3660 + $0x4] sm:$0xf]
        %v3663 = vld [vmem:[%s3660 + $0x8] sm:$0xf]
        %v3664 = vld [vmem:[%s3660 + $0xc] sm:$0xf]
        %v3665 = vld [vmem:[%s3660 + $0x10] sm:$0xf]
        %v3666 = vld [vmem:[%s3660 + $0x14] sm:$0xf]
        %v3667 = vld [vmem:[%s3660 + $0x18] sm:$0xf]
        %v3668 = vld [vmem:[%s3660 + $0x1c] sm:$0xf]
        %v3671 = vunpack.c.l.b16 %v3661
        %v3672 = vunpack.c.l.b16 %v3662
        %v3673 = vpack.c.b16 %v3672, %v3671
        %v3676 = vsel %vm1540, %v3656, 0
        %3678 = vmatprep.subr.bf16.mxu0 0
        %3679 = vmatpush1.bf16.msra.mxu0 %v3673
        %3680 = vmatprep.subr.bf16.mxu0 0
        %3681 = vmatpush1.bf16.msra.mxu0 0
        %3682 = vmatprep.subr.bf16.mxu0 0
        %3683 = vmatpush1.bf16.msra.mxu0 0
        %3684 = vmatprep.subr.bf16.mxu0 0
        %3685 = vmatpush1.bf16.msra.mxu0 0
        %3686 = vmatprep.subr.bf16.mxu0 0
        %3687 = vmatpush1.bf16.msra.mxu0 0
        %3688 = vmatprep.subr.bf16.mxu0 0
        %3689 = vmatpush1.bf16.msra.mxu0 0
        %3690 = vmatprep.subr.bf16.mxu0 0
        %3691 = vmatpush1.bf16.msra.mxu0 0
        %3692 = vmatprep.subr.bf16.mxu0 0
        %3693 = vmatpush1.bf16.msra.mxu0 0
        %3694 = vmatprep.subr.bf16.mxu0 0
        %3695 = vmatpush1.bf16.msra.mxu0 0
        %3696 = vmatprep.subr.bf16.mxu0 0
        %3697 = vmatpush1.bf16.msra.mxu0 0
        %3698 = vmatprep.subr.bf16.mxu0 0
        %3699 = vmatpush1.bf16.msra.mxu0 0
        %3700 = vmatprep.subr.bf16.mxu0 0
        %3701 = vmatpush1.bf16.msra.mxu0 0
        %3702 = vmatprep.subr.bf16.mxu0 0
        %3703 = vmatpush1.bf16.msra.mxu0 0
        %3704 = vmatprep.subr.bf16.mxu0 0
        %3705 = vmatpush1.bf16.msra.mxu0 0
        %3706 = vmatprep.subr.bf16.mxu0 0
        %3707 = vmatpush1.bf16.msra.mxu0 0
        %3708 = vmatprep.subr.bf16.mxu0 0
        %3709 = vmatpush1.bf16.msra.mxu0 0
        %3710 = vmatprep.mubr.bf16.mxu0 0
        %3711 = vmatmul.mubr.bf16.gmra.mrb[0].mxu0 %v3676
        %v3712 = vpop.f32.mrb[0].mxu0
        %v3713 = vadd.f32 0.0, %v3712
        %v3714 = vpop.f32.mrb[0].mxu0
        %v3715 = vpop.f32.mrb[0].mxu0
        %v3716 = vpop.f32.mrb[0].mxu0
        %3717 = vdwg.mxu0
        %v3720 = vunpack.c.l.b16 %v3663
        %v3721 = vunpack.c.l.b16 %v3664
        %v3722 = vpack.c.b16 %v3721, %v3720
        %v3725 = vsel %vm1540, %v3657, 0
        %3727 = vmatprep.subr.bf16.mxu0 0
        %3728 = vmatpush1.bf16.msra.mxu0 %v3722
        %3729 = vmatprep.subr.bf16.mxu0 0
        %3730 = vmatpush1.bf16.msra.mxu0 0
        %3731 = vmatprep.subr.bf16.mxu0 0
        %3732 = vmatpush1.bf16.msra.mxu0 0
        %3733 = vmatprep.subr.bf16.mxu0 0
        %3734 = vmatpush1.bf16.msra.mxu0 0
        %3735 = vmatprep.subr.bf16.mxu0 0
        %3736 = vmatpush1.bf16.msra.mxu0 0
        %3737 = vmatprep.subr.bf16.mxu0 0
        %3738 = vmatpush1.bf16.msra.mxu0 0
        %3739 = vmatprep.subr.bf16.mxu0 0
        %3740 = vmatpush1.bf16.msra.mxu0 0
        %3741 = vmatprep.subr.bf16.mxu0 0
        %3742 = vmatpush1.bf16.msra.mxu0 0
        %3743 = vmatprep.subr.bf16.mxu0 0
        %3744 = vmatpush1.bf16.msra.mxu0 0
        %3745 = vmatprep.subr.bf16.mxu0 0
        %3746 = vmatpush1.bf16.msra.mxu0 0
        %3747 = vmatprep.subr.bf16.mxu0 0
        %3748 = vmatpush1.bf16.msra.mxu0 0
        %3749 = vmatprep.subr.bf16.mxu0 0
        %3750 = vmatpush1.bf16.msra.mxu0 0
        %3751 = vmatprep.subr.bf16.mxu0 0
        %3752 = vmatpush1.bf16.msra.mxu0 0
        %3753 = vmatprep.subr.bf16.mxu0 0
        %3754 = vmatpush1.bf16.msra.mxu0 0
        %3755 = vmatprep.subr.bf16.mxu0 0
        %3756 = vmatpush1.bf16.msra.mxu0 0
        %3757 = vmatprep.subr.bf16.mxu0 0
        %3758 = vmatpush1.bf16.msra.mxu0 0
        %3759 = vmatprep.mubr.bf16.mxu0 0
        %3760 = vmatmul.mubr.bf16.gmra.mrb[0].mxu0 %v3725
        %v3761 = vpop.f32.mrb[0].mxu0
        %v3762 = vadd.f32 0.0, %v3761
        %v3763 = vpop.f32.mrb[0].mxu0
        %v3764 = vpop.f32.mrb[0].mxu0
        %v3765 = vpop.f32.mrb[0].mxu0
        %3766 = vdwg.mxu0
        %v3769 = vunpack.c.l.b16 %v3665
        %v3770 = vunpack.c.l.b16 %v3666
        %v3771 = vpack.c.b16 %v3770, %v3769
        %v3774 = vsel %vm1540, %v3658, 0
        %3776 = vmatprep.subr.bf16.mxu0 0
        %3777 = vmatpush1.bf16.msra.mxu0 %v3771
        %3778 = vmatprep.subr.bf16.mxu0 0
        %3779 = vmatpush1.bf16.msra.mxu0 0
        %3780 = vmatprep.subr.bf16.mxu0 0
        %3781 = vmatpush1.bf16.msra.mxu0 0
        %3782 = vmatprep.subr.bf16.mxu0 0
        %3783 = vmatpush1.bf16.msra.mxu0 0
        %3784 = vmatprep.subr.bf16.mxu0 0
        %3785 = vmatpush1.bf16.msra.mxu0 0
        %3786 = vmatprep.subr.bf16.mxu0 0
        %3787 = vmatpush1.bf16.msra.mxu0 0
        %3788 = vmatprep.subr.bf16.mxu0 0
        %3789 = vmatpush1.bf16.msra.mxu0 0
        %3790 = vmatprep.subr.bf16.mxu0 0
        %3791 = vmatpush1.bf16.msra.mxu0 0
        %3792 = vmatprep.subr.bf16.mxu0 0
        %3793 = vmatpush1.bf16.msra.mxu0 0
        %3794 = vmatprep.subr.bf16.mxu0 0
        %3795 = vmatpush1.bf16.msra.mxu0 0
        %3796 = vmatprep.subr.bf16.mxu0 0
        %3797 = vmatpush1.bf16.msra.mxu0 0
        %3798 = vmatprep.subr.bf16.mxu0 0
        %3799 = vmatpush1.bf16.msra.mxu0 0
        %3800 = vmatprep.subr.bf16.mxu0 0
        %3801 = vmatpush1.bf16.msra.mxu0 0
        %3802 = vmatprep.subr.bf16.mxu0 0
        %3803 = vmatpush1.bf16.msra.mxu0 0
        %3804 = vmatprep.subr.bf16.mxu0 0
        %3805 = vmatpush1.bf16.msra.mxu0 0
        %3806 = vmatprep.subr.bf16.mxu0 0
        %3807 = vmatpush1.bf16.msra.mxu0 0
        %3808 = vmatprep.mubr.bf16.mxu0 0
        %3809 = vmatmul.mubr.bf16.gmra.mrb[0].mxu0 %v3774
        %v3810 = vpop.f32.mrb[0].mxu0
        %v3811 = vadd.f32 0.0, %v3810
        %v3812 = vpop.f32.mrb[0].mxu0
        %v3813 = vpop.f32.mrb[0].mxu0
        %v3814 = vpop.f32.mrb[0].mxu0
        %3815 = vdwg.mxu0
        %v3818 = vunpack.c.l.b16 %v3667
        %v3819 = vunpack.c.l.b16 %v3668
        %v3820 = vpack.c.b16 %v3819, %v3818
        %v3823 = vsel %vm1540, %v3659, 0
        %3825 = vmatprep.subr.bf16.mxu0 0
        %3826 = vmatpush1.bf16.msra.mxu0 %v3820
        %3827 = vmatprep.subr.bf16.mxu0 0
        %3828 = vmatpush1.bf16.msra.mxu0 0
        %3829 = vmatprep.subr.bf16.mxu0 0
        %3830 = vmatpush1.bf16.msra.mxu0 0
        %3831 = vmatprep.subr.bf16.mxu0 0
        %3832 = vmatpush1.bf16.msra.mxu0 0
        %3833 = vmatprep.subr.bf16.mxu0 0
        %3834 = vmatpush1.bf16.msra.mxu0 0
        %3835 = vmatprep.subr.bf16.mxu0 0
        %3836 = vmatpush1.bf16.msra.mxu0 0
        %3837 = vmatprep.subr.bf16.mxu0 0
        %3838 = vmatpush1.bf16.msra.mxu0 0
        %3839 = vmatprep.subr.bf16.mxu0 0
        %3840 = vmatpush1.bf16.msra.mxu0 0
        %3841 = vmatprep.subr.bf16.mxu0 0
        %3842 = vmatpush1.bf16.msra.mxu0 0
        %3843 = vmatprep.subr.bf16.mxu0 0
        %3844 = vmatpush1.bf16.msra.mxu0 0
        %3845 = vmatprep.subr.bf16.mxu0 0
        %3846 = vmatpush1.bf16.msra.mxu0 0
        %3847 = vmatprep.subr.bf16.mxu0 0
        %3848 = vmatpush1.bf16.msra.mxu0 0
        %3849 = vmatprep.subr.bf16.mxu0 0
        %3850 = vmatpush1.bf16.msra.mxu0 0
        %3851 = vmatprep.subr.bf16.mxu0 0
        %3852 = vmatpush1.bf16.msra.mxu0 0
        %3853 = vmatprep.subr.bf16.mxu0 0
        %3854 = vmatpush1.bf16.msra.mxu0 0
        %3855 = vmatprep.subr.bf16.mxu0 0
        %3856 = vmatpush1.bf16.msra.mxu0 0
        %3857 = vmatprep.mubr.bf16.mxu0 0
        %3858 = vmatmul.mubr.bf16.gmra.mrb[0].mxu0 %v3823
        %v3859 = vpop.f32.mrb[0].mxu0
        %v3860 = vadd.f32 0.0, %v3859
        %v3861 = vpop.f32.mrb[0].mxu0
        %v3862 = vpop.f32.mrb[0].mxu0
        %v3863 = vpop.f32.mrb[0].mxu0
        %3864 = vdwg.mxu0
        %v3865 = vsel %vm543, %v3713, 0.0
        %v3866 = vsel %vm543, %v3762, 0.0
        %v3867 = vadd.f32 %v3865, %v3866
        %v3868 = vsel %vm543, %v3811, 0.0
        %v3869 = vadd.f32 %v3867, %v3868
        %v3870 = vsel %vm543, %v3860, 0.0
        %v3871 = vadd.f32 %v3869, %v3870
        %v3872 = vadd.f32 %v2924, %v3871
        %s3873 = scalar_lea.vmem %s11, 1
        %v3874 = vld [vmem:[%s3873] sm:$0x1]
        %v3876 = vlaneseq
        %v3877 = vshrl.u32 %v3876, 7
        %v3878 = vsub.s32 0, %v3877
        %v3879 = vrot.slane %v3874, %v3878
        %v3881 = vadd.f32 %v3872, %v3879
        %v3882 = vld [vmem:[%s12] sm:$0x1]
        %v3883 = vpack.c.bf16 %v3881, %v3881
        %v3884 = vld [vmem:[#allocation2] sm:$0x1]
        %3886 = vset.pattern.permute.xlu0 0
        %3887 = vperm.xlu0 %3886, %v3884
        %v3888 = vpop.permute.xlu0 %3887
        %v3890 = vlaneseq
        %v3891 = vshrl.u32 %v3890, 7
        %v3892 = vsub.s32 0, %v3891
        %v3893 = vrot.slane %v3888, %v3892
        %v3895 = vsel %vm543, %v3882, 0
        %v3898 = vsel %vm543, %v3883, 0
        %3900 = vmatprep.subr.bf16.mxu0 0
        %3901 = vmatpush1.bf16.xpose.msra.mxu0 %v3898
        %3902 = vmatprep.subr.bf16.mxu0 0
        %3903 = vmatpush1.bf16.xpose.msra.mxu0 0
        %3904 = vmatprep.subr.bf16.mxu0 0
        %3905 = vmatpush1.bf16.xpose.msra.mxu0 0
        %3906 = vmatprep.subr.bf16.mxu0 0
        %3907 = vmatpush1.bf16.xpose.msra.mxu0 0
        %3908 = vmatprep.subr.bf16.mxu0 0
        %3909 = vmatpush1.bf16.xpose.msra.mxu0 0
        %3910 = vmatprep.subr.bf16.mxu0 0
        %3911 = vmatpush1.bf16.xpose.msra.mxu0 0
        %3912 = vmatprep.subr.bf16.mxu0 0
        %3913 = vmatpush1.bf16.xpose.msra.mxu0 0
        %3914 = vmatprep.subr.bf16.mxu0 0
        %3915 = vmatpush1.bf16.xpose.msra.mxu0 0
        %3916 = vmatprep.subr.bf16.mxu0 0
        %3917 = vmatpush1.bf16.xpose.msra.mxu0 0
        %3918 = vmatprep.subr.bf16.mxu0 0
        %3919 = vmatpush1.bf16.xpose.msra.mxu0 0
        %3920 = vmatprep.subr.bf16.mxu0 0
        %3921 = vmatpush1.bf16.xpose.msra.mxu0 0
        %3922 = vmatprep.subr.bf16.mxu0 0
        %3923 = vmatpush1.bf16.xpose.msra.mxu0 0
        %3924 = vmatprep.subr.bf16.mxu0 0
        %3925 = vmatpush1.bf16.xpose.msra.mxu0 0
        %3926 = vmatprep.subr.bf16.mxu0 0
        %3927 = vmatpush1.bf16.xpose.msra.mxu0 0
        %3928 = vmatprep.subr.bf16.mxu0 0
        %3929 = vmatpush1.bf16.xpose.msra.mxu0 0
        %3930 = vmatprep.subr.bf16.mxu0 0
        %3931 = vmatpush1.bf16.xpose.msra.mxu0 0
        %3932 = vmatprep.mubr.bf16.mxu0 0
        %3933 = vmatmul.mubr.bf16.gmra.mrb[0].mxu0 %v3895
        %v3934 = vpop.f32.mrb[0].mxu0
        %v3935 = vadd.f32 %v3893, %v3934
        %v3936 = vpop.f32.mrb[0].mxu0
        %v3937 = vpop.f32.mrb[0].mxu0
        %v3938 = vpop.f32.mrb[0].mxu0
        %3939 = vdwg.mxu0
        %v3940 = vmax.f32 %v3935, 0.0
        %vm3941 = vcmask 57344
        %3942 = vst.msk [vmem:[%s474] sm:$0x1] %vm3941, %v3940
        %s3943 = sand.u32 %s342, 1
        %s3944 = scalar_lea.sflag [#allocation4], %s3943
        %s3945 = sand.u32 %s342, 1
        %s3946 = scalar_lea.vmem [#allocation3], %s3945
        // Predicated region
        $region77: #{duration_predictor_forward.1} parent=75 // pred_check
          %p3947 = pneg %p352
        $region78: #{duration_predictor_forward.1} parent=75 // pred_check_branch
          %3949 = sbr.rel (%p3947) target = $region80
        $region79: #{duration_predictor_forward.1} parent=75 // pred_region
          %s3951 = ssub.s32 16, 16
          %3952 = vsyncadd %s3944, %s3951
          %s3953 = smul.addr %s30, 16
          %s3954 = scalar_lea.hbm %s14, %s3953
          %s3956 = sshll.u32 %s3946, 4
          %s3957 = int_to_ptr.vmem [resolvable:$true] %s3956
          %3959 = dma.vmem_to_hbm [thread:$0]  %s3957, 16, %s3954, %s3944
        $region80: #{duration_predictor_forward.1} parent=75 // pred_fallthru
          _
      $region76: #{duration_predictor_forward.1} parent=5 // pred_fallthru
        _
      %p3960 = scmp.le.s32.totalorder 2, %s25
      // Predicated region
      $region81: #{duration_predictor_forward.1} parent=5 // pred_check
        %p3961 = pneg %p3960
      $region82: #{duration_predictor_forward.1} parent=5 // pred_check_branch
        %3963 = sbr.rel (%p3961) target = $region84
      $region83: #{duration_predictor_forward.1} parent=5 // pred_region
        %s3964 = ssub.s32 %s25, 2
        // Predicated region
        $region85: #{duration_predictor_forward.1} parent=83 // pred_check
          %p3965 = pneg %p358
        $region86: #{duration_predictor_forward.1} parent=83 // pred_check_branch
          %3967 = sbr.rel (%p3965) target = $region88
        $region87: #{duration_predictor_forward.1} parent=83 // pred_region
          %s3968 = sand.u32 %s343, 1
          %s3969 = scalar_lea.sflag [#allocation4], %s3968
          %s3970 = sand.u32 %s343, 1
          %s3971 = scalar_lea.vmem [#allocation3], %s3970
          %3972 = dma.done %s3969, 16
        $region88: #{duration_predictor_forward.1} parent=83 // pred_fallthru
          _
      $region84: #{duration_predictor_forward.1} parent=5 // pred_fallthru
        _
    $region6: #{duration_predictor_forward.1} parent=1 // loop_footer
      %s29 = sadd.s32 1, %s25
    $region7: #{duration_predictor_forward.1} parent=1 // loop_footer_branch
      %24 = sbr.rel target = $region3
    $region8: #{duration_predictor_forward.1} parent=1 // loop_exit
      _
    %3973 = vsyncpa [#allocation4], 1
    %s3974 = scalar_lea.sflag [#allocation4], 1
    %3975 = vsyncpa %s3974, 1

</llo_original>
